<compile_context>
chip_gen: v6e
topology: v6e:2x2x1
jax: 0.10.0
libtpu: 0.0.40
codegen_flags: <defaults>
</compile_context>

<pallas_src>
import functools

import jax
import jax.numpy as jnp
from jax.experimental import pallas as pl
from jax.experimental.pallas import tpu as pltpu

EPS = 1e-5     # PyTorch BatchNorm2d default eps
LANE = 128     # channel dims padded to a multiple of the TPU lane width

_PARALLEL = pltpu.CompilerParams(dimension_semantics=("parallel",))


def _round_up(x, m):
    return (x + m - 1) // m * m


# ------------------------------ Pallas kernels ------------------------------

def _conv3x3_s1_kernel(x_ref, w_ref, sc_ref, sh_ref, y_ref, st_ref, h_ref,
                       *, H, W, padr, out_off, prologue):
    """Stride-1 3x3 conv over one image held as a flat (pixels, Cin) slab.

    x_ref : (padr + H*W + padr, Cin) bf16, image rows at [padr, padr + H*W)
    w_ref : (9*Cin, P)               bf16, taps stacked (dy, dx)-major
    sc/sh : (1, Cin)                 f32, bn+relu prologue (used iff prologue)
    y_ref : (out_off + H*W + out_off, P) bf16
    st_ref: (2, P) f32, per-image [sum, centered sum of squares]
    h_ref : (padr + H*W + padr, Cin) bf16 VMEM scratch (prologue result)
    """
    npix = H * W
    cin = w_ref.shape[0] // 9
    pp = w_ref.shape[1]

    if prologue:
        # bn1 + ReLU fused as a prologue; pad rows may hold garbage but every
        # tap element that reads them is masked (jnp.where) below.
        h_ref[...] = jnp.maximum(
            x_ref[...].astype(jnp.float32) * sc_ref[...] + sh_ref[...],
            0.0).astype(jnp.bfloat16)
        src = h_ref
    else:
        src = x_ref

    # Row-index masks realize the conv's zero padding (and keep pad-row
    # garbage out of the accumulation).
    q = jax.lax.broadcasted_iota(jnp.int32, (npix, 1), 0)
    col = q % W
    not_top = q >= W
    not_bot = q < (H - 1) * W
    not_left = col != 0
    not_right = col != (W - 1)

    acc = jnp.zeros((npix, pp), jnp.float32)
    for dy in range(3):
        for dx in range(3):
            start = padr + (dy - 1) * W + (dx - 1)
            tap = src[start:start + npix, :]
            conds = []
            if dy == 0:
                conds.append(not_top)
            elif dy == 2:
                conds.append(not_bot)
            if dx == 0:
                conds.append(not_left)
            elif dx == 2:
                conds.append(not_right)
            if conds:
                m = conds[0]
                for c in conds[1:]:
                    m = jnp.logical_and(m, c)
                tap = jnp.where(m, tap, jnp.zeros((), tap.dtype))
            k0 = (dy * 3 + dx) * cin
            acc = acc + jnp.dot(tap, w_ref[k0:k0 + cin, :],
                                preferred_element_type=jnp.float32)

    y_ref[out_off:out_off + npix, :] = acc.astype(y_ref.dtype)

    s = jnp.sum(acc, axis=0, keepdims=True)        # (1, P)
    mean = s * (1.0 / npix)
    d = acc - mean
    st_ref[0:1, :] = s
    st_ref[1:2, :] = jnp.sum(d * d, axis=0, keepdims=True)


def _matmul_stats_kernel(t_ref, w_ref, y_ref, st_ref, *, out_off):
    """Per-image (pixels, K) @ (K, P) conv-as-matmul + centered BN partials."""
    npix = t_ref.shape[0]
    acc = jnp.dot(t_ref[...], w_ref[...], preferred_element_type=jnp.float32)
    y_ref[out_off:out_off + npix, :] = acc.astype(y_ref.dtype)
    s = jnp.sum(acc, axis=0, keepdims=True)
    mean = s * (1.0 / npix)
    d = acc - mean
    st_ref[0:1, :] = s
    st_ref[1:2, :] = jnp.sum(d * d, axis=0, keepdims=True)


def _bn_add_relu_kernel(y_ref, r_ref, sc_ref, sh_ref, o_ref):
    """Identity shortcut epilogue: out = relu(bn2(conv2) + x)."""
    o_ref[...] = jnp.maximum(
        y_ref[...].astype(jnp.float32) * sc_ref[...] + sh_ref[...]
        + r_ref[...].astype(jnp.float32), 0.0).astype(o_ref.dtype)


def _bn_bn_add_relu_kernel(y_ref, ysc_ref, s2_ref, b2_ref, ssc_ref, bsc_ref,
                           o_ref):
    """Projection shortcut epilogue: out = relu(bn2(conv2) + bn_sc(conv1x1))."""
    main = y_ref[...].astype(jnp.float32) * s2_ref[...] + b2_ref[...]
    sc = ysc_ref[...].astype(jnp.float32) * ssc_ref[...] + bsc_ref[...]
    o_ref[...] = jnp.maximum(main + sc, 0.0).astype(o_ref.dtype)


# --------------------------- gridded call helpers ---------------------------

def _img_spec(rows, cols):
    # per-image block; batch dim squeezed out of the kernel ref
    return pl.BlockSpec((None, rows, cols), lambda n: (n, 0, 0))


def _const_spec(rows, cols):
    # resident across the grid (weights / per-channel affine params)
    return pl.BlockSpec((rows, cols), lambda n: (0, 0))


def _conv3x3_s1(x_flat, w9, scale, shift, *, H, W, padr, out_pad, prologue):
    N, limg, cin_p = x_flat.shape
    k, pp = w9.shape
    npix = H * W
    lout = npix + 2 * out_pad
    kern = functools.partial(_conv3x3_s1_kernel, H=H, W=W, padr=padr,
                             out_off=out_pad, prologue=prologue)
    return pl.pallas_call(
        kern,
        out_shape=(jax.ShapeDtypeStruct((N, lout, pp), jnp.bfloat16),
                   jax.ShapeDtypeStruct((N, 2, pp), jnp.float32)),
        grid=(N,),
        in_specs=[_img_spec(limg, cin_p), _const_spec(k, pp),
                  _const_spec(1, cin_p), _const_spec(1, cin_p)],
        out_specs=(_img_spec(lout, pp), _img_spec(2, pp)),
        scratch_shapes=[pltpu.VMEM((limg, cin_p), jnp.bfloat16)],
        compiler_params=_PARALLEL,
    )(x_flat, w9, scale, shift)


def _matmul_stats(t, w, *, out_pad):
    N, npix, k = t.shape
    pp = w.shape[1]
    lout = npix + 2 * out_pad
    kern = functools.partial(_matmul_stats_kernel, out_off=out_pad)
    return pl.pallas_call(
        kern,
        out_shape=(jax.ShapeDtypeStruct((N, lout, pp), jnp.bfloat16),
                   jax.ShapeDtypeStruct((N, 2, pp), jnp.float32)),
        grid=(N,),
        in_specs=[_img_spec(npix, k), _const_spec(k, pp)],
        out_specs=(_img_spec(lout, pp), _img_spec(2, pp)),
        compiler_params=_PARALLEL,
    )(t, w)


def _id_epilogue(y2, res, s2, sh2):
    N, npix, pp = y2.shape
    return pl.pallas_call(
        _bn_add_relu_kernel,
        out_shape=jax.ShapeDtypeStruct((N, npix, pp), jnp.float32),
        grid=(N,),
        in_specs=[_img_spec(npix, pp), _img_spec(npix, res.shape[2]),
                  _const_spec(1, pp), _const_spec(1, pp)],
        out_specs=_img_spec(npix, pp),
        compiler_params=_PARALLEL,
    )(y2, res, s2, sh2)


def _proj_epilogue(y2, ysc, s2, sh2, ssc, shsc):
    N, npix, pp = y2.shape
    return pl.pallas_call(
        _bn_bn_add_relu_kernel,
        out_shape=jax.ShapeDtypeStruct((N, npix, pp), jnp.float32),
        grid=(N,),
        in_specs=[_img_spec(npix, pp), _img_spec(npix, pp),
                  _const_spec(1, pp), _const_spec(1, pp),
                  _const_spec(1, pp), _const_spec(1, pp)],
        out_specs=_img_spec(npix, pp),
        compiler_params=_PARALLEL,
    )(y2, ysc, s2, sh2, ssc, shsc)


# ------------------------------ JAX glue ------------------------------------

def _im2col_3x3_batched(x, stride):
    """x: (N, H, W, C) -> (N, Ho*Wo, 9*C), taps (dy, dx)-major, channels innermost."""
    N, H, W, C = x.shape
    xp = jnp.pad(x, ((0, 0), (1, 1), (1, 1), (0, 0)))
    Ho = (H - 1) // stride + 1
    Wo = (W - 1) // stride + 1
    cols = []
    for dy in range(3):
        for dx in range(3):
            t = xp[:, dy:dy + (Ho - 1) * stride + 1:stride,
                      dx:dx + (Wo - 1) * stride + 1:stride, :]
            cols.append(t.reshape(N, Ho * Wo, C))
    return jnp.concatenate(cols, axis=2)


def _pad_vec(v, n, fill):
    v = v.reshape(-1)
    return jnp.pad(v, (0, n - v.shape[0]), constant_values=fill).astype(jnp.float32)


def _bn_affine(stats, gamma_p, beta_p, pix_per_img):
    """Combine per-image centered partials (Chan) into BN scale/shift."""
    s = stats[:, 0, :]                       # (N, P) per-image sums
    ssd = stats[:, 1, :]                     # (N, P) per-image centered SS
    n_img = stats.shape[0]
    total = n_img * pix_per_img
    mean = jnp.sum(s, axis=0) / total
    m_i = s / pix_per_img
    ss = jnp.sum(ssd, axis=0) + pix_per_img * jnp.sum((m_i - mean) ** 2, axis=0)
    var = jnp.maximum(ss / total, 0.0)       # biased variance (BN training norm)
    inv = jax.lax.rsqrt(var + EPS)
    scale = gamma_p * inv
    shift = beta_p - mean * scale
    return scale[None, :], shift[None, :]


def init_basic_block_params(key, in_planes, planes):
    ks = jax.random.split(key, 9)
    return {
        "w1": jax.random.normal(ks[0], (3, 3, in_planes, planes), jnp.float32) * 0.1,
        "g1": 1.0 + 0.05 * jax.random.normal(ks[1], (1, planes), jnp.float32),
        "b1": 0.05 * jax.random.normal(ks[2], (1, planes), jnp.float32),
        "w2": jax.random.normal(ks[3], (3, 3, planes, planes), jnp.float32) * 0.1,
        "g2": 1.0 + 0.05 * jax.random.normal(ks[4], (1, planes), jnp.float32),
        "b2": 0.05 * jax.random.normal(ks[5], (1, planes), jnp.float32),
        "w_sc": jax.random.normal(ks[6], (in_planes, planes), jnp.float32) * 0.1,
        "g_sc": 1.0 + 0.05 * jax.random.normal(ks[7], (1, planes), jnp.float32),
        "b_sc": 0.05 * jax.random.normal(ks[8], (1, planes), jnp.float32),
    }


def basic_block_forward(x_nchw, params, stride):
    """Pallas implementation of BasicBlock.forward (training-mode BN)."""
    x = jnp.transpose(x_nchw, (0, 2, 3, 1)).astype(jnp.float32)     # NCHW -> NHWC
    N, H, W, Cin = x.shape
    planes = params["w1"].shape[-1]
    has_proj = (stride != 1) or (Cin != planes)

    Cp = _round_up(Cin, LANE)
    Pp = _round_up(planes, LANE)
    Ho = (H - 1) // stride + 1
    Wo = (W - 1) // stride + 1
    npix_out = Ho * Wo
    padr_in = _round_up(W + 1, 8)       # halo pad rows for the conv1 input layout
    padr_h = _round_up(Wo + 1, 8)       # halo pad rows for the conv2 input layout

    # channel-pad and cast activations once (bf16 for the MXU and HBM traffic)
    xc = jnp.pad(x, ((0, 0), (0, 0), (0, 0), (0, Cp - Cin))).astype(jnp.bfloat16)

    # weights / BN params, channel-padded
    w1 = jnp.pad(params["w1"], ((0, 0), (0, 0), (0, Cp - Cin), (0, Pp - planes)))
    w1 = w1.reshape(9 * Cp, Pp).astype(jnp.bfloat16)
    w2 = jnp.pad(params["w2"], ((0, 0), (0, 0), (0, Pp - planes), (0, Pp - planes)))
    w2 = w2.reshape(9 * Pp, Pp).astype(jnp.bfloat16)
    g1 = _pad_vec(params["g1"], Pp, 1.0)
    b1 = _pad_vec(params["b1"], Pp, 0.0)
    g2 = _pad_vec(params["g2"], Pp, 1.0)
    b2 = _pad_vec(params["b2"], Pp, 0.0)

    x_padflat = None
    if stride == 1:
        # ---- conv1: in-kernel taps from the flat, halo-padded image ----
        x_padflat = jnp.pad(xc.reshape(N, H * W, Cp),
                            ((0, 0), (padr_in, padr_in), (0, 0)))
        zeros_c = jnp.zeros((1, Cp), jnp.float32)
        y1, st1 = _conv3x3_s1(x_padflat, w1, zeros_c, zeros_c,
                              H=H, W=W, padr=padr_in, out_pad=padr_h,
                              prologue=False)
    else:
        # TODO(synk): stride-2 taps still come from a wrapper im2col slab
        # (2.25x the input vs 9x before); in-kernel formation needs strided
        # sublane slices or a phase decomposition.
        taps1 = _im2col_3x3_batched(xc, stride)            # (N, npix_out, 9*Cp)
        y1, st1 = _matmul_stats(taps1, w1, out_pad=padr_h)

    s1, sh1 = _bn_affine(st1, g1, b1, npix_out)

    # ---- conv2 with bn1 + ReLU fused as an in-kernel prologue on y1 ----
    y2, st2 = _conv3x3_s1(y1, w2, s1, sh1, H=Ho, W=Wo, padr=padr_h, out_pad=0,
                          prologue=True)
    s2, sh2 = _bn_affine(st2, g2, b2, npix_out)

    if has_proj:
        # 1x1 stride-s projection shortcut + its BN
        x_sub = xc[:, ::stride, ::stride, :].reshape(N, npix_out, Cp)
        wsc = jnp.pad(params["w_sc"],
                      ((0, Cp - Cin), (0, Pp - planes))).astype(jnp.bfloat16)
        ysc, stsc = _matmul_stats(x_sub, wsc, out_pad=0)
        gsc = _pad_vec(params["g_sc"], Pp, 1.0)
        bsc = _pad_vec(params["b_sc"], Pp, 0.0)
        ssc, shsc = _bn_affine(stsc, gsc, bsc, npix_out)
        out = _proj_epilogue(y2, ysc, s2, sh2, ssc, shsc)
    else:
        res = xc.reshape(N, npix_out, Cp)                  # bf16 identity residual
        out = _id_epilogue(y2, res, s2, sh2)

    out = out[:, :, :planes].reshape(N, Ho, Wo, planes)
    return jnp.transpose(out, (0, 3, 1, 2))                # NHWC -> NCHW


# --------------------------- pure-JAX reference -----------------------------

def _reference_forward(x_nchw, params, stride):
    x = jnp.transpose(x_nchw, (0, 2, 3, 1)).astype(jnp.float32)

    def conv(v, w, s, pad):
        return jax.lax.conv_general_dilated(
            v.astype(jnp.bfloat16), w.astype(jnp.bfloat16), (s, s), pad,
            dimension_numbers=("NHWC", "HWIO", "NHWC"),
            preferred_element_type=jnp.float32)

    def bn(v, g, b):
        mean = jnp.mean(v, axis=(0, 1, 2), keepdims=True)
        var = jnp.mean((v - mean) ** 2, axis=(0, 1, 2), keepdims=True)
        return (v - mean) * jax.lax.rsqrt(var + EPS) * g.reshape(1, 1, 1, -1) \
               + b.reshape(1, 1, 1, -1)

    Cin = x.shape[-1]
    planes = params["w1"].shape[-1]
    h = jax.nn.relu(bn(conv(x, params["w1"], stride, ((1, 1), (1, 1))),
                       params["g1"], params["b1"]))
    out = bn(conv(h, params["w2"], 1, ((1, 1), (1, 1))), params["g2"], params["b2"])
    if stride != 1 or Cin != planes:
        wsc = params["w_sc"].reshape(1, 1, Cin, planes)
        sc = bn(conv(x, wsc, stride, ((0, 0), (0, 0))), params["g_sc"], params["b_sc"])
    else:
        sc = x
    out = jax.nn.relu(out + sc)
    return jnp.transpose(out, (0, 3, 1, 2))


# --------------------------------- main -------------------------------------

if __name__ == "__main__":
    key = jax.random.PRNGKey(0)
    kx1, kx2, kp1, kp2 = jax.random.split(key, 4)

    fwd = jax.jit(basic_block_forward, static_argnames=("stride",))

    # Tolerances reflect bf16 storage of conv outputs / residual (per review).
    RTOL, ATOL = 2e-2, 2e-2

    # Case 1: downsampling block (stride=2, in_planes != planes) -> projection
    x1 = jax.random.normal(kx1, (2, 4, 16, 16), jnp.float32)        # NCHW
    p1 = init_basic_block_params(kp1, in_planes=4, planes=8)
    y1 = jax.block_until_ready(fwd(x1, p1, stride=2))
    r1 = jax.block_until_ready(_reference_forward(x1, p1, stride=2))
    assert y1.shape == (2, 8, 8, 8), y1.shape
    assert jnp.allclose(y1, r1, rtol=RTOL, atol=ATOL), float(jnp.max(jnp.abs(y1 - r1)))

    # Case 2: identity block (stride=1, in_planes == planes) -> identity shortcut
    x2 = jax.random.normal(kx2, (2, 8, 16, 16), jnp.float32)        # NCHW
    p2 = init_basic_block_params(kp2, in_planes=8, planes=8)
    y2 = jax.block_until_ready(fwd(x2, p2, stride=1))
    r2 = jax.block_until_ready(_reference_forward(x2, p2, stride=1))
    assert y2.shape == (2, 8, 16, 16), y2.shape
    assert jnp.allclose(y2, r2, rtol=RTOL, atol=ATOL), float(jnp.max(jnp.abs(y2 - r2)))

    print("KERNEL_OK")
</pallas_src>

<mosaic_0001>
module attributes {stable_mosaic.version = 11 : i64} {
  func.func @_matmul_stats_kernel(%arg0: i32, %arg1: memref<1x64x1152xbf16, #tpu.memory_space<vmem>>, %arg2: memref<1152x128xbf16, #tpu.memory_space<vmem>>, %arg3: memref<1x96x128xbf16, #tpu.memory_space<vmem>>, %arg4: memref<1x2x128xf32, #tpu.memory_space<vmem>>) attributes {dimension_semantics = [#tpu.dimension_semantics<parallel>], iteration_bounds = array<i64: 2>, scalar_prefetch = 0 : i64, scratch_operands = 0 : i64, tpu.core_type = #tpu.core_type<tc>, window_params = [{transform_indices = @transform_0, window_bounds = array<i64: 1, 64, 1152>}, {pipeline_mode = #tpu.pipeline_mode<synchronous>, transform_indices = @transform_1, window_bounds = array<i64: 1152, 128>}, {transform_indices = @transform_2, window_bounds = array<i64: 1, 96, 128>}, {transform_indices = @transform_3, window_bounds = array<i64: 1, 2, 128>}]} {
    %c0 = arith.constant 0 : index
    %c0_0 = arith.constant 0 : index
    %c0_1 = arith.constant 0 : index
    %0 = vector.load %arg1[%c0, %c0_0, %c0_1] : memref<1x64x1152xbf16, #tpu.memory_space<vmem>>, vector<1x64x1152xbf16>
    %1 = vector.shape_cast %0 : vector<1x64x1152xbf16> to vector<64x1152xbf16>
    %c0_2 = arith.constant 0 : index
    %c0_3 = arith.constant 0 : index
    %2 = vector.load %arg2[%c0_2, %c0_3] : memref<1152x128xbf16, #tpu.memory_space<vmem>>, vector<1152x128xbf16>
    %cst = arith.constant dense<0.000000e+00> : vector<64x128xf32>
    %3 = tpu.matmul %1, %2, %cst {dimension_numbers = #tpu.dot_dimension_numbers<[1], [0], [0], [1], [0, 0, 1, 1], [], []>} : vector<64x1152xbf16>, vector<1152x128xbf16>, vector<64x128xf32> -> vector<64x128xf32>
    %4 = arith.truncf %3 : vector<64x128xf32> to vector<64x128xbf16>
    %c0_4 = arith.constant 0 : index
    %c16 = arith.constant 16 : index
    %c0_5 = arith.constant 0 : index
    %5 = vector.load %arg3[%c0_4, %c16, %c0_5] : memref<1x96x128xbf16, #tpu.memory_space<vmem>>, vector<1x64x128xbf16>
    %6 = vector.shape_cast %5 : vector<1x64x128xbf16> to vector<64x128xbf16>
    %7 = vector.shape_cast %4 : vector<64x128xbf16> to vector<1x64x128xbf16>
    tpu.vector_store %arg3[%c0_4, %c16, %c0_5], %7 {strides = array<i32>} : memref<1x96x128xbf16, #tpu.memory_space<vmem>>, vector<1x64x128xbf16>,
    %cst_6 = arith.constant dense<0.000000e+00> : vector<128xf32>
    %8 = vector.multi_reduction <add>, %3, %cst_6 [0] : vector<64x128xf32> to vector<128xf32>
    %9 = vector.shape_cast %8 : vector<128xf32> to vector<1x128xf32>
    %cst_7 = arith.constant 1.562500e-02 : f32
    %10 = vector.broadcast %cst_7 : f32 to vector<1x128xf32>
    %11 = arith.mulf %9, %10 : vector<1x128xf32>
    %12 = vector.broadcast %11 : vector<1x128xf32> to vector<64x128xf32>
    %13 = arith.subf %3, %12 : vector<64x128xf32>
    %c0_8 = arith.constant 0 : index
    %c0_9 = arith.constant 0 : index
    %c0_10 = arith.constant 0 : index
    %14 = vector.load %arg4[%c0_8, %c0_9, %c0_10] : memref<1x2x128xf32, #tpu.memory_space<vmem>>, vector<1x1x128xf32>
    %15 = vector.shape_cast %14 : vector<1x1x128xf32> to vector<1x128xf32>
    %16 = vector.shape_cast %9 : vector<1x128xf32> to vector<1x1x128xf32>
    tpu.vector_store %arg4[%c0_8, %c0_9, %c0_10], %16 {strides = array<i32>} : memref<1x2x128xf32, #tpu.memory_space<vmem>>, vector<1x1x128xf32>,
    %17 = arith.mulf %13, %13 : vector<64x128xf32>
    %cst_11 = arith.constant dense<0.000000e+00> : vector<128xf32>
    %18 = vector.multi_reduction <add>, %17, %cst_11 [0] : vector<64x128xf32> to vector<128xf32>
    %19 = vector.shape_cast %18 : vector<128xf32> to vector<1x128xf32>
    %c0_12 = arith.constant 0 : index
    %c1 = arith.constant 1 : index
    %c0_13 = arith.constant 0 : index
    %20 = vector.load %arg4[%c0_12, %c1, %c0_13] : memref<1x2x128xf32, #tpu.memory_space<vmem>>, vector<1x1x128xf32>
    %21 = vector.shape_cast %20 : vector<1x1x128xf32> to vector<1x128xf32>
    %22 = vector.shape_cast %19 : vector<1x128xf32> to vector<1x1x128xf32>
    tpu.vector_store %arg4[%c0_12, %c1, %c0_13], %22 {strides = array<i32>} : memref<1x2x128xf32, #tpu.memory_space<vmem>>, vector<1x1x128xf32>,
    return
  }
  func.func @transform_0(%arg0: i32) -> (i32, i32, i32) {
    %c0_i32 = arith.constant 0 : i32
    %c0_i32_0 = arith.constant 0 : i32
    %c0_i32_1 = arith.constant 0 : i32
    return %arg0, %c0_i32, %c0_i32_0 : i32, i32, i32
  }
  func.func @transform_1(%arg0: i32) -> (i32, i32) {
    %c0_i32 = arith.constant 0 : i32
    %c0_i32_0 = arith.constant 0 : i32
    %c0_i32_1 = arith.constant 0 : i32
    return %c0_i32, %c0_i32_0 : i32, i32
  }
  func.func @transform_2(%arg0: i32) -> (i32, i32, i32) {
    %c0_i32 = arith.constant 0 : i32
    %c0_i32_0 = arith.constant 0 : i32
    %c0_i32_1 = arith.constant 0 : i32
    return %arg0, %c0_i32, %c0_i32_0 : i32, i32, i32
  }
  func.func @transform_3(%arg0: i32) -> (i32, i32, i32) {
    %c0_i32 = arith.constant 0 : i32
    %c0_i32_0 = arith.constant 0 : i32
    %c0_i32_1 = arith.constant 0 : i32
    return %arg0, %c0_i32, %c0_i32_0 : i32, i32, i32
  }
}

module attributes {stable_mosaic.version = 11 : i64} {
  func.func @_conv3x3_s1_kernel(%arg0: i32, %arg1: memref<1x96x128xbf16, #tpu.memory_space<vmem>>, %arg2: memref<1152x128xbf16, #tpu.memory_space<vmem>>, %arg3: memref<1x128xf32, #tpu.memory_space<vmem>>, %arg4: memref<1x128xf32, #tpu.memory_space<vmem>>, %arg5: memref<1x64x128xbf16, #tpu.memory_space<vmem>>, %arg6: memref<1x2x128xf32, #tpu.memory_space<vmem>>, %arg7: memref<96x128xbf16, #tpu.memory_space<vmem>>) attributes {dimension_semantics = [#tpu.dimension_semantics<parallel>], iteration_bounds = array<i64: 2>, scalar_prefetch = 0 : i64, scratch_operands = 1 : i64, tpu.core_type = #tpu.core_type<tc>, window_params = [{transform_indices = @transform_0, window_bounds = array<i64: 1, 96, 128>}, {pipeline_mode = #tpu.pipeline_mode<synchronous>, transform_indices = @transform_1, window_bounds = array<i64: 1152, 128>}, {pipeline_mode = #tpu.pipeline_mode<synchronous>, transform_indices = @transform_2, window_bounds = array<i64: 1, 128>}, {pipeline_mode = #tpu.pipeline_mode<synchronous>, transform_indices = @transform_3, window_bounds = array<i64: 1, 128>}, {transform_indices = @transform_4, window_bounds = array<i64: 1, 64, 128>}, {transform_indices = @transform_5, window_bounds = array<i64: 1, 2, 128>}]} {
    %c0 = arith.constant 0 : index
    %c0_0 = arith.constant 0 : index
    %c0_1 = arith.constant 0 : index
    %0 = vector.load %arg1[%c0, %c0_0, %c0_1] : memref<1x96x128xbf16, #tpu.memory_space<vmem>>, vector<1x96x128xbf16>
    %1 = vector.shape_cast %0 : vector<1x96x128xbf16> to vector<96x128xbf16>
    %2 = arith.extf %1 : vector<96x128xbf16> to vector<96x128xf32>
    %c0_2 = arith.constant 0 : index
    %c0_3 = arith.constant 0 : index
    %3 = vector.load %arg3[%c0_2, %c0_3] : memref<1x128xf32, #tpu.memory_space<vmem>>, vector<1x128xf32>
    %4 = vector.broadcast %3 : vector<1x128xf32> to vector<96x128xf32>
    %5 = arith.mulf %2, %4 : vector<96x128xf32>
    %c0_4 = arith.constant 0 : index
    %c0_5 = arith.constant 0 : index
    %6 = vector.load %arg4[%c0_4, %c0_5] : memref<1x128xf32, #tpu.memory_space<vmem>>, vector<1x128xf32>
    %7 = vector.broadcast %6 : vector<1x128xf32> to vector<96x128xf32>
    %8 = arith.addf %5, %7 : vector<96x128xf32>
    %cst = arith.constant 0.000000e+00 : f32
    %9 = vector.broadcast %cst : f32 to vector<96x128xf32>
    %10 = arith.maximumf %8, %9 : vector<96x128xf32>
    %11 = arith.truncf %10 : vector<96x128xf32> to vector<96x128xbf16>
    %c0_6 = arith.constant 0 : index
    %c0_7 = arith.constant 0 : index
    %12 = vector.load %arg7[%c0_6, %c0_7] : memref<96x128xbf16, #tpu.memory_space<vmem>>, vector<96x128xbf16>
    tpu.vector_store %arg7[%c0_6, %c0_7], %11 {strides = array<i32>} : memref<96x128xbf16, #tpu.memory_space<vmem>>, vector<96x128xbf16>,
    %13 = tpu.iota {dimensions = array<i32: 0>} : vector<64x1xi32>
    %c8_i32 = arith.constant 8 : i32
    %c0_i32 = arith.constant 0 : i32
    %14 = arith.cmpi eq, %c8_i32, %c0_i32 : i32
    %c1_i32 = arith.constant 1 : i32
    %15 = arith.select %14, %c1_i32, %c8_i32 : i32
    %16 = vector.broadcast %15 : i32 to vector<64x1xi32>
    %17 = arith.remsi %13, %16 : vector<64x1xi32>
    %c0_i32_8 = arith.constant 0 : i32
    %18 = vector.broadcast %c0_i32_8 : i32 to vector<64x1xi32>
    %19 = arith.cmpi ne, %17, %18 : vector<64x1xi32>
    %c0_i32_9 = arith.constant 0 : i32
    %20 = vector.broadcast %c0_i32_9 : i32 to vector<64x1xi32>
    %21 = arith.cmpi slt, %17, %20 : vector<64x1xi32>
    %c0_i32_10 = arith.constant 0 : i32
    %22 = arith.cmpi slt, %15, %c0_i32_10 : i32
    %23 = vector.broadcast %22 : i1 to vector<64x1xi1>
    %24 = vector.broadcast %23 : vector<64x1xi1> to vector<64x1xi1>
    %25 = arith.xori %21, %24 : vector<64x1xi1>
    %26 = arith.andi %25, %19 : vector<64x1xi1>
    %27 = vector.broadcast %15 : i32 to vector<64x1xi32>
    %28 = arith.addi %17, %27 : vector<64x1xi32>
    %29 = arith.select %26, %28, %17 : vector<64x1xi1>, vector<64x1xi32>
    %c8_i32_11 = arith.constant 8 : i32
    %30 = vector.broadcast %c8_i32_11 : i32 to vector<64x1xi32>
    %31 = arith.cmpi sge, %13, %30 : vector<64x1xi32>
    %c56_i32 = arith.constant 56 : i32
    %32 = vector.broadcast %c56_i32 : i32 to vector<64x1xi32>
    %33 = arith.cmpi slt, %13, %32 : vector<64x1xi32>
    %c0_i32_12 = arith.constant 0 : i32
    %34 = vector.broadcast %c0_i32_12 : i32 to vector<64x1xi32>
    %35 = arith.cmpi ne, %29, %34 : vector<64x1xi32>
    %c7_i32 = arith.constant 7 : i32
    %36 = vector.broadcast %c7_i32 : i32 to vector<64x1xi32>
    %37 = arith.cmpi ne, %29, %36 : vector<64x1xi32>
    %cst_13 = arith.constant 0.000000e+00 : f32
    %38 = vector.broadcast %cst_13 : f32 to vector<64x128xf32>
    %c7 = arith.constant 7 : index
    %c0_14 = arith.constant 0 : index
    %39 = vector.load %arg7[%c7, %c0_14] : memref<96x128xbf16, #tpu.memory_space<vmem>>, vector<64x128xbf16>
    %40 = arith.andi %31, %35 : vector<64x1xi1>
    %cst_15 = arith.constant 0.000000e+00 : bf16
    %41 = vector.shape_cast %40 : vector<64x1xi1> to vector<64x1xi1>
    %42 = vector.broadcast %41 : vector<64x1xi1> to vector<64x128xi1>
    %43 = vector.broadcast %cst_15 : bf16 to vector<64x128xbf16>
    %44 = arith.select %42, %39, %43 : vector<64x128xi1>, vector<64x128xbf16>
    %c0_16 = arith.constant 0 : index
    %c0_17 = arith.constant 0 : index
    %45 = vector.load %arg2[%c0_16, %c0_17] : memref<1152x128xbf16, #tpu.memory_space<vmem>>, vector<128x128xbf16>
    %cst_18 = arith.constant dense<0.000000e+00> : vector<64x128xf32>
    %46 = tpu.matmul %44, %45, %cst_18 {dimension_numbers = #tpu.dot_dimension_numbers<[1], [0], [0], [1], [0, 0, 1, 1], [], []>} : vector<64x128xbf16>, vector<128x128xbf16>, vector<64x128xf32> -> vector<64x128xf32>
    %47 = arith.addf %38, %46 : vector<64x128xf32>
    %c8 = arith.constant 8 : index
    %c0_19 = arith.constant 0 : index
    %48 = vector.load %arg7[%c8, %c0_19] : memref<96x128xbf16, #tpu.memory_space<vmem>>, vector<64x128xbf16>
    %cst_20 = arith.constant 0.000000e+00 : bf16
    %49 = vector.shape_cast %31 : vector<64x1xi1> to vector<64x1xi1>
    %50 = vector.broadcast %49 : vector<64x1xi1> to vector<64x128xi1>
    %51 = vector.broadcast %cst_20 : bf16 to vector<64x128xbf16>
    %52 = arith.select %50, %48, %51 : vector<64x128xi1>, vector<64x128xbf16>
    %c128 = arith.constant 128 : index
    %c0_21 = arith.constant 0 : index
    %53 = vector.load %arg2[%c128, %c0_21] : memref<1152x128xbf16, #tpu.memory_space<vmem>>, vector<128x128xbf16>
    %cst_22 = arith.constant dense<0.000000e+00> : vector<64x128xf32>
    %54 = tpu.matmul %52, %53, %cst_22 {dimension_numbers = #tpu.dot_dimension_numbers<[1], [0], [0], [1], [0, 0, 1, 1], [], []>} : vector<64x128xbf16>, vector<128x128xbf16>, vector<64x128xf32> -> vector<64x128xf32>
    %55 = arith.addf %47, %54 : vector<64x128xf32>
    %c9 = arith.constant 9 : index
    %c0_23 = arith.constant 0 : index
    %56 = vector.load %arg7[%c9, %c0_23] : memref<96x128xbf16, #tpu.memory_space<vmem>>, vector<64x128xbf16>
    %57 = arith.andi %31, %37 : vector<64x1xi1>
    %cst_24 = arith.constant 0.000000e+00 : bf16
    %58 = vector.shape_cast %57 : vector<64x1xi1> to vector<64x1xi1>
    %59 = vector.broadcast %58 : vector<64x1xi1> to vector<64x128xi1>
    %60 = vector.broadcast %cst_24 : bf16 to vector<64x128xbf16>
    %61 = arith.select %59, %56, %60 : vector<64x128xi1>, vector<64x128xbf16>
    %c256 = arith.constant 256 : index
    %c0_25 = arith.constant 0 : index
    %62 = vector.load %arg2[%c256, %c0_25] : memref<1152x128xbf16, #tpu.memory_space<vmem>>, vector<128x128xbf16>
    %cst_26 = arith.constant dense<0.000000e+00> : vector<64x128xf32>
    %63 = tpu.matmul %61, %62, %cst_26 {dimension_numbers = #tpu.dot_dimension_numbers<[1], [0], [0], [1], [0, 0, 1, 1], [], []>} : vector<64x128xbf16>, vector<128x128xbf16>, vector<64x128xf32> -> vector<64x128xf32>
    %64 = arith.addf %55, %63 : vector<64x128xf32>
    %c15 = arith.constant 15 : index
    %c0_27 = arith.constant 0 : index
    %65 = vector.load %arg7[%c15, %c0_27] : memref<96x128xbf16, #tpu.memory_space<vmem>>, vector<64x128xbf16>
    %cst_28 = arith.constant 0.000000e+00 : bf16
    %66 = vector.shape_cast %35 : vector<64x1xi1> to vector<64x1xi1>
    %67 = vector.broadcast %66 : vector<64x1xi1> to vector<64x128xi1>
    %68 = vector.broadcast %cst_28 : bf16 to vector<64x128xbf16>
    %69 = arith.select %67, %65, %68 : vector<64x128xi1>, vector<64x128xbf16>
    %c384 = arith.constant 384 : index
    %c0_29 = arith.constant 0 : index
    %70 = vector.load %arg2[%c384, %c0_29] : memref<1152x128xbf16, #tpu.memory_space<vmem>>, vector<128x128xbf16>
    %cst_30 = arith.constant dense<0.000000e+00> : vector<64x128xf32>
    %71 = tpu.matmul %69, %70, %cst_30 {dimension_numbers = #tpu.dot_dimension_numbers<[1], [0], [0], [1], [0, 0, 1, 1], [], []>} : vector<64x128xbf16>, vector<128x128xbf16>, vector<64x128xf32> -> vector<64x128xf32>
    %72 = arith.addf %64, %71 : vector<64x128xf32>
    %c16 = arith.constant 16 : index
    %c0_31 = arith.constant 0 : index
    %73 = vector.load %arg7[%c16, %c0_31] : memref<96x128xbf16, #tpu.memory_space<vmem>>, vector<64x128xbf16>
    %c512 = arith.constant 512 : index
    %c0_32 = arith.constant 0 : index
    %74 = vector.load %arg2[%c512, %c0_32] : memref<1152x128xbf16, #tpu.memory_space<vmem>>, vector<128x128xbf16>
    %cst_33 = arith.constant dense<0.000000e+00> : vector<64x128xf32>
    %75 = tpu.matmul %73, %74, %cst_33 {dimension_numbers = #tpu.dot_dimension_numbers<[1], [0], [0], [1], [0, 0, 1, 1], [], []>} : vector<64x128xbf16>, vector<128x128xbf16>, vector<64x128xf32> -> vector<64x128xf32>
    %76 = arith.addf %72, %75 : vector<64x128xf32>
    %c17 = arith.constant 17 : index
    %c0_34 = arith.constant 0 : index
    %77 = vector.load %arg7[%c17, %c0_34] : memref<96x128xbf16, #tpu.memory_space<vmem>>, vector<64x128xbf16>
    %cst_35 = arith.constant 0.000000e+00 : bf16
    %78 = vector.shape_cast %37 : vector<64x1xi1> to vector<64x1xi1>
    %79 = vector.broadcast %78 : vector<64x1xi1> to vector<64x128xi1>
    %80 = vector.broadcast %cst_35 : bf16 to vector<64x128xbf16>
    %81 = arith.select %79, %77, %80 : vector<64x128xi1>, vector<64x128xbf16>
    %c640 = arith.constant 640 : index
    %c0_36 = arith.constant 0 : index
    %82 = vector.load %arg2[%c640, %c0_36] : memref<1152x128xbf16, #tpu.memory_space<vmem>>, vector<128x128xbf16>
    %cst_37 = arith.constant dense<0.000000e+00> : vector<64x128xf32>
    %83 = tpu.matmul %81, %82, %cst_37 {dimension_numbers = #tpu.dot_dimension_numbers<[1], [0], [0], [1], [0, 0, 1, 1], [], []>} : vector<64x128xbf16>, vector<128x128xbf16>, vector<64x128xf32> -> vector<64x128xf32>
    %84 = arith.addf %76, %83 : vector<64x128xf32>
    %c23 = arith.constant 23 : index
    %c0_38 = arith.constant 0 : index
    %85 = vector.load %arg7[%c23, %c0_38] : memref<96x128xbf16, #tpu.memory_space<vmem>>, vector<64x128xbf16>
    %86 = arith.andi %33, %35 : vector<64x1xi1>
    %cst_39 = arith.constant 0.000000e+00 : bf16
    %87 = vector.shape_cast %86 : vector<64x1xi1> to vector<64x1xi1>
    %88 = vector.broadcast %87 : vector<64x1xi1> to vector<64x128xi1>
    %89 = vector.broadcast %cst_39 : bf16 to vector<64x128xbf16>
    %90 = arith.select %88, %85, %89 : vector<64x128xi1>, vector<64x128xbf16>
    %c768 = arith.constant 768 : index
    %c0_40 = arith.constant 0 : index
    %91 = vector.load %arg2[%c768, %c0_40] : memref<1152x128xbf16, #tpu.memory_space<vmem>>, vector<128x128xbf16>
    %cst_41 = arith.constant dense<0.000000e+00> : vector<64x128xf32>
    %92 = tpu.matmul %90, %91, %cst_41 {dimension_numbers = #tpu.dot_dimension_numbers<[1], [0], [0], [1], [0, 0, 1, 1], [], []>} : vector<64x128xbf16>, vector<128x128xbf16>, vector<64x128xf32> -> vector<64x128xf32>
    %93 = arith.addf %84, %92 : vector<64x128xf32>
    %c24 = arith.constant 24 : index
    %c0_42 = arith.constant 0 : index
    %94 = vector.load %arg7[%c24, %c0_42] : memref<96x128xbf16, #tpu.memory_space<vmem>>, vector<64x128xbf16>
    %cst_43 = arith.constant 0.000000e+00 : bf16
    %95 = vector.shape_cast %33 : vector<64x1xi1> to vector<64x1xi1>
    %96 = vector.broadcast %95 : vector<64x1xi1> to vector<64x128xi1>
    %97 = vector.broadcast %cst_43 : bf16 to vector<64x128xbf16>
    %98 = arith.select %96, %94, %97 : vector<64x128xi1>, vector<64x128xbf16>
    %c896 = arith.constant 896 : index
    %c0_44 = arith.constant 0 : index
    %99 = vector.load %arg2[%c896, %c0_44] : memref<1152x128xbf16, #tpu.memory_space<vmem>>, vector<128x128xbf16>
    %cst_45 = arith.constant dense<0.000000e+00> : vector<64x128xf32>
    %100 = tpu.matmul %98, %99, %cst_45 {dimension_numbers = #tpu.dot_dimension_numbers<[1], [0], [0], [1], [0, 0, 1, 1], [], []>} : vector<64x128xbf16>, vector<128x128xbf16>, vector<64x128xf32> -> vector<64x128xf32>
    %101 = arith.addf %93, %100 : vector<64x128xf32>
    %c25 = arith.constant 25 : index
    %c0_46 = arith.constant 0 : index
    %102 = vector.load %arg7[%c25, %c0_46] : memref<96x128xbf16, #tpu.memory_space<vmem>>, vector<64x128xbf16>
    %103 = arith.andi %33, %37 : vector<64x1xi1>
    %cst_47 = arith.constant 0.000000e+00 : bf16
    %104 = vector.shape_cast %103 : vector<64x1xi1> to vector<64x1xi1>
    %105 = vector.broadcast %104 : vector<64x1xi1> to vector<64x128xi1>
    %106 = vector.broadcast %cst_47 : bf16 to vector<64x128xbf16>
    %107 = arith.select %105, %102, %106 : vector<64x128xi1>, vector<64x128xbf16>
    %c1024 = arith.constant 1024 : index
    %c0_48 = arith.constant 0 : index
    %108 = vector.load %arg2[%c1024, %c0_48] : memref<1152x128xbf16, #tpu.memory_space<vmem>>, vector<128x128xbf16>
    %cst_49 = arith.constant dense<0.000000e+00> : vector<64x128xf32>
    %109 = tpu.matmul %107, %108, %cst_49 {dimension_numbers = #tpu.dot_dimension_numbers<[1], [0], [0], [1], [0, 0, 1, 1], [], []>} : vector<64x128xbf16>, vector<128x128xbf16>, vector<64x128xf32> -> vector<64x128xf32>
    %110 = arith.addf %101, %109 : vector<64x128xf32>
    %111 = arith.truncf %110 : vector<64x128xf32> to vector<64x128xbf16>
    %c0_50 = arith.constant 0 : index
    %c0_51 = arith.constant 0 : index
    %c0_52 = arith.constant 0 : index
    %112 = vector.load %arg5[%c0_50, %c0_51, %c0_52] : memref<1x64x128xbf16, #tpu.memory_space<vmem>>, vector<1x64x128xbf16>
    %113 = vector.shape_cast %112 : vector<1x64x128xbf16> to vector<64x128xbf16>
    %114 = vector.shape_cast %111 : vector<64x128xbf16> to vector<1x64x128xbf16>
    tpu.vector_store %arg5[%c0_50, %c0_51, %c0_52], %114 {strides = array<i32>} : memref<1x64x128xbf16, #tpu.memory_space<vmem>>, vector<1x64x128xbf16>,
    %cst_53 = arith.constant dense<0.000000e+00> : vector<128xf32>
    %115 = vector.multi_reduction <add>, %110, %cst_53 [0] : vector<64x128xf32> to vector<128xf32>
    %116 = vector.shape_cast %115 : vector<128xf32> to vector<1x128xf32>
    %cst_54 = arith.constant 1.562500e-02 : f32
    %117 = vector.broadcast %cst_54 : f32 to vector<1x128xf32>
    %118 = arith.mulf %116, %117 : vector<1x128xf32>
    %119 = vector.broadcast %118 : vector<1x128xf32> to vector<64x128xf32>
    %120 = arith.subf %110, %119 : vector<64x128xf32>
    %c0_55 = arith.constant 0 : index
    %c0_56 = arith.constant 0 : index
    %c0_57 = arith.constant 0 : index
    %121 = vector.load %arg6[%c0_55, %c0_56, %c0_57] : memref<1x2x128xf32, #tpu.memory_space<vmem>>, vector<1x1x128xf32>
    %122 = vector.shape_cast %121 : vector<1x1x128xf32> to vector<1x128xf32>
    %123 = vector.shape_cast %116 : vector<1x128xf32> to vector<1x1x128xf32>
    tpu.vector_store %arg6[%c0_55, %c0_56, %c0_57], %123 {strides = array<i32>} : memref<1x2x128xf32, #tpu.memory_space<vmem>>, vector<1x1x128xf32>,
    %124 = arith.mulf %120, %120 : vector<64x128xf32>
    %cst_58 = arith.constant dense<0.000000e+00> : vector<128xf32>
    %125 = vector.multi_reduction <add>, %124, %cst_58 [0] : vector<64x128xf32> to vector<128xf32>
    %126 = vector.shape_cast %125 : vector<128xf32> to vector<1x128xf32>
    %c0_59 = arith.constant 0 : index
    %c1 = arith.constant 1 : index
    %c0_60 = arith.constant 0 : index
    %127 = vector.load %arg6[%c0_59, %c1, %c0_60] : memref<1x2x128xf32, #tpu.memory_space<vmem>>, vector<1x1x128xf32>
    %128 = vector.shape_cast %127 : vector<1x1x128xf32> to vector<1x128xf32>
    %129 = vector.shape_cast %126 : vector<1x128xf32> to vector<1x1x128xf32>
    tpu.vector_store %arg6[%c0_59, %c1, %c0_60], %129 {strides = array<i32>} : memref<1x2x128xf32, #tpu.memory_space<vmem>>, vector<1x1x128xf32>,
    return
  }
  func.func @transform_0(%arg0: i32) -> (i32, i32, i32) {
    %c0_i32 = arith.constant 0 : i32
    %c0_i32_0 = arith.constant 0 : i32
    %c0_i32_1 = arith.constant 0 : i32
    return %arg0, %c0_i32, %c0_i32_0 : i32, i32, i32
  }
  func.func @transform_1(%arg0: i32) -> (i32, i32) {
    %c0_i32 = arith.constant 0 : i32
    %c0_i32_0 = arith.constant 0 : i32
    %c0_i32_1 = arith.constant 0 : i32
    return %c0_i32, %c0_i32_0 : i32, i32
  }
  func.func @transform_2(%arg0: i32) -> (i32, i32) {
    %c0_i32 = arith.constant 0 : i32
    %c0_i32_0 = arith.constant 0 : i32
    %c0_i32_1 = arith.constant 0 : i32
    return %c0_i32, %c0_i32_0 : i32, i32
  }
  func.func @transform_3(%arg0: i32) -> (i32, i32) {
    %c0_i32 = arith.constant 0 : i32
    %c0_i32_0 = arith.constant 0 : i32
    %c0_i32_1 = arith.constant 0 : i32
    return %c0_i32, %c0_i32_0 : i32, i32
  }
  func.func @transform_4(%arg0: i32) -> (i32, i32, i32) {
    %c0_i32 = arith.constant 0 : i32
    %c0_i32_0 = arith.constant 0 : i32
    %c0_i32_1 = arith.constant 0 : i32
    return %arg0, %c0_i32, %c0_i32_0 : i32, i32, i32
  }
  func.func @transform_5(%arg0: i32) -> (i32, i32, i32) {
    %c0_i32 = arith.constant 0 : i32
    %c0_i32_0 = arith.constant 0 : i32
    %c0_i32_1 = arith.constant 0 : i32
    return %arg0, %c0_i32, %c0_i32_0 : i32, i32, i32
  }
}

module attributes {stable_mosaic.version = 11 : i64} {
  func.func @_matmul_stats_kernel(%arg0: i32, %arg1: memref<1x64x128xbf16, #tpu.memory_space<vmem>>, %arg2: memref<128x128xbf16, #tpu.memory_space<vmem>>, %arg3: memref<1x64x128xbf16, #tpu.memory_space<vmem>>, %arg4: memref<1x2x128xf32, #tpu.memory_space<vmem>>) attributes {dimension_semantics = [#tpu.dimension_semantics<parallel>], iteration_bounds = array<i64: 2>, scalar_prefetch = 0 : i64, scratch_operands = 0 : i64, tpu.core_type = #tpu.core_type<tc>, window_params = [{transform_indices = @transform_0, window_bounds = array<i64: 1, 64, 128>}, {pipeline_mode = #tpu.pipeline_mode<synchronous>, transform_indices = @transform_1, window_bounds = array<i64: 128, 128>}, {transform_indices = @transform_2, window_bounds = array<i64: 1, 64, 128>}, {transform_indices = @transform_3, window_bounds = array<i64: 1, 2, 128>}]} {
    %c0 = arith.constant 0 : index
    %c0_0 = arith.constant 0 : index
    %c0_1 = arith.constant 0 : index
    %0 = vector.load %arg1[%c0, %c0_0, %c0_1] : memref<1x64x128xbf16, #tpu.memory_space<vmem>>, vector<1x64x128xbf16>
    %1 = vector.shape_cast %0 : vector<1x64x128xbf16> to vector<64x128xbf16>
    %c0_2 = arith.constant 0 : index
    %c0_3 = arith.constant 0 : index
    %2 = vector.load %arg2[%c0_2, %c0_3] : memref<128x128xbf16, #tpu.memory_space<vmem>>, vector<128x128xbf16>
    %cst = arith.constant dense<0.000000e+00> : vector<64x128xf32>
    %3 = tpu.matmul %1, %2, %cst {dimension_numbers = #tpu.dot_dimension_numbers<[1], [0], [0], [1], [0, 0, 1, 1], [], []>} : vector<64x128xbf16>, vector<128x128xbf16>, vector<64x128xf32> -> vector<64x128xf32>
    %4 = arith.truncf %3 : vector<64x128xf32> to vector<64x128xbf16>
    %c0_4 = arith.constant 0 : index
    %c0_5 = arith.constant 0 : index
    %c0_6 = arith.constant 0 : index
    %5 = vector.load %arg3[%c0_4, %c0_5, %c0_6] : memref<1x64x128xbf16, #tpu.memory_space<vmem>>, vector<1x64x128xbf16>
    %6 = vector.shape_cast %5 : vector<1x64x128xbf16> to vector<64x128xbf16>
    %7 = vector.shape_cast %4 : vector<64x128xbf16> to vector<1x64x128xbf16>
    tpu.vector_store %arg3[%c0_4, %c0_5, %c0_6], %7 {strides = array<i32>} : memref<1x64x128xbf16, #tpu.memory_space<vmem>>, vector<1x64x128xbf16>,
    %cst_7 = arith.constant dense<0.000000e+00> : vector<128xf32>
    %8 = vector.multi_reduction <add>, %3, %cst_7 [0] : vector<64x128xf32> to vector<128xf32>
    %9 = vector.shape_cast %8 : vector<128xf32> to vector<1x128xf32>
    %cst_8 = arith.constant 1.562500e-02 : f32
    %10 = vector.broadcast %cst_8 : f32 to vector<1x128xf32>
    %11 = arith.mulf %9, %10 : vector<1x128xf32>
    %12 = vector.broadcast %11 : vector<1x128xf32> to vector<64x128xf32>
    %13 = arith.subf %3, %12 : vector<64x128xf32>
    %c0_9 = arith.constant 0 : index
    %c0_10 = arith.constant 0 : index
    %c0_11 = arith.constant 0 : index
    %14 = vector.load %arg4[%c0_9, %c0_10, %c0_11] : memref<1x2x128xf32, #tpu.memory_space<vmem>>, vector<1x1x128xf32>
    %15 = vector.shape_cast %14 : vector<1x1x128xf32> to vector<1x128xf32>
    %16 = vector.shape_cast %9 : vector<1x128xf32> to vector<1x1x128xf32>
    tpu.vector_store %arg4[%c0_9, %c0_10, %c0_11], %16 {strides = array<i32>} : memref<1x2x128xf32, #tpu.memory_space<vmem>>, vector<1x1x128xf32>,
    %17 = arith.mulf %13, %13 : vector<64x128xf32>
    %cst_12 = arith.constant dense<0.000000e+00> : vector<128xf32>
    %18 = vector.multi_reduction <add>, %17, %cst_12 [0] : vector<64x128xf32> to vector<128xf32>
    %19 = vector.shape_cast %18 : vector<128xf32> to vector<1x128xf32>
    %c0_13 = arith.constant 0 : index
    %c1 = arith.constant 1 : index
    %c0_14 = arith.constant 0 : index
    %20 = vector.load %arg4[%c0_13, %c1, %c0_14] : memref<1x2x128xf32, #tpu.memory_space<vmem>>, vector<1x1x128xf32>
    %21 = vector.shape_cast %20 : vector<1x1x128xf32> to vector<1x128xf32>
    %22 = vector.shape_cast %19 : vector<1x128xf32> to vector<1x1x128xf32>
    tpu.vector_store %arg4[%c0_13, %c1, %c0_14], %22 {strides = array<i32>} : memref<1x2x128xf32, #tpu.memory_space<vmem>>, vector<1x1x128xf32>,
    return
  }
  func.func @transform_0(%arg0: i32) -> (i32, i32, i32) {
    %c0_i32 = arith.constant 0 : i32
    %c0_i32_0 = arith.constant 0 : i32
    %c0_i32_1 = arith.constant 0 : i32
    return %arg0, %c0_i32, %c0_i32_0 : i32, i32, i32
  }
  func.func @transform_1(%arg0: i32) -> (i32, i32) {
    %c0_i32 = arith.constant 0 : i32
    %c0_i32_0 = arith.constant 0 : i32
    %c0_i32_1 = arith.constant 0 : i32
    return %c0_i32, %c0_i32_0 : i32, i32
  }
  func.func @transform_2(%arg0: i32) -> (i32, i32, i32) {
    %c0_i32 = arith.constant 0 : i32
    %c0_i32_0 = arith.constant 0 : i32
    %c0_i32_1 = arith.constant 0 : i32
    return %arg0, %c0_i32, %c0_i32_0 : i32, i32, i32
  }
  func.func @transform_3(%arg0: i32) -> (i32, i32, i32) {
    %c0_i32 = arith.constant 0 : i32
    %c0_i32_0 = arith.constant 0 : i32
    %c0_i32_1 = arith.constant 0 : i32
    return %arg0, %c0_i32, %c0_i32_0 : i32, i32, i32
  }
}

module attributes {stable_mosaic.version = 11 : i64} {
  func.func @_bn_bn_add_relu_kernel(%arg0: i32, %arg1: memref<1x64x128xbf16, #tpu.memory_space<vmem>>, %arg2: memref<1x64x128xbf16, #tpu.memory_space<vmem>>, %arg3: memref<1x128xf32, #tpu.memory_space<vmem>>, %arg4: memref<1x128xf32, #tpu.memory_space<vmem>>, %arg5: memref<1x128xf32, #tpu.memory_space<vmem>>, %arg6: memref<1x128xf32, #tpu.memory_space<vmem>>, %arg7: memref<1x64x128xf32, #tpu.memory_space<vmem>>) attributes {dimension_semantics = [#tpu.dimension_semantics<parallel>], iteration_bounds = array<i64: 2>, scalar_prefetch = 0 : i64, scratch_operands = 0 : i64, tpu.core_type = #tpu.core_type<tc>, window_params = [{transform_indices = @transform_0, window_bounds = array<i64: 1, 64, 128>}, {transform_indices = @transform_1, window_bounds = array<i64: 1, 64, 128>}, {pipeline_mode = #tpu.pipeline_mode<synchronous>, transform_indices = @transform_2, window_bounds = array<i64: 1, 128>}, {pipeline_mode = #tpu.pipeline_mode<synchronous>, transform_indices = @transform_3, window_bounds = array<i64: 1, 128>}, {pipeline_mode = #tpu.pipeline_mode<synchronous>, transform_indices = @transform_4, window_bounds = array<i64: 1, 128>}, {pipeline_mode = #tpu.pipeline_mode<synchronous>, transform_indices = @transform_5, window_bounds = array<i64: 1, 128>}, {transform_indices = @transform_6, window_bounds = array<i64: 1, 64, 128>}]} {
    %c0 = arith.constant 0 : index
    %c0_0 = arith.constant 0 : index
    %c0_1 = arith.constant 0 : index
    %0 = vector.load %arg1[%c0, %c0_0, %c0_1] : memref<1x64x128xbf16, #tpu.memory_space<vmem>>, vector<1x64x128xbf16>
    %1 = vector.shape_cast %0 : vector<1x64x128xbf16> to vector<64x128xbf16>
    %2 = arith.extf %1 : vector<64x128xbf16> to vector<64x128xf32>
    %c0_2 = arith.constant 0 : index
    %c0_3 = arith.constant 0 : index
    %3 = vector.load %arg3[%c0_2, %c0_3] : memref<1x128xf32, #tpu.memory_space<vmem>>, vector<1x128xf32>
    %4 = vector.broadcast %3 : vector<1x128xf32> to vector<64x128xf32>
    %5 = arith.mulf %2, %4 : vector<64x128xf32>
    %c0_4 = arith.constant 0 : index
    %c0_5 = arith.constant 0 : index
    %6 = vector.load %arg4[%c0_4, %c0_5] : memref<1x128xf32, #tpu.memory_space<vmem>>, vector<1x128xf32>
    %7 = vector.broadcast %6 : vector<1x128xf32> to vector<64x128xf32>
    %8 = arith.addf %5, %7 : vector<64x128xf32>
    %c0_6 = arith.constant 0 : index
    %c0_7 = arith.constant 0 : index
    %c0_8 = arith.constant 0 : index
    %9 = vector.load %arg2[%c0_6, %c0_7, %c0_8] : memref<1x64x128xbf16, #tpu.memory_space<vmem>>, vector<1x64x128xbf16>
    %10 = vector.shape_cast %9 : vector<1x64x128xbf16> to vector<64x128xbf16>
    %11 = arith.extf %10 : vector<64x128xbf16> to vector<64x128xf32>
    %c0_9 = arith.constant 0 : index
    %c0_10 = arith.constant 0 : index
    %12 = vector.load %arg5[%c0_9, %c0_10] : memref<1x128xf32, #tpu.memory_space<vmem>>, vector<1x128xf32>
    %13 = vector.broadcast %12 : vector<1x128xf32> to vector<64x128xf32>
    %14 = arith.mulf %11, %13 : vector<64x128xf32>
    %c0_11 = arith.constant 0 : index
    %c0_12 = arith.constant 0 : index
    %15 = vector.load %arg6[%c0_11, %c0_12] : memref<1x128xf32, #tpu.memory_space<vmem>>, vector<1x128xf32>
    %16 = vector.broadcast %15 : vector<1x128xf32> to vector<64x128xf32>
    %17 = arith.addf %14, %16 : vector<64x128xf32>
    %18 = arith.addf %8, %17 : vector<64x128xf32>
    %cst = arith.constant 0.000000e+00 : f32
    %19 = vector.broadcast %cst : f32 to vector<64x128xf32>
    %20 = arith.maximumf %18, %19 : vector<64x128xf32>
    %c0_13 = arith.constant 0 : index
    %c0_14 = arith.constant 0 : index
    %c0_15 = arith.constant 0 : index
    %21 = vector.load %arg7[%c0_13, %c0_14, %c0_15] : memref<1x64x128xf32, #tpu.memory_space<vmem>>, vector<1x64x128xf32>
    %22 = vector.shape_cast %21 : vector<1x64x128xf32> to vector<64x128xf32>
    %23 = vector.shape_cast %20 : vector<64x128xf32> to vector<1x64x128xf32>
    tpu.vector_store %arg7[%c0_13, %c0_14, %c0_15], %23 {strides = array<i32>} : memref<1x64x128xf32, #tpu.memory_space<vmem>>, vector<1x64x128xf32>,
    return
  }
  func.func @transform_0(%arg0: i32) -> (i32, i32, i32) {
    %c0_i32 = arith.constant 0 : i32
    %c0_i32_0 = arith.constant 0 : i32
    %c0_i32_1 = arith.constant 0 : i32
    return %arg0, %c0_i32, %c0_i32_0 : i32, i32, i32
  }
  func.func @transform_1(%arg0: i32) -> (i32, i32, i32) {
    %c0_i32 = arith.constant 0 : i32
    %c0_i32_0 = arith.constant 0 : i32
    %c0_i32_1 = arith.constant 0 : i32
    return %arg0, %c0_i32, %c0_i32_0 : i32, i32, i32
  }
  func.func @transform_2(%arg0: i32) -> (i32, i32) {
    %c0_i32 = arith.constant 0 : i32
    %c0_i32_0 = arith.constant 0 : i32
    %c0_i32_1 = arith.constant 0 : i32
    return %c0_i32, %c0_i32_0 : i32, i32
  }
  func.func @transform_3(%arg0: i32) -> (i32, i32) {
    %c0_i32 = arith.constant 0 : i32
    %c0_i32_0 = arith.constant 0 : i32
    %c0_i32_1 = arith.constant 0 : i32
    return %c0_i32, %c0_i32_0 : i32, i32
  }
  func.func @transform_4(%arg0: i32) -> (i32, i32) {
    %c0_i32 = arith.constant 0 : i32
    %c0_i32_0 = arith.constant 0 : i32
    %c0_i32_1 = arith.constant 0 : i32
    return %c0_i32, %c0_i32_0 : i32, i32
  }
  func.func @transform_5(%arg0: i32) -> (i32, i32) {
    %c0_i32 = arith.constant 0 : i32
    %c0_i32_0 = arith.constant 0 : i32
    %c0_i32_1 = arith.constant 0 : i32
    return %c0_i32, %c0_i32_0 : i32, i32
  }
  func.func @transform_6(%arg0: i32) -> (i32, i32, i32) {
    %c0_i32 = arith.constant 0 : i32
    %c0_i32_0 = arith.constant 0 : i32
    %c0_i32_1 = arith.constant 0 : i32
    return %arg0, %c0_i32, %c0_i32_0 : i32, i32, i32
  }
}

</mosaic_0001>

<llo_original>
// kernel: basic_block_forward.4
$region0: #{basic_block_forward.4}
  #allocation0 [shape = 'u32[]', space=smem, size = 0x4, offset = 0x4, fixed_abs, tag = 'smem constant byte address 0x4 - core index']
  #allocation1 [shape = 'u32[144,128]{1,0:T(1,128)}', space=vmem, size = 0x12000, scoped, tag = 'internal scratch']
  %s0 = inlined_call_operand.vmem [shape: bf16[2,64,1152], index: 0, kind: input, shape index: {}]
  %s1 = inlined_call_operand.vmem [shape: bf16[1152,128], index: 1, kind: input, shape index: {}]
  %s2 = inlined_call_operand.vmem [shape: bf16[2,96,128], index: 2, kind: output, shape index: {0}]
  %s3 = inlined_call_operand.vmem [shape: f32[2,2,128], index: 3, kind: output, shape index: {1}]
  %4 = xla_tuple %s2, %s3
  %s5 = sld [smem:[#allocation0]]
  $region49: #{basic_block_forward.4} parent=0
    _
  %s7 = ssub.s32 1, %s5
  %s8 = scalar_select 0, %s7, %s5
  loop: start=0, step=1, limit=4
  $region2: #{basic_block_forward.4} parent=0 // loop_pre_header
    _
  $region3: #{basic_block_forward.4} parent=0 // loop_header
    %s10 = sphi 0, %s14
    %p11 = scmp.ge.s32.totalorder %s10, 4
    %s20 = sphi 0, %s22
    %s23 = sphi 0, %s20
    %s24 = sphi 0, %s23
    %s40 = sphi 0, %s24
    %s44 = sphi 0, %s44
    %s46 = sphi 0, %s44
    %s47 = sphi 0, %s46
    %s61 = sphi 0, %s47
    %s67 = sphi 0, %s69
    %s70 = sphi 0, %s67
    %s71 = sphi 0, %s70
    %s87 = sphi 0, %s71
    %s93 = sphi 0, %s95
    %s96 = sphi 0, %s93
    %s97 = sphi 0, %s96
    %s113 = sphi 0, %s97
  $region4: #{basic_block_forward.4} parent=0 // loop_header_branch
    %13 = sbr.rel (%p11) target = $region8
  $region5: #{basic_block_forward.4} parent=0 // loop_body
    %s15 = ssub.s32 %s10, 1
    %s16 = ssub.s32 %s10, 2
    %s17 = sadd.s32 %s10, 1
    %s18 = ssub.s32 %s10, %s17
    %p19 = scmp.eq.s32.totalorder %s18, 0
    %s21 = sadd.s32 %s20, 1
    %s22 = scalar_select %p19, %s20, %s21
    %p25 = pneg %p19
    %p26 = scmp.eq.s32.totalorder %s10, 1
    %p27 = por %p25, %p26
    %p28 = scmp.ne.s32.totalorder %s20, %s23
    %p29 = scmp.eq.s32.totalorder %s10, 0
    %p30 = por %p28, %p29
    %p31 = scmp.ne.s32.totalorder %s20, %s23
    %p32 = scmp.eq.s32.totalorder %s15, 1
    %p33 = por %p31, %p32
    %p34 = scmp.ne.s32.totalorder %s23, %s24
    %p35 = scmp.eq.s32.totalorder %s15, 0
    %p36 = por %p34, %p35
    %p37 = scmp.ne.s32.totalorder %s23, %s24
    %p38 = scmp.eq.s32.totalorder %s16, 1
    %p39 = por %p37, %p38
    %p41 = scmp.ne.s32.totalorder %s24, %s40
    %p42 = scmp.eq.s32.totalorder %s16, 0
    %p43 = por %p41, %p42
    %s45 = sadd.s32 %s44, 1
    %p48 = scmp.eq.s32.totalorder %s10, 1
    %p49 = scmp.ne.s32.totalorder %s44, %s46
    %p50 = scmp.eq.s32.totalorder %s10, 0
    %p51 = por %p49, %p50
    %p52 = scmp.ne.s32.totalorder %s44, %s46
    %p53 = scmp.eq.s32.totalorder %s15, 1
    %p54 = por %p52, %p53
    %p55 = scmp.ne.s32.totalorder %s46, %s47
    %p56 = scmp.eq.s32.totalorder %s15, 0
    %p57 = por %p55, %p56
    %p58 = scmp.ne.s32.totalorder %s46, %s47
    %p59 = scmp.eq.s32.totalorder %s16, 1
    %p60 = por %p58, %p59
    %p62 = scmp.ne.s32.totalorder %s47, %s61
    %p63 = scmp.eq.s32.totalorder %s16, 0
    %p64 = por %p62, %p63
    %s65 = ssub.s32 %s10, %s17
    %p66 = scmp.eq.s32.totalorder %s65, 0
    %s68 = sadd.s32 %s67, 1
    %s69 = scalar_select %p66, %s67, %s68
    %p72 = pneg %p66
    %p73 = scmp.eq.s32.totalorder %s10, 1
    %p74 = por %p72, %p73
    %p75 = scmp.ne.s32.totalorder %s67, %s70
    %p76 = scmp.eq.s32.totalorder %s10, 0
    %p77 = por %p75, %p76
    %p78 = scmp.ne.s32.totalorder %s67, %s70
    %p79 = scmp.eq.s32.totalorder %s15, 1
    %p80 = por %p78, %p79
    %p81 = scmp.ne.s32.totalorder %s70, %s71
    %p82 = scmp.eq.s32.totalorder %s15, 0
    %p83 = por %p81, %p82
    %p84 = scmp.ne.s32.totalorder %s70, %s71
    %p85 = scmp.eq.s32.totalorder %s16, 1
    %p86 = por %p84, %p85
    %p88 = scmp.ne.s32.totalorder %s71, %s87
    %p89 = scmp.eq.s32.totalorder %s16, 0
    %p90 = por %p88, %p89
    %s91 = ssub.s32 %s10, %s17
    %p92 = scmp.eq.s32.totalorder %s91, 0
    %s94 = sadd.s32 %s93, 1
    %s95 = scalar_select %p92, %s93, %s94
    %p98 = pneg %p92
    %p99 = scmp.eq.s32.totalorder %s10, 1
    %p100 = por %p98, %p99
    %p101 = scmp.ne.s32.totalorder %s93, %s96
    %p102 = scmp.eq.s32.totalorder %s10, 0
    %p103 = por %p101, %p102
    %p104 = scmp.ne.s32.totalorder %s93, %s96
    %p105 = scmp.eq.s32.totalorder %s15, 1
    %p106 = por %p104, %p105
    %p107 = scmp.ne.s32.totalorder %s96, %s97
    %p108 = scmp.eq.s32.totalorder %s15, 0
    %p109 = por %p107, %p108
    %p110 = scmp.ne.s32.totalorder %s96, %s97
    %p111 = scmp.eq.s32.totalorder %s16, 1
    %p112 = por %p110, %p111
    %p114 = scmp.ne.s32.totalorder %s97, %s113
    %p115 = scmp.eq.s32.totalorder %s16, 0
    %p116 = por %p114, %p115
    %p117 = scmp.le.s32.totalorder 1, %s10
    %p118 = scmp.lt.s32.totalorder %s10, 3
    %p119 = pnand %p117, %p118
    %p120 = pneg %p119
    // Predicated region
    $region9: #{basic_block_forward.4} parent=5 // pred_check
      _
    $region10: #{basic_block_forward.4} parent=5 // pred_check_branch
      %122 = sbr.rel (%p119) target = $region12
    $region11: #{basic_block_forward.4} parent=5 // pred_region
      %s123 = ssub.s32 %s10, 1
      // Predicated region
      $region13: #{basic_block_forward.4} parent=11 // pred_check
        %p124 = pneg %p57
      $region14: #{basic_block_forward.4} parent=11 // pred_check_branch
        %126 = sbr.rel (%p124) target = $region16
      $region15: #{basic_block_forward.4} parent=11 // pred_region
        _
      $region16: #{basic_block_forward.4} parent=11 // pred_fallthru
        _
    $region12: #{basic_block_forward.4} parent=5 // pred_fallthru
      _
    %p127 = scmp.lt.s32.totalorder %s10, 2
    // Predicated region
    $region17: #{basic_block_forward.4} parent=5 // pred_check
      %p128 = pneg %p127
    $region18: #{basic_block_forward.4} parent=5 // pred_check_branch
      %130 = sbr.rel (%p128) target = $region20
    $region19: #{basic_block_forward.4} parent=5 // pred_region
      // Predicated region
      $region21: #{basic_block_forward.4} parent=19 // pred_check
        %p131 = pneg %p30
      $region22: #{basic_block_forward.4} parent=19 // pred_check_branch
        %133 = sbr.rel (%p131) target = $region24
      $region23: #{basic_block_forward.4} parent=19 // pred_region
        %p134 = scmp.lt.s32.totalorder %s10, 1
        %s135 = scalar_select %p134, %s10, 1
        %s136 = smul.addr %s135, 72
        %s137 = smul.addr %s136, 4
        %s138 = scalar_lea.vmem %s0, %s137
      $region24: #{basic_block_forward.4} parent=19 // pred_fallthru
        _
    $region20: #{basic_block_forward.4} parent=5 // pred_fallthru
      _
    %p139 = scmp.le.s32.totalorder 1, %s10
    %p140 = scmp.lt.s32.totalorder %s10, 3
    %p141 = pnand %p139, %p140
    %p142 = pneg %p141
    // Predicated region
    $region25: #{basic_block_forward.4} parent=5 // pred_check
      _
    $region26: #{basic_block_forward.4} parent=5 // pred_check_branch
      %144 = sbr.rel (%p141) target = $region28
    $region27: #{basic_block_forward.4} parent=5 // pred_region
      %s145 = ssub.s32 %s10, 1
      %p146 = scmp.lt.s32.totalorder %s15, 1
      %s147 = scalar_select %p146, %s15, 1
      %s148 = smul.addr %s147, 72
      %s149 = smul.addr %s148, 4
      %s150 = scalar_lea.vmem %s0, %s149
      %p151 = pneg %p36
      %p152 = pneg %p33
      %p153 = pneg %p57
      %p154 = pneg %p54
      %p155 = pneg %p83
      %p156 = pneg %p80
      %p157 = scmp.lt.s32.totalorder %s15, 1
      %s158 = scalar_select %p157, %s15, 1
      %s159 = smul.addr %s158, 12
      %s160 = smul.addr %s159, 4
      %s161 = scalar_lea.vmem %s2, %s160
      %p162 = pneg %p109
      %p163 = pneg %p106
      %p164 = scmp.lt.s32.totalorder %s15, 1
      %s165 = scalar_select %p164, %s15, 1
      %s166 = smul.addr %s165, 2
      %s167 = scalar_lea.vmem %s3, %s166
      %p168 = scmp.lt.s32.totalorder %s15, 1
      %s169 = scalar_select %p168, %s15, 1
      %s170 = smul.addr %s169, 72
      %s171 = smul.addr %s170, 4
      %s172 = scalar_lea.vmem %s0, %s171
      %p173 = scmp.lt.s32.totalorder %s15, 1
      %s174 = scalar_select %p173, %s15, 1
      %s175 = smul.addr %s174, 12
      %s176 = smul.addr %s175, 4
      %s177 = scalar_lea.vmem %s2, %s176
      %p178 = scmp.lt.s32.totalorder %s15, 1
      %s179 = scalar_select %p178, %s15, 1
      %s180 = smul.addr %s179, 2
      %s181 = scalar_lea.vmem %s3, %s180
      %v183 = vld [vmem:[%s172] sm:$0xff]
      %v184 = vld [vmem:[%s172 + $0x8] sm:$0xff]
      %v185 = vld [vmem:[%s172 + $0x10] sm:$0xff]
      %v186 = vld [vmem:[%s172 + $0x18] sm:$0xff]
      %v187 = vld [vmem:[%s172 + $0x20] sm:$0xf]
      %v188 = vld [vmem:[%s172 + $0x24] sm:$0xff]
      %v189 = vld [vmem:[%s172 + $0x2c] sm:$0xff]
      %v190 = vld [vmem:[%s172 + $0x34] sm:$0xff]
      %v191 = vld [vmem:[%s172 + $0x3c] sm:$0xff]
      %v192 = vld [vmem:[%s172 + $0x44] sm:$0xf]
      %v193 = vld [vmem:[%s172 + $0x48] sm:$0xff]
      %v194 = vld [vmem:[%s172 + $0x50] sm:$0xff]
      %v195 = vld [vmem:[%s172 + $0x58] sm:$0xff]
      %v196 = vld [vmem:[%s172 + $0x60] sm:$0xff]
      %v197 = vld [vmem:[%s172 + $0x68] sm:$0xf]
      %v198 = vld [vmem:[%s172 + $0x6c] sm:$0xff]
      %v199 = vld [vmem:[%s172 + $0x74] sm:$0xff]
      %v200 = vld [vmem:[%s172 + $0x7c] sm:$0xff]
      %v201 = vld [vmem:[%s172 + $0x84] sm:$0xff]
      %v202 = vld [vmem:[%s172 + $0x8c] sm:$0xf]
      %v203 = vld [vmem:[%s172 + $0x90] sm:$0xff]
      %v204 = vld [vmem:[%s172 + $0x98] sm:$0xff]
      %v205 = vld [vmem:[%s172 + $0xa0] sm:$0xff]
      %v206 = vld [vmem:[%s172 + $0xa8] sm:$0xff]
      %v207 = vld [vmem:[%s172 + $0xb0] sm:$0xf]
      %v208 = vld [vmem:[%s172 + $0xb4] sm:$0xff]
      %v209 = vld [vmem:[%s172 + $0xbc] sm:$0xff]
      %v210 = vld [vmem:[%s172 + $0xc4] sm:$0xff]
      %v211 = vld [vmem:[%s172 + $0xcc] sm:$0xff]
      %v212 = vld [vmem:[%s172 + $0xd4] sm:$0xf]
      %v213 = vld [vmem:[%s172 + $0xd8] sm:$0xff]
      %v214 = vld [vmem:[%s172 + $0xe0] sm:$0xff]
      %v215 = vld [vmem:[%s172 + $0xe8] sm:$0xff]
      %v216 = vld [vmem:[%s172 + $0xf0] sm:$0xff]
      %v217 = vld [vmem:[%s172 + $0xf8] sm:$0xf]
      %v218 = vld [vmem:[%s172 + $0xfc] sm:$0xff]
      %v219 = vld [vmem:[%s172 + $0x104] sm:$0xff]
      %v220 = vld [vmem:[%s172 + $0x10c] sm:$0xff]
      %v221 = vld [vmem:[%s172 + $0x114] sm:$0xff]
      %v222 = vld [vmem:[%s172 + $0x11c] sm:$0xf]
      %v223 = vld [vmem:[%s1] sm:$0xf]
      %v224 = vld [vmem:[%s1 + $0x4] sm:$0xf]
      %v225 = vld [vmem:[%s1 + $0x8] sm:$0xf]
      %v226 = vld [vmem:[%s1 + $0xc] sm:$0xf]
      %v227 = vld [vmem:[%s1 + $0x10] sm:$0xf]
      %v228 = vld [vmem:[%s1 + $0x14] sm:$0xf]
      %v229 = vld [vmem:[%s1 + $0x18] sm:$0xf]
      %v230 = vld [vmem:[%s1 + $0x1c] sm:$0xf]
      %v231 = vld [vmem:[%s1 + $0x20] sm:$0xf]
      %v232 = vld [vmem:[%s1 + $0x24] sm:$0xf]
      %v233 = vld [vmem:[%s1 + $0x28] sm:$0xf]
      %v234 = vld [vmem:[%s1 + $0x2c] sm:$0xf]
      %v235 = vld [vmem:[%s1 + $0x30] sm:$0xf]
      %v236 = vld [vmem:[%s1 + $0x34] sm:$0xf]
      %v237 = vld [vmem:[%s1 + $0x38] sm:$0xf]
      %v238 = vld [vmem:[%s1 + $0x3c] sm:$0xf]
      %v239 = vld [vmem:[%s1 + $0x40] sm:$0xf]
      %v240 = vld [vmem:[%s1 + $0x44] sm:$0xf]
      %v241 = vld [vmem:[%s1 + $0x48] sm:$0xf]
      %v242 = vld [vmem:[%s1 + $0x4c] sm:$0xf]
      %v243 = vld [vmem:[%s1 + $0x50] sm:$0xf]
      %v244 = vld [vmem:[%s1 + $0x54] sm:$0xf]
      %v245 = vld [vmem:[%s1 + $0x58] sm:$0xf]
      %v246 = vld [vmem:[%s1 + $0x5c] sm:$0xf]
      %v247 = vld [vmem:[%s1 + $0x60] sm:$0xf]
      %v248 = vld [vmem:[%s1 + $0x64] sm:$0xf]
      %v249 = vld [vmem:[%s1 + $0x68] sm:$0xf]
      %v250 = vld [vmem:[%s1 + $0x6c] sm:$0xf]
      %v251 = vld [vmem:[%s1 + $0x70] sm:$0xf]
      %v252 = vld [vmem:[%s1 + $0x74] sm:$0xf]
      %v253 = vld [vmem:[%s1 + $0x78] sm:$0xf]
      %v254 = vld [vmem:[%s1 + $0x7c] sm:$0xf]
      %v255 = vld [vmem:[%s1 + $0x80] sm:$0xf]
      %v256 = vld [vmem:[%s1 + $0x84] sm:$0xf]
      %v257 = vld [vmem:[%s1 + $0x88] sm:$0xf]
      %v258 = vld [vmem:[%s1 + $0x8c] sm:$0xf]
      %v259 = vld [vmem:[%s1 + $0x90] sm:$0xf]
      %v260 = vld [vmem:[%s1 + $0x94] sm:$0xf]
      %v261 = vld [vmem:[%s1 + $0x98] sm:$0xf]
      %v262 = vld [vmem:[%s1 + $0x9c] sm:$0xf]
      %v263 = vld [vmem:[%s1 + $0xa0] sm:$0xf]
      %v264 = vld [vmem:[%s1 + $0xa4] sm:$0xf]
      %v265 = vld [vmem:[%s1 + $0xa8] sm:$0xf]
      %v266 = vld [vmem:[%s1 + $0xac] sm:$0xf]
      %v267 = vld [vmem:[%s1 + $0xb0] sm:$0xf]
      %v268 = vld [vmem:[%s1 + $0xb4] sm:$0xf]
      %v269 = vld [vmem:[%s1 + $0xb8] sm:$0xf]
      %v270 = vld [vmem:[%s1 + $0xbc] sm:$0xf]
      %v271 = vld [vmem:[%s1 + $0xc0] sm:$0xf]
      %v272 = vld [vmem:[%s1 + $0xc4] sm:$0xf]
      %v273 = vld [vmem:[%s1 + $0xc8] sm:$0xf]
      %v274 = vld [vmem:[%s1 + $0xcc] sm:$0xf]
      %v275 = vld [vmem:[%s1 + $0xd0] sm:$0xf]
      %v276 = vld [vmem:[%s1 + $0xd4] sm:$0xf]
      %v277 = vld [vmem:[%s1 + $0xd8] sm:$0xf]
      %v278 = vld [vmem:[%s1 + $0xdc] sm:$0xf]
      %v279 = vld [vmem:[%s1 + $0xe0] sm:$0xf]
      %v280 = vld [vmem:[%s1 + $0xe4] sm:$0xf]
      %v281 = vld [vmem:[%s1 + $0xe8] sm:$0xf]
      %v282 = vld [vmem:[%s1 + $0xec] sm:$0xf]
      %v283 = vld [vmem:[%s1 + $0xf0] sm:$0xf]
      %v284 = vld [vmem:[%s1 + $0xf4] sm:$0xf]
      %v285 = vld [vmem:[%s1 + $0xf8] sm:$0xf]
      %v286 = vld [vmem:[%s1 + $0xfc] sm:$0xf]
      %v287 = vld [vmem:[%s1 + $0x100] sm:$0xf]
      %v288 = vld [vmem:[%s1 + $0x104] sm:$0xf]
      %v289 = vld [vmem:[%s1 + $0x108] sm:$0xf]
      %v290 = vld [vmem:[%s1 + $0x10c] sm:$0xf]
      %v291 = vld [vmem:[%s1 + $0x110] sm:$0xf]
      %v292 = vld [vmem:[%s1 + $0x114] sm:$0xf]
      %v293 = vld [vmem:[%s1 + $0x118] sm:$0xf]
      %v294 = vld [vmem:[%s1 + $0x11c] sm:$0xf]
      %v295 = vld [vmem:[%s1 + $0x120] sm:$0xf]
      %v296 = vld [vmem:[%s1 + $0x124] sm:$0xf]
      %v297 = vld [vmem:[%s1 + $0x128] sm:$0xf]
      %v298 = vld [vmem:[%s1 + $0x12c] sm:$0xf]
      %v299 = vld [vmem:[%s1 + $0x130] sm:$0xf]
      %v300 = vld [vmem:[%s1 + $0x134] sm:$0xf]
      %v301 = vld [vmem:[%s1 + $0x138] sm:$0xf]
      %v302 = vld [vmem:[%s1 + $0x13c] sm:$0xf]
      %v303 = vld [vmem:[%s1 + $0x140] sm:$0xf]
      %v304 = vld [vmem:[%s1 + $0x144] sm:$0xf]
      %v305 = vld [vmem:[%s1 + $0x148] sm:$0xf]
      %v306 = vld [vmem:[%s1 + $0x14c] sm:$0xf]
      %v307 = vld [vmem:[%s1 + $0x150] sm:$0xf]
      %v308 = vld [vmem:[%s1 + $0x154] sm:$0xf]
      %v309 = vld [vmem:[%s1 + $0x158] sm:$0xf]
      %v310 = vld [vmem:[%s1 + $0x15c] sm:$0xf]
      %v311 = vld [vmem:[%s1 + $0x160] sm:$0xf]
      %v312 = vld [vmem:[%s1 + $0x164] sm:$0xf]
      %v313 = vld [vmem:[%s1 + $0x168] sm:$0xf]
      %v314 = vld [vmem:[%s1 + $0x16c] sm:$0xf]
      %v315 = vld [vmem:[%s1 + $0x170] sm:$0xf]
      %v316 = vld [vmem:[%s1 + $0x174] sm:$0xf]
      %v317 = vld [vmem:[%s1 + $0x178] sm:$0xf]
      %v318 = vld [vmem:[%s1 + $0x17c] sm:$0xf]
      %v319 = vld [vmem:[%s1 + $0x180] sm:$0xf]
      %v320 = vld [vmem:[%s1 + $0x184] sm:$0xf]
      %v321 = vld [vmem:[%s1 + $0x188] sm:$0xf]
      %v322 = vld [vmem:[%s1 + $0x18c] sm:$0xf]
      %v323 = vld [vmem:[%s1 + $0x190] sm:$0xf]
      %v324 = vld [vmem:[%s1 + $0x194] sm:$0xf]
      %v325 = vld [vmem:[%s1 + $0x198] sm:$0xf]
      %v326 = vld [vmem:[%s1 + $0x19c] sm:$0xf]
      %v327 = vld [vmem:[%s1 + $0x1a0] sm:$0xf]
      %v328 = vld [vmem:[%s1 + $0x1a4] sm:$0xf]
      %v329 = vld [vmem:[%s1 + $0x1a8] sm:$0xf]
      %v330 = vld [vmem:[%s1 + $0x1ac] sm:$0xf]
      %v331 = vld [vmem:[%s1 + $0x1b0] sm:$0xf]
      %v332 = vld [vmem:[%s1 + $0x1b4] sm:$0xf]
      %v333 = vld [vmem:[%s1 + $0x1b8] sm:$0xf]
      %v334 = vld [vmem:[%s1 + $0x1bc] sm:$0xf]
      %v335 = vld [vmem:[%s1 + $0x1c0] sm:$0xf]
      %v336 = vld [vmem:[%s1 + $0x1c4] sm:$0xf]
      %v337 = vld [vmem:[%s1 + $0x1c8] sm:$0xf]
      %v338 = vld [vmem:[%s1 + $0x1cc] sm:$0xf]
      %v339 = vld [vmem:[%s1 + $0x1d0] sm:$0xf]
      %v340 = vld [vmem:[%s1 + $0x1d4] sm:$0xf]
      %v341 = vld [vmem:[%s1 + $0x1d8] sm:$0xf]
      %v342 = vld [vmem:[%s1 + $0x1dc] sm:$0xf]
      %v343 = vld [vmem:[%s1 + $0x1e0] sm:$0xf]
      %v344 = vld [vmem:[%s1 + $0x1e4] sm:$0xf]
      %v345 = vld [vmem:[%s1 + $0x1e8] sm:$0xf]
      %v346 = vld [vmem:[%s1 + $0x1ec] sm:$0xf]
      %v347 = vld [vmem:[%s1 + $0x1f0] sm:$0xf]
      %v348 = vld [vmem:[%s1 + $0x1f4] sm:$0xf]
      %v349 = vld [vmem:[%s1 + $0x1f8] sm:$0xf]
      %v350 = vld [vmem:[%s1 + $0x1fc] sm:$0xf]
      %v351 = vld [vmem:[%s1 + $0x200] sm:$0xf]
      %v352 = vld [vmem:[%s1 + $0x204] sm:$0xf]
      %v353 = vld [vmem:[%s1 + $0x208] sm:$0xf]
      %v354 = vld [vmem:[%s1 + $0x20c] sm:$0xf]
      %v355 = vld [vmem:[%s1 + $0x210] sm:$0xf]
      %v356 = vld [vmem:[%s1 + $0x214] sm:$0xf]
      %v357 = vld [vmem:[%s1 + $0x218] sm:$0xf]
      %v358 = vld [vmem:[%s1 + $0x21c] sm:$0xf]
      %v359 = vld [vmem:[%s1 + $0x220] sm:$0xf]
      %v360 = vld [vmem:[%s1 + $0x224] sm:$0xf]
      %v361 = vld [vmem:[%s1 + $0x228] sm:$0xf]
      %v362 = vld [vmem:[%s1 + $0x22c] sm:$0xf]
      %v363 = vld [vmem:[%s1 + $0x230] sm:$0xf]
      %v364 = vld [vmem:[%s1 + $0x234] sm:$0xf]
      %v365 = vld [vmem:[%s1 + $0x238] sm:$0xf]
      %v366 = vld [vmem:[%s1 + $0x23c] sm:$0xf]
      %v407 = vunpack.c.l.b16 %v183
      %v408 = vunpack.c.h.b16 %v183
      %v409 = vunpack.c.l.b16 %v184
      %v410 = vunpack.c.h.b16 %v184
      %v411 = vunpack.c.l.b16 %v185
      %v412 = vunpack.c.h.b16 %v185
      %v413 = vunpack.c.l.b16 %v186
      %v414 = vunpack.c.h.b16 %v186
      %v415 = vunpack.c.l.b16 %v187
      %v416 = vunpack.c.l.b16 %v188
      %v417 = vunpack.c.h.b16 %v188
      %v418 = vunpack.c.l.b16 %v189
      %v419 = vunpack.c.h.b16 %v189
      %v420 = vunpack.c.l.b16 %v190
      %v421 = vunpack.c.h.b16 %v190
      %v422 = vunpack.c.l.b16 %v191
      %v423 = vunpack.c.h.b16 %v191
      %v424 = vunpack.c.l.b16 %v192
      %v425 = vunpack.c.l.b16 %v193
      %v426 = vunpack.c.h.b16 %v193
      %v427 = vunpack.c.l.b16 %v194
      %v428 = vunpack.c.h.b16 %v194
      %v429 = vunpack.c.l.b16 %v195
      %v430 = vunpack.c.h.b16 %v195
      %v431 = vunpack.c.l.b16 %v196
      %v432 = vunpack.c.h.b16 %v196
      %v433 = vunpack.c.l.b16 %v197
      %v434 = vunpack.c.l.b16 %v198
      %v435 = vunpack.c.h.b16 %v198
      %v436 = vunpack.c.l.b16 %v199
      %v437 = vunpack.c.h.b16 %v199
      %v438 = vunpack.c.l.b16 %v200
      %v439 = vunpack.c.h.b16 %v200
      %v440 = vunpack.c.l.b16 %v201
      %v441 = vunpack.c.h.b16 %v201
      %v442 = vunpack.c.l.b16 %v202
      %v443 = vunpack.c.l.b16 %v203
      %v444 = vunpack.c.h.b16 %v203
      %v445 = vunpack.c.l.b16 %v204
      %v446 = vunpack.c.h.b16 %v204
      %v447 = vunpack.c.l.b16 %v205
      %v448 = vunpack.c.h.b16 %v205
      %v449 = vunpack.c.l.b16 %v206
      %v450 = vunpack.c.h.b16 %v206
      %v451 = vunpack.c.l.b16 %v207
      %v452 = vunpack.c.l.b16 %v208
      %v453 = vunpack.c.h.b16 %v208
      %v454 = vunpack.c.l.b16 %v209
      %v455 = vunpack.c.h.b16 %v209
      %v456 = vunpack.c.l.b16 %v210
      %v457 = vunpack.c.h.b16 %v210
      %v458 = vunpack.c.l.b16 %v211
      %v459 = vunpack.c.h.b16 %v211
      %v460 = vunpack.c.l.b16 %v212
      %v461 = vunpack.c.l.b16 %v213
      %v462 = vunpack.c.h.b16 %v213
      %v463 = vunpack.c.l.b16 %v214
      %v464 = vunpack.c.h.b16 %v214
      %v465 = vunpack.c.l.b16 %v215
      %v466 = vunpack.c.h.b16 %v215
      %v467 = vunpack.c.l.b16 %v216
      %v468 = vunpack.c.h.b16 %v216
      %v469 = vunpack.c.l.b16 %v217
      %v470 = vunpack.c.l.b16 %v218
      %v471 = vunpack.c.h.b16 %v218
      %v472 = vunpack.c.l.b16 %v219
      %v473 = vunpack.c.h.b16 %v219
      %v474 = vunpack.c.l.b16 %v220
      %v475 = vunpack.c.h.b16 %v220
      %v476 = vunpack.c.l.b16 %v221
      %v477 = vunpack.c.h.b16 %v221
      %v478 = vunpack.c.l.b16 %v222
      %v479 = vpack.c.b16 %v416, %v407
      %v480 = vpack.c.b16 %v417, %v408
      %v481 = vpack.c.b16 %v418, %v409
      %v482 = vpack.c.b16 %v419, %v410
      %v483 = vpack.c.b16 %v420, %v411
      %v484 = vpack.c.b16 %v421, %v412
      %v485 = vpack.c.b16 %v422, %v413
      %v486 = vpack.c.b16 %v423, %v414
      %v487 = vpack.c.b16 %v424, %v415
      %v488 = vpack.c.b16 %v434, %v425
      %v489 = vpack.c.b16 %v435, %v426
      %v490 = vpack.c.b16 %v436, %v427
      %v491 = vpack.c.b16 %v437, %v428
      %v492 = vpack.c.b16 %v438, %v429
      %v493 = vpack.c.b16 %v439, %v430
      %v494 = vpack.c.b16 %v440, %v431
      %v495 = vpack.c.b16 %v441, %v432
      %v496 = vpack.c.b16 %v442, %v433
      %v497 = vpack.c.b16 %v452, %v443
      %v498 = vpack.c.b16 %v453, %v444
      %v499 = vpack.c.b16 %v454, %v445
      %v500 = vpack.c.b16 %v455, %v446
      %v501 = vpack.c.b16 %v456, %v447
      %v502 = vpack.c.b16 %v457, %v448
      %v503 = vpack.c.b16 %v458, %v449
      %v504 = vpack.c.b16 %v459, %v450
      %v505 = vpack.c.b16 %v460, %v451
      %v506 = vpack.c.b16 %v470, %v461
      %v507 = vpack.c.b16 %v471, %v462
      %v508 = vpack.c.b16 %v472, %v463
      %v509 = vpack.c.b16 %v473, %v464
      %v510 = vpack.c.b16 %v474, %v465
      %v511 = vpack.c.b16 %v475, %v466
      %v512 = vpack.c.b16 %v476, %v467
      %v513 = vpack.c.b16 %v477, %v468
      %v514 = vpack.c.b16 %v478, %v469
      %v695 = vunpack.c.l.b16 %v223
      %v696 = vunpack.c.l.b16 %v224
      %v697 = vunpack.c.l.b16 %v225
      %v698 = vunpack.c.l.b16 %v226
      %v699 = vunpack.c.l.b16 %v227
      %v700 = vunpack.c.l.b16 %v228
      %v701 = vunpack.c.l.b16 %v229
      %v702 = vunpack.c.l.b16 %v230
      %v703 = vunpack.c.l.b16 %v231
      %v704 = vunpack.c.l.b16 %v232
      %v705 = vunpack.c.l.b16 %v233
      %v706 = vunpack.c.l.b16 %v234
      %v707 = vunpack.c.l.b16 %v235
      %v708 = vunpack.c.l.b16 %v236
      %v709 = vunpack.c.l.b16 %v237
      %v710 = vunpack.c.l.b16 %v238
      %v711 = vunpack.c.l.b16 %v239
      %v712 = vunpack.c.l.b16 %v240
      %v713 = vunpack.c.l.b16 %v241
      %v714 = vunpack.c.l.b16 %v242
      %v715 = vunpack.c.l.b16 %v243
      %v716 = vunpack.c.l.b16 %v244
      %v717 = vunpack.c.l.b16 %v245
      %v718 = vunpack.c.l.b16 %v246
      %v719 = vunpack.c.l.b16 %v247
      %v720 = vunpack.c.l.b16 %v248
      %v721 = vunpack.c.l.b16 %v249
      %v722 = vunpack.c.l.b16 %v250
      %v723 = vunpack.c.l.b16 %v251
      %v724 = vunpack.c.l.b16 %v252
      %v725 = vunpack.c.l.b16 %v253
      %v726 = vunpack.c.l.b16 %v254
      %v727 = vunpack.c.l.b16 %v255
      %v728 = vunpack.c.l.b16 %v256
      %v729 = vunpack.c.l.b16 %v257
      %v730 = vunpack.c.l.b16 %v258
      %v731 = vunpack.c.l.b16 %v259
      %v732 = vunpack.c.l.b16 %v260
      %v733 = vunpack.c.l.b16 %v261
      %v734 = vunpack.c.l.b16 %v262
      %v735 = vunpack.c.l.b16 %v263
      %v736 = vunpack.c.l.b16 %v264
      %v737 = vunpack.c.l.b16 %v265
      %v738 = vunpack.c.l.b16 %v266
      %v739 = vunpack.c.l.b16 %v267
      %v740 = vunpack.c.l.b16 %v268
      %v741 = vunpack.c.l.b16 %v269
      %v742 = vunpack.c.l.b16 %v270
      %v743 = vunpack.c.l.b16 %v271
      %v744 = vunpack.c.l.b16 %v272
      %v745 = vunpack.c.l.b16 %v273
      %v746 = vunpack.c.l.b16 %v274
      %v747 = vunpack.c.l.b16 %v275
      %v748 = vunpack.c.l.b16 %v276
      %v749 = vunpack.c.l.b16 %v277
      %v750 = vunpack.c.l.b16 %v278
      %v751 = vunpack.c.l.b16 %v279
      %v752 = vunpack.c.l.b16 %v280
      %v753 = vunpack.c.l.b16 %v281
      %v754 = vunpack.c.l.b16 %v282
      %v755 = vunpack.c.l.b16 %v283
      %v756 = vunpack.c.l.b16 %v284
      %v757 = vunpack.c.l.b16 %v285
      %v758 = vunpack.c.l.b16 %v286
      %v759 = vunpack.c.l.b16 %v287
      %v760 = vunpack.c.l.b16 %v288
      %v761 = vunpack.c.l.b16 %v289
      %v762 = vunpack.c.l.b16 %v290
      %v763 = vunpack.c.l.b16 %v291
      %v764 = vunpack.c.l.b16 %v292
      %v765 = vunpack.c.l.b16 %v293
      %v766 = vunpack.c.l.b16 %v294
      %v767 = vunpack.c.l.b16 %v295
      %v768 = vunpack.c.l.b16 %v296
      %v769 = vunpack.c.l.b16 %v297
      %v770 = vunpack.c.l.b16 %v298
      %v771 = vunpack.c.l.b16 %v299
      %v772 = vunpack.c.l.b16 %v300
      %v773 = vunpack.c.l.b16 %v301
      %v774 = vunpack.c.l.b16 %v302
      %v775 = vunpack.c.l.b16 %v303
      %v776 = vunpack.c.l.b16 %v304
      %v777 = vunpack.c.l.b16 %v305
      %v778 = vunpack.c.l.b16 %v306
      %v779 = vunpack.c.l.b16 %v307
      %v780 = vunpack.c.l.b16 %v308
      %v781 = vunpack.c.l.b16 %v309
      %v782 = vunpack.c.l.b16 %v310
      %v783 = vunpack.c.l.b16 %v311
      %v784 = vunpack.c.l.b16 %v312
      %v785 = vunpack.c.l.b16 %v313
      %v786 = vunpack.c.l.b16 %v314
      %v787 = vunpack.c.l.b16 %v315
      %v788 = vunpack.c.l.b16 %v316
      %v789 = vunpack.c.l.b16 %v317
      %v790 = vunpack.c.l.b16 %v318
      %v791 = vunpack.c.l.b16 %v319
      %v792 = vunpack.c.l.b16 %v320
      %v793 = vunpack.c.l.b16 %v321
      %v794 = vunpack.c.l.b16 %v322
      %v795 = vunpack.c.l.b16 %v323
      %v796 = vunpack.c.l.b16 %v324
      %v797 = vunpack.c.l.b16 %v325
      %v798 = vunpack.c.l.b16 %v326
      %v799 = vunpack.c.l.b16 %v327
      %v800 = vunpack.c.l.b16 %v328
      %v801 = vunpack.c.l.b16 %v329
      %v802 = vunpack.c.l.b16 %v330
      %v803 = vunpack.c.l.b16 %v331
      %v804 = vunpack.c.l.b16 %v332
      %v805 = vunpack.c.l.b16 %v333
      %v806 = vunpack.c.l.b16 %v334
      %v807 = vunpack.c.l.b16 %v335
      %v808 = vunpack.c.l.b16 %v336
      %v809 = vunpack.c.l.b16 %v337
      %v810 = vunpack.c.l.b16 %v338
      %v811 = vunpack.c.l.b16 %v339
      %v812 = vunpack.c.l.b16 %v340
      %v813 = vunpack.c.l.b16 %v341
      %v814 = vunpack.c.l.b16 %v342
      %v815 = vunpack.c.l.b16 %v343
      %v816 = vunpack.c.l.b16 %v344
      %v817 = vunpack.c.l.b16 %v345
      %v818 = vunpack.c.l.b16 %v346
      %v819 = vunpack.c.l.b16 %v347
      %v820 = vunpack.c.l.b16 %v348
      %v821 = vunpack.c.l.b16 %v349
      %v822 = vunpack.c.l.b16 %v350
      %v823 = vunpack.c.l.b16 %v351
      %v824 = vunpack.c.l.b16 %v352
      %v825 = vunpack.c.l.b16 %v353
      %v826 = vunpack.c.l.b16 %v354
      %v827 = vunpack.c.l.b16 %v355
      %v828 = vunpack.c.l.b16 %v356
      %v829 = vunpack.c.l.b16 %v357
      %v830 = vunpack.c.l.b16 %v358
      %v831 = vunpack.c.l.b16 %v359
      %v832 = vunpack.c.l.b16 %v360
      %v833 = vunpack.c.l.b16 %v361
      %v834 = vunpack.c.l.b16 %v362
      %v835 = vunpack.c.l.b16 %v363
      %v836 = vunpack.c.l.b16 %v364
      %v837 = vunpack.c.l.b16 %v365
      %v838 = vunpack.c.l.b16 %v366
      %v839 = vpack.c.b16 %v696, %v695
      %v840 = vpack.c.b16 %v698, %v697
      %v841 = vpack.c.b16 %v700, %v699
      %v842 = vpack.c.b16 %v702, %v701
      %v843 = vpack.c.b16 %v704, %v703
      %v844 = vpack.c.b16 %v706, %v705
      %v845 = vpack.c.b16 %v708, %v707
      %v846 = vpack.c.b16 %v710, %v709
      %v847 = vpack.c.b16 %v712, %v711
      %v848 = vpack.c.b16 %v714, %v713
      %v849 = vpack.c.b16 %v716, %v715
      %v850 = vpack.c.b16 %v718, %v717
      %v851 = vpack.c.b16 %v720, %v719
      %v852 = vpack.c.b16 %v722, %v721
      %v853 = vpack.c.b16 %v724, %v723
      %v854 = vpack.c.b16 %v726, %v725
      %v855 = vpack.c.b16 %v728, %v727
      %v856 = vpack.c.b16 %v730, %v729
      %v857 = vpack.c.b16 %v732, %v731
      %v858 = vpack.c.b16 %v734, %v733
      %v859 = vpack.c.b16 %v736, %v735
      %v860 = vpack.c.b16 %v738, %v737
      %v861 = vpack.c.b16 %v740, %v739
      %v862 = vpack.c.b16 %v742, %v741
      %v863 = vpack.c.b16 %v744, %v743
      %v864 = vpack.c.b16 %v746, %v745
      %v865 = vpack.c.b16 %v748, %v747
      %v866 = vpack.c.b16 %v750, %v749
      %v867 = vpack.c.b16 %v752, %v751
      %v868 = vpack.c.b16 %v754, %v753
      %v869 = vpack.c.b16 %v756, %v755
      %v870 = vpack.c.b16 %v758, %v757
      %v871 = vpack.c.b16 %v760, %v759
      %v872 = vpack.c.b16 %v762, %v761
      %v873 = vpack.c.b16 %v764, %v763
      %v874 = vpack.c.b16 %v766, %v765
      %v875 = vpack.c.b16 %v768, %v767
      %v876 = vpack.c.b16 %v770, %v769
      %v877 = vpack.c.b16 %v772, %v771
      %v878 = vpack.c.b16 %v774, %v773
      %v879 = vpack.c.b16 %v776, %v775
      %v880 = vpack.c.b16 %v778, %v777
      %v881 = vpack.c.b16 %v780, %v779
      %v882 = vpack.c.b16 %v782, %v781
      %v883 = vpack.c.b16 %v784, %v783
      %v884 = vpack.c.b16 %v786, %v785
      %v885 = vpack.c.b16 %v788, %v787
      %v886 = vpack.c.b16 %v790, %v789
      %v887 = vpack.c.b16 %v792, %v791
      %v888 = vpack.c.b16 %v794, %v793
      %v889 = vpack.c.b16 %v796, %v795
      %v890 = vpack.c.b16 %v798, %v797
      %v891 = vpack.c.b16 %v800, %v799
      %v892 = vpack.c.b16 %v802, %v801
      %v893 = vpack.c.b16 %v804, %v803
      %v894 = vpack.c.b16 %v806, %v805
      %v895 = vpack.c.b16 %v808, %v807
      %v896 = vpack.c.b16 %v810, %v809
      %v897 = vpack.c.b16 %v812, %v811
      %v898 = vpack.c.b16 %v814, %v813
      %v899 = vpack.c.b16 %v816, %v815
      %v900 = vpack.c.b16 %v818, %v817
      %v901 = vpack.c.b16 %v820, %v819
      %v902 = vpack.c.b16 %v822, %v821
      %v903 = vpack.c.b16 %v824, %v823
      %v904 = vpack.c.b16 %v826, %v825
      %v905 = vpack.c.b16 %v828, %v827
      %v906 = vpack.c.b16 %v830, %v829
      %v907 = vpack.c.b16 %v832, %v831
      %v908 = vpack.c.b16 %v834, %v833
      %v909 = vpack.c.b16 %v836, %v835
      %v910 = vpack.c.b16 %v838, %v837
      %983 = vmatprep.subr.bf16.mxu0 0
      %984 = vmatpush1.bf16.msra.mxu0 %v846
      %985 = vmatprep.subr.bf16.mxu0 0
      %986 = vmatpush1.bf16.msra.mxu0 %v845
      %987 = vmatprep.subr.bf16.mxu0 0
      %988 = vmatpush1.bf16.msra.mxu0 %v844
      %989 = vmatprep.subr.bf16.mxu0 0
      %990 = vmatpush1.bf16.msra.mxu0 %v843
      %991 = vmatprep.subr.bf16.mxu0 0
      %992 = vmatpush1.bf16.msra.mxu0 %v842
      %993 = vmatprep.subr.bf16.mxu0 0
      %994 = vmatpush1.bf16.msra.mxu0 %v841
      %995 = vmatprep.subr.bf16.mxu0 0
      %996 = vmatpush1.bf16.msra.mxu0 %v840
      %997 = vmatprep.subr.bf16.mxu0 0
      %998 = vmatpush1.bf16.msra.mxu0 %v839
      %999 = vmatprep.subr.bf16.mxu0 0
      %1000 = vmatpush2.bf16.msra.mxu0 %v854
      %1001 = vmatprep.subr.bf16.mxu0 0
      %1002 = vmatpush2.bf16.msra.mxu0 %v853
      %1003 = vmatprep.subr.bf16.mxu0 0
      %1004 = vmatpush2.bf16.msra.mxu0 %v852
      %1005 = vmatprep.subr.bf16.mxu0 0
      %1006 = vmatpush2.bf16.msra.mxu0 %v851
      %1007 = vmatprep.subr.bf16.mxu0 0
      %1008 = vmatpush2.bf16.msra.mxu0 %v850
      %1009 = vmatprep.subr.bf16.mxu0 0
      %1010 = vmatpush2.bf16.msra.mxu0 %v849
      %1011 = vmatprep.subr.bf16.mxu0 0
      %1012 = vmatpush2.bf16.msra.mxu0 %v848
      %1013 = vmatprep.subr.bf16.mxu0 0
      %1014 = vmatpush2.bf16.msra.mxu0 %v847
      %1015 = vmatprep.mubr.bf16.mxu0 %v480
      %1016 = vmatmul.mubr.bf16.gmra.mxu0 %v479
      %v1017 = vpop.f32.mrf.mxu0
      %v1018 = vadd.f32 0.0, %v1017
      %v1019 = vpop.f32.mrf.mxu0
      %v1020 = vpop.f32.mrf.mxu0
      %v1021 = vadd.f32 0.0, %v1020
      %v1022 = vpop.f32.mrf.mxu0
      %1023 = vmatprep.mubr.bf16.mxu0 %v489
      %1024 = vmatmul.mubr.bf16.gmra.mxu0 %v488
      %v1025 = vpop.f32.mrf.mxu0
      %v1026 = vadd.f32 0.0, %v1025
      %v1027 = vpop.f32.mrf.mxu0
      %v1028 = vpop.f32.mrf.mxu0
      %v1029 = vadd.f32 0.0, %v1028
      %v1030 = vpop.f32.mrf.mxu0
      %1031 = vmatprep.mubr.bf16.mxu0 %v498
      %1032 = vmatmul.mubr.bf16.gmra.mxu0 %v497
      %v1033 = vpop.f32.mrf.mxu0
      %v1034 = vadd.f32 0.0, %v1033
      %v1035 = vpop.f32.mrf.mxu0
      %v1036 = vpop.f32.mrf.mxu0
      %v1037 = vadd.f32 0.0, %v1036
      %v1038 = vpop.f32.mrf.mxu0
      %1039 = vmatprep.mubr.bf16.mxu0 %v507
      %1040 = vmatmul.mubr.bf16.gmra.mxu0 %v506
      %v1041 = vpop.f32.mrf.mxu0
      %v1042 = vadd.f32 0.0, %v1041
      %v1043 = vpop.f32.mrf.mxu0
      %v1044 = vpop.f32.mrf.mxu0
      %v1045 = vadd.f32 0.0, %v1044
      %v1046 = vpop.f32.mrf.mxu0
      %1047 = vdwg.mxu0
      %1048 = vmatprep.subr.bf16.mxu0 0
      %1049 = vmatpush1.bf16.msra.mxu0 %v862
      %1050 = vmatprep.subr.bf16.mxu0 0
      %1051 = vmatpush1.bf16.msra.mxu0 %v861
      %1052 = vmatprep.subr.bf16.mxu0 0
      %1053 = vmatpush1.bf16.msra.mxu0 %v860
      %1054 = vmatprep.subr.bf16.mxu0 0
      %1055 = vmatpush1.bf16.msra.mxu0 %v859
      %1056 = vmatprep.subr.bf16.mxu0 0
      %1057 = vmatpush1.bf16.msra.mxu0 %v858
      %1058 = vmatprep.subr.bf16.mxu0 0
      %1059 = vmatpush1.bf16.msra.mxu0 %v857
      %1060 = vmatprep.subr.bf16.mxu0 0
      %1061 = vmatpush1.bf16.msra.mxu0 %v856
      %1062 = vmatprep.subr.bf16.mxu0 0
      %1063 = vmatpush1.bf16.msra.mxu0 %v855
      %1064 = vmatprep.subr.bf16.mxu0 0
      %1065 = vmatpush2.bf16.msra.mxu0 %v870
      %1066 = vmatprep.subr.bf16.mxu0 0
      %1067 = vmatpush2.bf16.msra.mxu0 %v869
      %1068 = vmatprep.subr.bf16.mxu0 0
      %1069 = vmatpush2.bf16.msra.mxu0 %v868
      %1070 = vmatprep.subr.bf16.mxu0 0
      %1071 = vmatpush2.bf16.msra.mxu0 %v867
      %1072 = vmatprep.subr.bf16.mxu0 0
      %1073 = vmatpush2.bf16.msra.mxu0 %v866
      %1074 = vmatprep.subr.bf16.mxu0 0
      %1075 = vmatpush2.bf16.msra.mxu0 %v865
      %1076 = vmatprep.subr.bf16.mxu0 0
      %1077 = vmatpush2.bf16.msra.mxu0 %v864
      %1078 = vmatprep.subr.bf16.mxu0 0
      %1079 = vmatpush2.bf16.msra.mxu0 %v863
      %1080 = vmatprep.mubr.bf16.mxu0 %v482
      %1081 = vmatmul.mubr.bf16.gmra.mxu0 %v481
      %v1082 = vpop.f32.mrf.mxu0
      %v1083 = vadd.f32 %v1018, %v1082
      %v1084 = vpop.f32.mrf.mxu0
      %v1085 = vpop.f32.mrf.mxu0
      %v1086 = vadd.f32 %v1021, %v1085
      %v1087 = vpop.f32.mrf.mxu0
      %1088 = vmatprep.mubr.bf16.mxu0 %v491
      %1089 = vmatmul.mubr.bf16.gmra.mxu0 %v490
      %v1090 = vpop.f32.mrf.mxu0
      %v1091 = vadd.f32 %v1026, %v1090
      %v1092 = vpop.f32.mrf.mxu0
      %v1093 = vpop.f32.mrf.mxu0
      %v1094 = vadd.f32 %v1029, %v1093
      %v1095 = vpop.f32.mrf.mxu0
      %1096 = vmatprep.mubr.bf16.mxu0 %v500
      %1097 = vmatmul.mubr.bf16.gmra.mxu0 %v499
      %v1098 = vpop.f32.mrf.mxu0
      %v1099 = vadd.f32 %v1034, %v1098
      %v1100 = vpop.f32.mrf.mxu0
      %v1101 = vpop.f32.mrf.mxu0
      %v1102 = vadd.f32 %v1037, %v1101
      %v1103 = vpop.f32.mrf.mxu0
      %1104 = vmatprep.mubr.bf16.mxu0 %v509
      %1105 = vmatmul.mubr.bf16.gmra.mxu0 %v508
      %v1106 = vpop.f32.mrf.mxu0
      %v1107 = vadd.f32 %v1042, %v1106
      %v1108 = vpop.f32.mrf.mxu0
      %v1109 = vpop.f32.mrf.mxu0
      %v1110 = vadd.f32 %v1045, %v1109
      %v1111 = vpop.f32.mrf.mxu0
      %1112 = vdwg.mxu0
      %1113 = vmatprep.subr.bf16.mxu0 0
      %1114 = vmatpush1.bf16.msra.mxu0 %v878
      %1115 = vmatprep.subr.bf16.mxu0 0
      %1116 = vmatpush1.bf16.msra.mxu0 %v877
      %1117 = vmatprep.subr.bf16.mxu0 0
      %1118 = vmatpush1.bf16.msra.mxu0 %v876
      %1119 = vmatprep.subr.bf16.mxu0 0
      %1120 = vmatpush1.bf16.msra.mxu0 %v875
      %1121 = vmatprep.subr.bf16.mxu0 0
      %1122 = vmatpush1.bf16.msra.mxu0 %v874
      %1123 = vmatprep.subr.bf16.mxu0 0
      %1124 = vmatpush1.bf16.msra.mxu0 %v873
      %1125 = vmatprep.subr.bf16.mxu0 0
      %1126 = vmatpush1.bf16.msra.mxu0 %v872
      %1127 = vmatprep.subr.bf16.mxu0 0
      %1128 = vmatpush1.bf16.msra.mxu0 %v871
      %1129 = vmatprep.subr.bf16.mxu0 0
      %1130 = vmatpush2.bf16.msra.mxu0 %v886
      %1131 = vmatprep.subr.bf16.mxu0 0
      %1132 = vmatpush2.bf16.msra.mxu0 %v885
      %1133 = vmatprep.subr.bf16.mxu0 0
      %1134 = vmatpush2.bf16.msra.mxu0 %v884
      %1135 = vmatprep.subr.bf16.mxu0 0
      %1136 = vmatpush2.bf16.msra.mxu0 %v883
      %1137 = vmatprep.subr.bf16.mxu0 0
      %1138 = vmatpush2.bf16.msra.mxu0 %v882
      %1139 = vmatprep.subr.bf16.mxu0 0
      %1140 = vmatpush2.bf16.msra.mxu0 %v881
      %1141 = vmatprep.subr.bf16.mxu0 0
      %1142 = vmatpush2.bf16.msra.mxu0 %v880
      %1143 = vmatprep.subr.bf16.mxu0 0
      %1144 = vmatpush2.bf16.msra.mxu0 %v879
      %1145 = vmatprep.mubr.bf16.mxu0 %v484
      %1146 = vmatmul.mubr.bf16.gmra.mxu0 %v483
      %v1147 = vpop.f32.mrf.mxu0
      %v1148 = vadd.f32 %v1083, %v1147
      %v1149 = vpop.f32.mrf.mxu0
      %v1150 = vpop.f32.mrf.mxu0
      %v1151 = vadd.f32 %v1086, %v1150
      %v1152 = vpop.f32.mrf.mxu0
      %1153 = vmatprep.mubr.bf16.mxu0 %v493
      %1154 = vmatmul.mubr.bf16.gmra.mxu0 %v492
      %v1155 = vpop.f32.mrf.mxu0
      %v1156 = vadd.f32 %v1091, %v1155
      %v1157 = vpop.f32.mrf.mxu0
      %v1158 = vpop.f32.mrf.mxu0
      %v1159 = vadd.f32 %v1094, %v1158
      %v1160 = vpop.f32.mrf.mxu0
      %1161 = vmatprep.mubr.bf16.mxu0 %v502
      %1162 = vmatmul.mubr.bf16.gmra.mxu0 %v501
      %v1163 = vpop.f32.mrf.mxu0
      %v1164 = vadd.f32 %v1099, %v1163
      %v1165 = vpop.f32.mrf.mxu0
      %v1166 = vpop.f32.mrf.mxu0
      %v1167 = vadd.f32 %v1102, %v1166
      %v1168 = vpop.f32.mrf.mxu0
      %1169 = vmatprep.mubr.bf16.mxu0 %v511
      %1170 = vmatmul.mubr.bf16.gmra.mxu0 %v510
      %v1171 = vpop.f32.mrf.mxu0
      %v1172 = vadd.f32 %v1107, %v1171
      %v1173 = vpop.f32.mrf.mxu0
      %v1174 = vpop.f32.mrf.mxu0
      %v1175 = vadd.f32 %v1110, %v1174
      %v1176 = vpop.f32.mrf.mxu0
      %1177 = vdwg.mxu0
      %1178 = vmatprep.subr.bf16.mxu0 0
      %1179 = vmatpush1.bf16.msra.mxu0 %v894
      %1180 = vmatprep.subr.bf16.mxu0 0
      %1181 = vmatpush1.bf16.msra.mxu0 %v893
      %1182 = vmatprep.subr.bf16.mxu0 0
      %1183 = vmatpush1.bf16.msra.mxu0 %v892
      %1184 = vmatprep.subr.bf16.mxu0 0
      %1185 = vmatpush1.bf16.msra.mxu0 %v891
      %1186 = vmatprep.subr.bf16.mxu0 0
      %1187 = vmatpush1.bf16.msra.mxu0 %v890
      %1188 = vmatprep.subr.bf16.mxu0 0
      %1189 = vmatpush1.bf16.msra.mxu0 %v889
      %1190 = vmatprep.subr.bf16.mxu0 0
      %1191 = vmatpush1.bf16.msra.mxu0 %v888
      %1192 = vmatprep.subr.bf16.mxu0 0
      %1193 = vmatpush1.bf16.msra.mxu0 %v887
      %1194 = vmatprep.subr.bf16.mxu0 0
      %1195 = vmatpush2.bf16.msra.mxu0 %v902
      %1196 = vmatprep.subr.bf16.mxu0 0
      %1197 = vmatpush2.bf16.msra.mxu0 %v901
      %1198 = vmatprep.subr.bf16.mxu0 0
      %1199 = vmatpush2.bf16.msra.mxu0 %v900
      %1200 = vmatprep.subr.bf16.mxu0 0
      %1201 = vmatpush2.bf16.msra.mxu0 %v899
      %1202 = vmatprep.subr.bf16.mxu0 0
      %1203 = vmatpush2.bf16.msra.mxu0 %v898
      %1204 = vmatprep.subr.bf16.mxu0 0
      %1205 = vmatpush2.bf16.msra.mxu0 %v897
      %1206 = vmatprep.subr.bf16.mxu0 0
      %1207 = vmatpush2.bf16.msra.mxu0 %v896
      %1208 = vmatprep.subr.bf16.mxu0 0
      %1209 = vmatpush2.bf16.msra.mxu0 %v895
      %1210 = vmatprep.mubr.bf16.mxu0 %v486
      %1211 = vmatmul.mubr.bf16.gmra.mxu0 %v485
      %v1212 = vpop.f32.mrf.mxu0
      %v1213 = vadd.f32 %v1148, %v1212
      %v1214 = vpop.f32.mrf.mxu0
      %v1215 = vpop.f32.mrf.mxu0
      %v1216 = vadd.f32 %v1151, %v1215
      %v1217 = vpop.f32.mrf.mxu0
      %1218 = vmatprep.mubr.bf16.mxu0 %v495
      %1219 = vmatmul.mubr.bf16.gmra.mxu0 %v494
      %v1220 = vpop.f32.mrf.mxu0
      %v1221 = vadd.f32 %v1156, %v1220
      %v1222 = vpop.f32.mrf.mxu0
      %v1223 = vpop.f32.mrf.mxu0
      %v1224 = vadd.f32 %v1159, %v1223
      %v1225 = vpop.f32.mrf.mxu0
      %1226 = vmatprep.mubr.bf16.mxu0 %v504
      %1227 = vmatmul.mubr.bf16.gmra.mxu0 %v503
      %v1228 = vpop.f32.mrf.mxu0
      %v1229 = vadd.f32 %v1164, %v1228
      %v1230 = vpop.f32.mrf.mxu0
      %v1231 = vpop.f32.mrf.mxu0
      %v1232 = vadd.f32 %v1167, %v1231
      %v1233 = vpop.f32.mrf.mxu0
      %1234 = vmatprep.mubr.bf16.mxu0 %v513
      %1235 = vmatmul.mubr.bf16.gmra.mxu0 %v512
      %v1236 = vpop.f32.mrf.mxu0
      %v1237 = vadd.f32 %v1172, %v1236
      %v1238 = vpop.f32.mrf.mxu0
      %v1239 = vpop.f32.mrf.mxu0
      %v1240 = vadd.f32 %v1175, %v1239
      %v1241 = vpop.f32.mrf.mxu0
      %1242 = vdwg.mxu0
      %1243 = vmatprep.subr.bf16.mxu0 0
      %1244 = vmatpush1.bf16.msra.mxu0 %v910
      %1245 = vmatprep.subr.bf16.mxu0 0
      %1246 = vmatpush1.bf16.msra.mxu0 %v909
      %1247 = vmatprep.subr.bf16.mxu0 0
      %1248 = vmatpush1.bf16.msra.mxu0 %v908
      %1249 = vmatprep.subr.bf16.mxu0 0
      %1250 = vmatpush1.bf16.msra.mxu0 %v907
      %1251 = vmatprep.subr.bf16.mxu0 0
      %1252 = vmatpush1.bf16.msra.mxu0 %v906
      %1253 = vmatprep.subr.bf16.mxu0 0
      %1254 = vmatpush1.bf16.msra.mxu0 %v905
      %1255 = vmatprep.subr.bf16.mxu0 0
      %1256 = vmatpush1.bf16.msra.mxu0 %v904
      %1257 = vmatprep.subr.bf16.mxu0 0
      %1258 = vmatpush1.bf16.msra.mxu0 %v903
      %1259 = vmatprep.subr.bf16.mxu0 0
      %1260 = vmatpush2.bf16.msra.mxu0 0
      %1261 = vmatprep.subr.bf16.mxu0 0
      %1262 = vmatpush2.bf16.msra.mxu0 0
      %1263 = vmatprep.subr.bf16.mxu0 0
      %1264 = vmatpush2.bf16.msra.mxu0 0
      %1265 = vmatprep.subr.bf16.mxu0 0
      %1266 = vmatpush2.bf16.msra.mxu0 0
      %1267 = vmatprep.subr.bf16.mxu0 0
      %1268 = vmatpush2.bf16.msra.mxu0 0
      %1269 = vmatprep.subr.bf16.mxu0 0
      %1270 = vmatpush2.bf16.msra.mxu0 0
      %1271 = vmatprep.subr.bf16.mxu0 0
      %1272 = vmatpush2.bf16.msra.mxu0 0
      %1273 = vmatprep.subr.bf16.mxu0 0
      %1274 = vmatpush2.bf16.msra.mxu0 0
      %1275 = vmatprep.mubr.bf16.mxu0 0
      %1276 = vmatmul.mubr.bf16.gmra.mxu0 %v487
      %v1277 = vpop.f32.mrf.mxu0
      %v1278 = vadd.f32 %v1213, %v1277
      %v1279 = vpop.f32.mrf.mxu0
      %v1280 = vpop.f32.mrf.mxu0
      %v1281 = vadd.f32 %v1216, %v1280
      %v1282 = vpop.f32.mrf.mxu0
      %1283 = vmatprep.mubr.bf16.mxu0 0
      %1284 = vmatmul.mubr.bf16.gmra.mxu0 %v496
      %v1285 = vpop.f32.mrf.mxu0
      %v1286 = vadd.f32 %v1221, %v1285
      %v1287 = vpop.f32.mrf.mxu0
      %v1288 = vpop.f32.mrf.mxu0
      %v1289 = vadd.f32 %v1224, %v1288
      %v1290 = vpop.f32.mrf.mxu0
      %1291 = vmatprep.mubr.bf16.mxu0 0
      %1292 = vmatmul.mubr.bf16.gmra.mxu0 %v505
      %v1293 = vpop.f32.mrf.mxu0
      %v1294 = vadd.f32 %v1229, %v1293
      %v1295 = vpop.f32.mrf.mxu0
      %v1296 = vpop.f32.mrf.mxu0
      %v1297 = vadd.f32 %v1232, %v1296
      %v1298 = vpop.f32.mrf.mxu0
      %1299 = vmatprep.mubr.bf16.mxu0 0
      %1300 = vmatmul.mubr.bf16.gmra.mxu0 %v514
      %v1301 = vpop.f32.mrf.mxu0
      %v1302 = vadd.f32 %v1237, %v1301
      %v1303 = vpop.f32.mrf.mxu0
      %v1304 = vpop.f32.mrf.mxu0
      %v1305 = vadd.f32 %v1240, %v1304
      %v1306 = vpop.f32.mrf.mxu0
      %1307 = vdwg.mxu0
      %v1308 = vpack.c.bf16 %v1281, %v1278
      %v1309 = vpack.c.bf16 %v1289, %v1286
      %v1310 = vpack.c.bf16 %v1297, %v1294
      %v1311 = vpack.c.bf16 %v1305, %v1302
      %v1316 = vunpack.c.l.b16 %v1308
      %v1317 = vunpack.c.h.b16 %v1308
      %v1318 = vunpack.c.l.b16 %v1309
      %v1319 = vunpack.c.h.b16 %v1309
      %v1320 = vunpack.c.l.b16 %v1310
      %v1321 = vunpack.c.h.b16 %v1310
      %v1322 = vunpack.c.l.b16 %v1311
      %v1323 = vunpack.c.h.b16 %v1311
      %v1324 = vpack.c.b16 %v1316, %v1316
      %v1325 = vpack.c.b16 %v1317, %v1317
      %v1326 = vpack.c.b16 %v1318, %v1318
      %v1327 = vpack.c.b16 %v1319, %v1319
      %v1328 = vpack.c.b16 %v1320, %v1320
      %v1329 = vpack.c.b16 %v1321, %v1321
      %v1330 = vpack.c.b16 %v1322, %v1322
      %v1331 = vpack.c.b16 %v1323, %v1323
      %1340 = vst [vmem:[%s177 + $0x8] sm:$0xf] %v1324
      %1341 = vst [vmem:[%s177 + $0xc] sm:$0xf] %v1325
      %1342 = vst [vmem:[%s177 + $0x10] sm:$0xf] %v1326
      %1343 = vst [vmem:[%s177 + $0x14] sm:$0xf] %v1327
      %1344 = vst [vmem:[%s177 + $0x18] sm:$0xf] %v1328
      %1345 = vst [vmem:[%s177 + $0x1c] sm:$0xf] %v1329
      %1346 = vst [vmem:[%s177 + $0x20] sm:$0xf] %v1330
      %1347 = vst [vmem:[%s177 + $0x24] sm:$0xf] %v1331
      %v1348 = vadd.f32 %v1278, %v1281
      %v1349 = vadd.f32 %v1348, %v1286
      %v1350 = vadd.f32 %v1349, %v1289
      %v1351 = vadd.f32 %v1350, %v1294
      %v1352 = vadd.f32 %v1351, %v1297
      %v1353 = vadd.f32 %v1352, %v1302
      %v1354 = vadd.f32 %v1353, %v1305
      %v1355 = vrot.slane %v1354, 4
      %v1356 = vadd.f32 %v1354, %v1355
      %v1357 = vrot.slane %v1356, 2
      %v1358 = vadd.f32 %v1356, %v1357
      %v1359 = vrot.slane %v1358, 1
      %v1360 = vadd.f32 %v1358, %v1359
      %v1361 = vmul.f32 %v1360, 0.015625
      %v1362 = vsub.f32 %v1278, %v1361
      %v1363 = vsub.f32 %v1281, %v1361
      %v1364 = vsub.f32 %v1286, %v1361
      %v1365 = vsub.f32 %v1289, %v1361
      %v1366 = vsub.f32 %v1294, %v1361
      %v1367 = vsub.f32 %v1297, %v1361
      %v1368 = vsub.f32 %v1302, %v1361
      %v1369 = vsub.f32 %v1305, %v1361
      %1370 = vst [vmem:[%s181] sm:$0x1] %v1360
      %v1371 = vmul.f32 %v1362, %v1362
      %v1372 = vmul.f32 %v1363, %v1363
      %v1373 = vmul.f32 %v1364, %v1364
      %v1374 = vmul.f32 %v1365, %v1365
      %v1375 = vmul.f32 %v1366, %v1366
      %v1376 = vmul.f32 %v1367, %v1367
      %v1377 = vmul.f32 %v1368, %v1368
      %v1378 = vmul.f32 %v1369, %v1369
      %v1379 = vadd.f32 %v1371, %v1372
      %v1380 = vadd.f32 %v1379, %v1373
      %v1381 = vadd.f32 %v1380, %v1374
      %v1382 = vadd.f32 %v1381, %v1375
      %v1383 = vadd.f32 %v1382, %v1376
      %v1384 = vadd.f32 %v1383, %v1377
      %v1385 = vadd.f32 %v1384, %v1378
      %v1386 = vrot.slane %v1385, 4
      %v1387 = vadd.f32 %v1385, %v1386
      %v1388 = vrot.slane %v1387, 2
      %v1389 = vadd.f32 %v1387, %v1388
      %v1390 = vrot.slane %v1389, 1
      %v1391 = vadd.f32 %v1389, %v1390
      %1392 = vst [vmem:[%s181 + $0x1] sm:$0x1] %v1391
      %p1393 = scmp.lt.s32.totalorder %s15, 1
      %s1394 = scalar_select %p1393, %s15, 1
      %s1395 = smul.addr %s1394, 12
      %s1396 = smul.addr %s1395, 4
      %s1397 = scalar_lea.vmem %s2, %s1396
      %p1398 = scmp.lt.s32.totalorder %s15, 1
      %s1399 = scalar_select %p1398, %s15, 1
      %s1400 = smul.addr %s1399, 2
      %s1401 = scalar_lea.vmem %s3, %s1400
      // Predicated region
      $region29: #{basic_block_forward.4} parent=27 // pred_check
        %p1402 = pneg %p80
      $region30: #{basic_block_forward.4} parent=27 // pred_check_branch
        %1404 = sbr.rel (%p1402) target = $region32
      $region31: #{basic_block_forward.4} parent=27 // pred_region
        _
      $region32: #{basic_block_forward.4} parent=27 // pred_fallthru
        _
      // Predicated region
      $region33: #{basic_block_forward.4} parent=27 // pred_check
        %p1405 = pneg %p106
      $region34: #{basic_block_forward.4} parent=27 // pred_check_branch
        %1407 = sbr.rel (%p1405) target = $region36
      $region35: #{basic_block_forward.4} parent=27 // pred_region
        _
      $region36: #{basic_block_forward.4} parent=27 // pred_fallthru
        _
    $region28: #{basic_block_forward.4} parent=5 // pred_fallthru
      _
    %p1408 = scmp.le.s32.totalorder 2, %s10
    // Predicated region
    $region37: #{basic_block_forward.4} parent=5 // pred_check
      %p1409 = pneg %p1408
    $region38: #{basic_block_forward.4} parent=5 // pred_check_branch
      %1411 = sbr.rel (%p1409) target = $region40
    $region39: #{basic_block_forward.4} parent=5 // pred_region
      %s1412 = ssub.s32 %s10, 2
      // Predicated region
      $region41: #{basic_block_forward.4} parent=39 // pred_check
        %p1413 = pneg %p86
      $region42: #{basic_block_forward.4} parent=39 // pred_check_branch
        %1415 = sbr.rel (%p1413) target = $region44
      $region43: #{basic_block_forward.4} parent=39 // pred_region
        %p1416 = scmp.lt.s32.totalorder %s16, 1
        %s1417 = scalar_select %p1416, %s16, 1
        %s1418 = smul.addr %s1417, 12
        %s1419 = smul.addr %s1418, 4
        %s1420 = scalar_lea.vmem %s2, %s1419
      $region44: #{basic_block_forward.4} parent=39 // pred_fallthru
        _
      // Predicated region
      $region45: #{basic_block_forward.4} parent=39 // pred_check
        %p1421 = pneg %p112
      $region46: #{basic_block_forward.4} parent=39 // pred_check_branch
        %1423 = sbr.rel (%p1421) target = $region48
      $region47: #{basic_block_forward.4} parent=39 // pred_region
        %p1424 = scmp.lt.s32.totalorder %s16, 1
        %s1425 = scalar_select %p1424, %s16, 1
        %s1426 = smul.addr %s1425, 2
        %s1427 = scalar_lea.vmem %s3, %s1426
      $region48: #{basic_block_forward.4} parent=39 // pred_fallthru
        _
    $region40: #{basic_block_forward.4} parent=5 // pred_fallthru
      _
  $region6: #{basic_block_forward.4} parent=0 // loop_footer
    %s14 = sadd.s32 1, %s10
  $region7: #{basic_block_forward.4} parent=0 // loop_footer_branch
    %9 = sbr.rel target = $region3
  $region8: #{basic_block_forward.4} parent=0 // loop_exit
    _

// kernel: basic_block_forward.6
$region0: #{basic_block_forward.6}
  #allocation0 [shape = 'u32[]', space=smem, size = 0x4, offset = 0x4, fixed_abs, tag = 'smem constant byte address 0x4 - core index']
  #allocation1 [shape = 'u32[144,128]{1,0:T(1,128)}', space=vmem, size = 0x12000, scoped, tag = 'internal scratch']
  %s0 = inlined_call_operand.vmem [shape: bf16[2,64,128], index: 0, kind: input, shape index: {}]
  %s1 = inlined_call_operand.vmem [shape: bf16[128,128], index: 1, kind: input, shape index: {}]
  %s2 = inlined_call_operand.vmem [shape: bf16[2,64,128], index: 2, kind: output, shape index: {0}]
  %s3 = inlined_call_operand.vmem [shape: f32[2,2,128], index: 3, kind: output, shape index: {1}]
  %4 = xla_tuple %s2, %s3
  %s5 = sld [smem:[#allocation0]]
  $region49: #{basic_block_forward.6} parent=0
    _
  %s7 = ssub.s32 1, %s5
  %s8 = scalar_select 0, %s7, %s5
  loop: start=0, step=1, limit=4
  $region2: #{basic_block_forward.6} parent=0 // loop_pre_header
    _
  $region3: #{basic_block_forward.6} parent=0 // loop_header
    %s10 = sphi 0, %s14
    %p11 = scmp.ge.s32.totalorder %s10, 4
    %s20 = sphi 0, %s22
    %s23 = sphi 0, %s20
    %s24 = sphi 0, %s23
    %s40 = sphi 0, %s24
    %s44 = sphi 0, %s44
    %s46 = sphi 0, %s44
    %s47 = sphi 0, %s46
    %s61 = sphi 0, %s47
    %s67 = sphi 0, %s69
    %s70 = sphi 0, %s67
    %s71 = sphi 0, %s70
    %s87 = sphi 0, %s71
    %s93 = sphi 0, %s95
    %s96 = sphi 0, %s93
    %s97 = sphi 0, %s96
    %s113 = sphi 0, %s97
  $region4: #{basic_block_forward.6} parent=0 // loop_header_branch
    %13 = sbr.rel (%p11) target = $region8
  $region5: #{basic_block_forward.6} parent=0 // loop_body
    %s15 = ssub.s32 %s10, 1
    %s16 = ssub.s32 %s10, 2
    %s17 = sadd.s32 %s10, 1
    %s18 = ssub.s32 %s10, %s17
    %p19 = scmp.eq.s32.totalorder %s18, 0
    %s21 = sadd.s32 %s20, 1
    %s22 = scalar_select %p19, %s20, %s21
    %p25 = pneg %p19
    %p26 = scmp.eq.s32.totalorder %s10, 1
    %p27 = por %p25, %p26
    %p28 = scmp.ne.s32.totalorder %s20, %s23
    %p29 = scmp.eq.s32.totalorder %s10, 0
    %p30 = por %p28, %p29
    %p31 = scmp.ne.s32.totalorder %s20, %s23
    %p32 = scmp.eq.s32.totalorder %s15, 1
    %p33 = por %p31, %p32
    %p34 = scmp.ne.s32.totalorder %s23, %s24
    %p35 = scmp.eq.s32.totalorder %s15, 0
    %p36 = por %p34, %p35
    %p37 = scmp.ne.s32.totalorder %s23, %s24
    %p38 = scmp.eq.s32.totalorder %s16, 1
    %p39 = por %p37, %p38
    %p41 = scmp.ne.s32.totalorder %s24, %s40
    %p42 = scmp.eq.s32.totalorder %s16, 0
    %p43 = por %p41, %p42
    %s45 = sadd.s32 %s44, 1
    %p48 = scmp.eq.s32.totalorder %s10, 1
    %p49 = scmp.ne.s32.totalorder %s44, %s46
    %p50 = scmp.eq.s32.totalorder %s10, 0
    %p51 = por %p49, %p50
    %p52 = scmp.ne.s32.totalorder %s44, %s46
    %p53 = scmp.eq.s32.totalorder %s15, 1
    %p54 = por %p52, %p53
    %p55 = scmp.ne.s32.totalorder %s46, %s47
    %p56 = scmp.eq.s32.totalorder %s15, 0
    %p57 = por %p55, %p56
    %p58 = scmp.ne.s32.totalorder %s46, %s47
    %p59 = scmp.eq.s32.totalorder %s16, 1
    %p60 = por %p58, %p59
    %p62 = scmp.ne.s32.totalorder %s47, %s61
    %p63 = scmp.eq.s32.totalorder %s16, 0
    %p64 = por %p62, %p63
    %s65 = ssub.s32 %s10, %s17
    %p66 = scmp.eq.s32.totalorder %s65, 0
    %s68 = sadd.s32 %s67, 1
    %s69 = scalar_select %p66, %s67, %s68
    %p72 = pneg %p66
    %p73 = scmp.eq.s32.totalorder %s10, 1
    %p74 = por %p72, %p73
    %p75 = scmp.ne.s32.totalorder %s67, %s70
    %p76 = scmp.eq.s32.totalorder %s10, 0
    %p77 = por %p75, %p76
    %p78 = scmp.ne.s32.totalorder %s67, %s70
    %p79 = scmp.eq.s32.totalorder %s15, 1
    %p80 = por %p78, %p79
    %p81 = scmp.ne.s32.totalorder %s70, %s71
    %p82 = scmp.eq.s32.totalorder %s15, 0
    %p83 = por %p81, %p82
    %p84 = scmp.ne.s32.totalorder %s70, %s71
    %p85 = scmp.eq.s32.totalorder %s16, 1
    %p86 = por %p84, %p85
    %p88 = scmp.ne.s32.totalorder %s71, %s87
    %p89 = scmp.eq.s32.totalorder %s16, 0
    %p90 = por %p88, %p89
    %s91 = ssub.s32 %s10, %s17
    %p92 = scmp.eq.s32.totalorder %s91, 0
    %s94 = sadd.s32 %s93, 1
    %s95 = scalar_select %p92, %s93, %s94
    %p98 = pneg %p92
    %p99 = scmp.eq.s32.totalorder %s10, 1
    %p100 = por %p98, %p99
    %p101 = scmp.ne.s32.totalorder %s93, %s96
    %p102 = scmp.eq.s32.totalorder %s10, 0
    %p103 = por %p101, %p102
    %p104 = scmp.ne.s32.totalorder %s93, %s96
    %p105 = scmp.eq.s32.totalorder %s15, 1
    %p106 = por %p104, %p105
    %p107 = scmp.ne.s32.totalorder %s96, %s97
    %p108 = scmp.eq.s32.totalorder %s15, 0
    %p109 = por %p107, %p108
    %p110 = scmp.ne.s32.totalorder %s96, %s97
    %p111 = scmp.eq.s32.totalorder %s16, 1
    %p112 = por %p110, %p111
    %p114 = scmp.ne.s32.totalorder %s97, %s113
    %p115 = scmp.eq.s32.totalorder %s16, 0
    %p116 = por %p114, %p115
    %p117 = scmp.le.s32.totalorder 1, %s10
    %p118 = scmp.lt.s32.totalorder %s10, 3
    %p119 = pnand %p117, %p118
    %p120 = pneg %p119
    // Predicated region
    $region9: #{basic_block_forward.6} parent=5 // pred_check
      _
    $region10: #{basic_block_forward.6} parent=5 // pred_check_branch
      %122 = sbr.rel (%p119) target = $region12
    $region11: #{basic_block_forward.6} parent=5 // pred_region
      %s123 = ssub.s32 %s10, 1
      // Predicated region
      $region13: #{basic_block_forward.6} parent=11 // pred_check
        %p124 = pneg %p57
      $region14: #{basic_block_forward.6} parent=11 // pred_check_branch
        %126 = sbr.rel (%p124) target = $region16
      $region15: #{basic_block_forward.6} parent=11 // pred_region
        _
      $region16: #{basic_block_forward.6} parent=11 // pred_fallthru
        _
    $region12: #{basic_block_forward.6} parent=5 // pred_fallthru
      _
    %p127 = scmp.lt.s32.totalorder %s10, 2
    // Predicated region
    $region17: #{basic_block_forward.6} parent=5 // pred_check
      %p128 = pneg %p127
    $region18: #{basic_block_forward.6} parent=5 // pred_check_branch
      %130 = sbr.rel (%p128) target = $region20
    $region19: #{basic_block_forward.6} parent=5 // pred_region
      // Predicated region
      $region21: #{basic_block_forward.6} parent=19 // pred_check
        %p131 = pneg %p30
      $region22: #{basic_block_forward.6} parent=19 // pred_check_branch
        %133 = sbr.rel (%p131) target = $region24
      $region23: #{basic_block_forward.6} parent=19 // pred_region
        %p134 = scmp.lt.s32.totalorder %s10, 1
        %s135 = scalar_select %p134, %s10, 1
        %s136 = smul.addr %s135, 8
        %s137 = smul.addr %s136, 4
        %s138 = scalar_lea.vmem %s0, %s137
      $region24: #{basic_block_forward.6} parent=19 // pred_fallthru
        _
    $region20: #{basic_block_forward.6} parent=5 // pred_fallthru
      _
    %p139 = scmp.le.s32.totalorder 1, %s10
    %p140 = scmp.lt.s32.totalorder %s10, 3
    %p141 = pnand %p139, %p140
    %p142 = pneg %p141
    // Predicated region
    $region25: #{basic_block_forward.6} parent=5 // pred_check
      _
    $region26: #{basic_block_forward.6} parent=5 // pred_check_branch
      %144 = sbr.rel (%p141) target = $region28
    $region27: #{basic_block_forward.6} parent=5 // pred_region
      %s145 = ssub.s32 %s10, 1
      %p146 = scmp.lt.s32.totalorder %s15, 1
      %s147 = scalar_select %p146, %s15, 1
      %s148 = smul.addr %s147, 8
      %s149 = smul.addr %s148, 4
      %s150 = scalar_lea.vmem %s0, %s149
      %p151 = pneg %p36
      %p152 = pneg %p33
      %p153 = pneg %p57
      %p154 = pneg %p54
      %p155 = pneg %p83
      %p156 = pneg %p80
      %p157 = scmp.lt.s32.totalorder %s15, 1
      %s158 = scalar_select %p157, %s15, 1
      %s159 = smul.addr %s158, 8
      %s160 = smul.addr %s159, 4
      %s161 = scalar_lea.vmem %s2, %s160
      %p162 = pneg %p109
      %p163 = pneg %p106
      %p164 = scmp.lt.s32.totalorder %s15, 1
      %s165 = scalar_select %p164, %s15, 1
      %s166 = smul.addr %s165, 2
      %s167 = scalar_lea.vmem %s3, %s166
      %p168 = scmp.lt.s32.totalorder %s15, 1
      %s169 = scalar_select %p168, %s15, 1
      %s170 = smul.addr %s169, 8
      %s171 = smul.addr %s170, 4
      %s172 = scalar_lea.vmem %s0, %s171
      %p173 = scmp.lt.s32.totalorder %s15, 1
      %s174 = scalar_select %p173, %s15, 1
      %s175 = smul.addr %s174, 8
      %s176 = smul.addr %s175, 4
      %s177 = scalar_lea.vmem %s2, %s176
      %p178 = scmp.lt.s32.totalorder %s15, 1
      %s179 = scalar_select %p178, %s15, 1
      %s180 = smul.addr %s179, 2
      %s181 = scalar_lea.vmem %s3, %s180
      %v183 = vld [vmem:[%s172] sm:$0xf]
      %v184 = vld [vmem:[%s172 + $0x4] sm:$0xf]
      %v185 = vld [vmem:[%s172 + $0x8] sm:$0xf]
      %v186 = vld [vmem:[%s172 + $0xc] sm:$0xf]
      %v187 = vld [vmem:[%s172 + $0x10] sm:$0xf]
      %v188 = vld [vmem:[%s172 + $0x14] sm:$0xf]
      %v189 = vld [vmem:[%s172 + $0x18] sm:$0xf]
      %v190 = vld [vmem:[%s172 + $0x1c] sm:$0xf]
      %v191 = vld [vmem:[%s1] sm:$0xf]
      %v192 = vld [vmem:[%s1 + $0x4] sm:$0xf]
      %v193 = vld [vmem:[%s1 + $0x8] sm:$0xf]
      %v194 = vld [vmem:[%s1 + $0xc] sm:$0xf]
      %v195 = vld [vmem:[%s1 + $0x10] sm:$0xf]
      %v196 = vld [vmem:[%s1 + $0x14] sm:$0xf]
      %v197 = vld [vmem:[%s1 + $0x18] sm:$0xf]
      %v198 = vld [vmem:[%s1 + $0x1c] sm:$0xf]
      %v199 = vld [vmem:[%s1 + $0x20] sm:$0xf]
      %v200 = vld [vmem:[%s1 + $0x24] sm:$0xf]
      %v201 = vld [vmem:[%s1 + $0x28] sm:$0xf]
      %v202 = vld [vmem:[%s1 + $0x2c] sm:$0xf]
      %v203 = vld [vmem:[%s1 + $0x30] sm:$0xf]
      %v204 = vld [vmem:[%s1 + $0x34] sm:$0xf]
      %v205 = vld [vmem:[%s1 + $0x38] sm:$0xf]
      %v206 = vld [vmem:[%s1 + $0x3c] sm:$0xf]
      %v215 = vunpack.c.l.b16 %v183
      %v216 = vunpack.c.l.b16 %v184
      %v217 = vunpack.c.l.b16 %v185
      %v218 = vunpack.c.l.b16 %v186
      %v219 = vunpack.c.l.b16 %v187
      %v220 = vunpack.c.l.b16 %v188
      %v221 = vunpack.c.l.b16 %v189
      %v222 = vunpack.c.l.b16 %v190
      %v223 = vpack.c.b16 %v216, %v215
      %v224 = vpack.c.b16 %v218, %v217
      %v225 = vpack.c.b16 %v220, %v219
      %v226 = vpack.c.b16 %v222, %v221
      %v247 = vunpack.c.l.b16 %v191
      %v248 = vunpack.c.l.b16 %v192
      %v249 = vunpack.c.l.b16 %v193
      %v250 = vunpack.c.l.b16 %v194
      %v251 = vunpack.c.l.b16 %v195
      %v252 = vunpack.c.l.b16 %v196
      %v253 = vunpack.c.l.b16 %v197
      %v254 = vunpack.c.l.b16 %v198
      %v255 = vunpack.c.l.b16 %v199
      %v256 = vunpack.c.l.b16 %v200
      %v257 = vunpack.c.l.b16 %v201
      %v258 = vunpack.c.l.b16 %v202
      %v259 = vunpack.c.l.b16 %v203
      %v260 = vunpack.c.l.b16 %v204
      %v261 = vunpack.c.l.b16 %v205
      %v262 = vunpack.c.l.b16 %v206
      %v263 = vpack.c.b16 %v248, %v247
      %v264 = vpack.c.b16 %v250, %v249
      %v265 = vpack.c.b16 %v252, %v251
      %v266 = vpack.c.b16 %v254, %v253
      %v267 = vpack.c.b16 %v256, %v255
      %v268 = vpack.c.b16 %v258, %v257
      %v269 = vpack.c.b16 %v260, %v259
      %v270 = vpack.c.b16 %v262, %v261
      %279 = vmatprep.subr.bf16.mxu0 0
      %280 = vmatpush1.bf16.msra.mxu0 %v270
      %281 = vmatprep.subr.bf16.mxu0 0
      %282 = vmatpush1.bf16.msra.mxu0 %v269
      %283 = vmatprep.subr.bf16.mxu0 0
      %284 = vmatpush1.bf16.msra.mxu0 %v268
      %285 = vmatprep.subr.bf16.mxu0 0
      %286 = vmatpush1.bf16.msra.mxu0 %v267
      %287 = vmatprep.subr.bf16.mxu0 0
      %288 = vmatpush1.bf16.msra.mxu0 %v266
      %289 = vmatprep.subr.bf16.mxu0 0
      %290 = vmatpush1.bf16.msra.mxu0 %v265
      %291 = vmatprep.subr.bf16.mxu0 0
      %292 = vmatpush1.bf16.msra.mxu0 %v264
      %293 = vmatprep.subr.bf16.mxu0 0
      %294 = vmatpush1.bf16.msra.mxu0 %v263
      %295 = vmatprep.subr.bf16.mxu0 0
      %296 = vmatpush2.bf16.msra.mxu0 0
      %297 = vmatprep.subr.bf16.mxu0 0
      %298 = vmatpush2.bf16.msra.mxu0 0
      %299 = vmatprep.subr.bf16.mxu0 0
      %300 = vmatpush2.bf16.msra.mxu0 0
      %301 = vmatprep.subr.bf16.mxu0 0
      %302 = vmatpush2.bf16.msra.mxu0 0
      %303 = vmatprep.subr.bf16.mxu0 0
      %304 = vmatpush2.bf16.msra.mxu0 0
      %305 = vmatprep.subr.bf16.mxu0 0
      %306 = vmatpush2.bf16.msra.mxu0 0
      %307 = vmatprep.subr.bf16.mxu0 0
      %308 = vmatpush2.bf16.msra.mxu0 0
      %309 = vmatprep.subr.bf16.mxu0 0
      %310 = vmatpush2.bf16.msra.mxu0 0
      %311 = vmatprep.mubr.bf16.mxu0 0
      %312 = vmatmul.mubr.bf16.gmra.mxu0 %v223
      %v313 = vpop.f32.mrf.mxu0
      %v314 = vadd.f32 0.0, %v313
      %v315 = vpop.f32.mrf.mxu0
      %v316 = vpop.f32.mrf.mxu0
      %v317 = vadd.f32 0.0, %v316
      %v318 = vpop.f32.mrf.mxu0
      %319 = vmatprep.mubr.bf16.mxu0 0
      %320 = vmatmul.mubr.bf16.gmra.mxu0 %v224
      %v321 = vpop.f32.mrf.mxu0
      %v322 = vadd.f32 0.0, %v321
      %v323 = vpop.f32.mrf.mxu0
      %v324 = vpop.f32.mrf.mxu0
      %v325 = vadd.f32 0.0, %v324
      %v326 = vpop.f32.mrf.mxu0
      %327 = vmatprep.mubr.bf16.mxu0 0
      %328 = vmatmul.mubr.bf16.gmra.mxu0 %v225
      %v329 = vpop.f32.mrf.mxu0
      %v330 = vadd.f32 0.0, %v329
      %v331 = vpop.f32.mrf.mxu0
      %v332 = vpop.f32.mrf.mxu0
      %v333 = vadd.f32 0.0, %v332
      %v334 = vpop.f32.mrf.mxu0
      %335 = vmatprep.mubr.bf16.mxu0 0
      %336 = vmatmul.mubr.bf16.gmra.mxu0 %v226
      %v337 = vpop.f32.mrf.mxu0
      %v338 = vadd.f32 0.0, %v337
      %v339 = vpop.f32.mrf.mxu0
      %v340 = vpop.f32.mrf.mxu0
      %v341 = vadd.f32 0.0, %v340
      %v342 = vpop.f32.mrf.mxu0
      %343 = vdwg.mxu0
      %v344 = vpack.c.bf16 %v317, %v314
      %v345 = vpack.c.bf16 %v325, %v322
      %v346 = vpack.c.bf16 %v333, %v330
      %v347 = vpack.c.bf16 %v341, %v338
      %v352 = vunpack.c.l.b16 %v344
      %v353 = vunpack.c.h.b16 %v344
      %v354 = vunpack.c.l.b16 %v345
      %v355 = vunpack.c.h.b16 %v345
      %v356 = vunpack.c.l.b16 %v346
      %v357 = vunpack.c.h.b16 %v346
      %v358 = vunpack.c.l.b16 %v347
      %v359 = vunpack.c.h.b16 %v347
      %v360 = vpack.c.b16 %v352, %v352
      %v361 = vpack.c.b16 %v353, %v353
      %v362 = vpack.c.b16 %v354, %v354
      %v363 = vpack.c.b16 %v355, %v355
      %v364 = vpack.c.b16 %v356, %v356
      %v365 = vpack.c.b16 %v357, %v357
      %v366 = vpack.c.b16 %v358, %v358
      %v367 = vpack.c.b16 %v359, %v359
      %376 = vst [vmem:[%s177] sm:$0xf] %v360
      %377 = vst [vmem:[%s177 + $0x4] sm:$0xf] %v361
      %378 = vst [vmem:[%s177 + $0x8] sm:$0xf] %v362
      %379 = vst [vmem:[%s177 + $0xc] sm:$0xf] %v363
      %380 = vst [vmem:[%s177 + $0x10] sm:$0xf] %v364
      %381 = vst [vmem:[%s177 + $0x14] sm:$0xf] %v365
      %382 = vst [vmem:[%s177 + $0x18] sm:$0xf] %v366
      %383 = vst [vmem:[%s177 + $0x1c] sm:$0xf] %v367
      %v384 = vadd.f32 %v314, %v317
      %v385 = vadd.f32 %v384, %v322
      %v386 = vadd.f32 %v385, %v325
      %v387 = vadd.f32 %v386, %v330
      %v388 = vadd.f32 %v387, %v333
      %v389 = vadd.f32 %v388, %v338
      %v390 = vadd.f32 %v389, %v341
      %v391 = vrot.slane %v390, 4
      %v392 = vadd.f32 %v390, %v391
      %v393 = vrot.slane %v392, 2
      %v394 = vadd.f32 %v392, %v393
      %v395 = vrot.slane %v394, 1
      %v396 = vadd.f32 %v394, %v395
      %v397 = vmul.f32 %v396, 0.015625
      %v398 = vsub.f32 %v314, %v397
      %v399 = vsub.f32 %v317, %v397
      %v400 = vsub.f32 %v322, %v397
      %v401 = vsub.f32 %v325, %v397
      %v402 = vsub.f32 %v330, %v397
      %v403 = vsub.f32 %v333, %v397
      %v404 = vsub.f32 %v338, %v397
      %v405 = vsub.f32 %v341, %v397
      %406 = vst [vmem:[%s181] sm:$0x1] %v396
      %v407 = vmul.f32 %v398, %v398
      %v408 = vmul.f32 %v399, %v399
      %v409 = vmul.f32 %v400, %v400
      %v410 = vmul.f32 %v401, %v401
      %v411 = vmul.f32 %v402, %v402
      %v412 = vmul.f32 %v403, %v403
      %v413 = vmul.f32 %v404, %v404
      %v414 = vmul.f32 %v405, %v405
      %v415 = vadd.f32 %v407, %v408
      %v416 = vadd.f32 %v415, %v409
      %v417 = vadd.f32 %v416, %v410
      %v418 = vadd.f32 %v417, %v411
      %v419 = vadd.f32 %v418, %v412
      %v420 = vadd.f32 %v419, %v413
      %v421 = vadd.f32 %v420, %v414
      %v422 = vrot.slane %v421, 4
      %v423 = vadd.f32 %v421, %v422
      %v424 = vrot.slane %v423, 2
      %v425 = vadd.f32 %v423, %v424
      %v426 = vrot.slane %v425, 1
      %v427 = vadd.f32 %v425, %v426
      %428 = vst [vmem:[%s181 + $0x1] sm:$0x1] %v427
      %p429 = scmp.lt.s32.totalorder %s15, 1
      %s430 = scalar_select %p429, %s15, 1
      %s431 = smul.addr %s430, 8
      %s432 = smul.addr %s431, 4
      %s433 = scalar_lea.vmem %s2, %s432
      %p434 = scmp.lt.s32.totalorder %s15, 1
      %s435 = scalar_select %p434, %s15, 1
      %s436 = smul.addr %s435, 2
      %s437 = scalar_lea.vmem %s3, %s436
      // Predicated region
      $region29: #{basic_block_forward.6} parent=27 // pred_check
        %p438 = pneg %p80
      $region30: #{basic_block_forward.6} parent=27 // pred_check_branch
        %440 = sbr.rel (%p438) target = $region32
      $region31: #{basic_block_forward.6} parent=27 // pred_region
        _
      $region32: #{basic_block_forward.6} parent=27 // pred_fallthru
        _
      // Predicated region
      $region33: #{basic_block_forward.6} parent=27 // pred_check
        %p441 = pneg %p106
      $region34: #{basic_block_forward.6} parent=27 // pred_check_branch
        %443 = sbr.rel (%p441) target = $region36
      $region35: #{basic_block_forward.6} parent=27 // pred_region
        _
      $region36: #{basic_block_forward.6} parent=27 // pred_fallthru
        _
    $region28: #{basic_block_forward.6} parent=5 // pred_fallthru
      _
    %p444 = scmp.le.s32.totalorder 2, %s10
    // Predicated region
    $region37: #{basic_block_forward.6} parent=5 // pred_check
      %p445 = pneg %p444
    $region38: #{basic_block_forward.6} parent=5 // pred_check_branch
      %447 = sbr.rel (%p445) target = $region40
    $region39: #{basic_block_forward.6} parent=5 // pred_region
      %s448 = ssub.s32 %s10, 2
      // Predicated region
      $region41: #{basic_block_forward.6} parent=39 // pred_check
        %p449 = pneg %p86
      $region42: #{basic_block_forward.6} parent=39 // pred_check_branch
        %451 = sbr.rel (%p449) target = $region44
      $region43: #{basic_block_forward.6} parent=39 // pred_region
        %p452 = scmp.lt.s32.totalorder %s16, 1
        %s453 = scalar_select %p452, %s16, 1
        %s454 = smul.addr %s453, 8
        %s455 = smul.addr %s454, 4
        %s456 = scalar_lea.vmem %s2, %s455
      $region44: #{basic_block_forward.6} parent=39 // pred_fallthru
        _
      // Predicated region
      $region45: #{basic_block_forward.6} parent=39 // pred_check
        %p457 = pneg %p112
      $region46: #{basic_block_forward.6} parent=39 // pred_check_branch
        %459 = sbr.rel (%p457) target = $region48
      $region47: #{basic_block_forward.6} parent=39 // pred_region
        %p460 = scmp.lt.s32.totalorder %s16, 1
        %s461 = scalar_select %p460, %s16, 1
        %s462 = smul.addr %s461, 2
        %s463 = scalar_lea.vmem %s3, %s462
      $region48: #{basic_block_forward.6} parent=39 // pred_fallthru
        _
    $region40: #{basic_block_forward.6} parent=5 // pred_fallthru
      _
  $region6: #{basic_block_forward.6} parent=0 // loop_footer
    %s14 = sadd.s32 1, %s10
  $region7: #{basic_block_forward.6} parent=0 // loop_footer_branch
    %9 = sbr.rel target = $region3
  $region8: #{basic_block_forward.6} parent=0 // loop_exit
    _

// kernel: basic_block_forward.7
$region0: #{basic_block_forward.7}
  #allocation0 [shape = 'u32[]', space=smem, size = 0x4, offset = 0x4, fixed_abs, tag = 'smem constant byte address 0x4 - core index']
  #allocation1 [shape = 'u32[144,128]{1,0:T(1,128)}', space=vmem, size = 0x12000, scoped, tag = 'internal scratch']
  %s0 = inlined_call_operand.vmem [shape: bf16[2,64,128], index: 0, kind: input, shape index: {}]
  %s1 = inlined_call_operand.vmem [shape: bf16[2,64,128], index: 1, kind: input, shape index: {}]
  %s2 = inlined_call_operand.vmem [shape: f32[1,128], index: 2, kind: input, shape index: {}]
  %s3 = inlined_call_operand.vmem [shape: f32[1,128], index: 3, kind: input, shape index: {}]
  %s4 = inlined_call_operand.vmem [shape: f32[1,128], index: 4, kind: input, shape index: {}]
  %s5 = inlined_call_operand.vmem [shape: f32[1,128], index: 5, kind: input, shape index: {}]
  %s6 = inlined_call_operand.vmem [shape: f32[2,64,128], index: 6, kind: output, shape index: {}]
  %s7 = sld [smem:[#allocation0]]
  $region57: #{basic_block_forward.7} parent=0
    _
  %s9 = ssub.s32 1, %s7
  %s10 = scalar_select 0, %s9, %s7
  loop: start=0, step=1, limit=4
  $region2: #{basic_block_forward.7} parent=0 // loop_pre_header
    _
  $region3: #{basic_block_forward.7} parent=0 // loop_header
    %s12 = sphi 0, %s16
    %p13 = scmp.ge.s32.totalorder %s12, 4
    %s22 = sphi 0, %s24
    %s25 = sphi 0, %s22
    %s26 = sphi 0, %s25
    %s42 = sphi 0, %s26
    %s48 = sphi 0, %s50
    %s51 = sphi 0, %s48
    %s52 = sphi 0, %s51
    %s68 = sphi 0, %s52
    %s72 = sphi 0, %s72
    %s74 = sphi 0, %s72
    %s75 = sphi 0, %s74
    %s89 = sphi 0, %s75
    %s93 = sphi 0, %s93
    %s95 = sphi 0, %s93
    %s96 = sphi 0, %s95
    %s110 = sphi 0, %s96
    %s114 = sphi 0, %s114
    %s116 = sphi 0, %s114
    %s117 = sphi 0, %s116
    %s131 = sphi 0, %s117
    %s135 = sphi 0, %s135
    %s137 = sphi 0, %s135
    %s138 = sphi 0, %s137
    %s152 = sphi 0, %s138
    %s158 = sphi 0, %s160
    %s161 = sphi 0, %s158
    %s162 = sphi 0, %s161
    %s178 = sphi 0, %s162
  $region4: #{basic_block_forward.7} parent=0 // loop_header_branch
    %15 = sbr.rel (%p13) target = $region8
  $region5: #{basic_block_forward.7} parent=0 // loop_body
    %s17 = ssub.s32 %s12, 1
    %s18 = ssub.s32 %s12, 2
    %s19 = sadd.s32 %s12, 1
    %s20 = ssub.s32 %s12, %s19
    %p21 = scmp.eq.s32.totalorder %s20, 0
    %s23 = sadd.s32 %s22, 1
    %s24 = scalar_select %p21, %s22, %s23
    %p27 = pneg %p21
    %p28 = scmp.eq.s32.totalorder %s12, 1
    %p29 = por %p27, %p28
    %p30 = scmp.ne.s32.totalorder %s22, %s25
    %p31 = scmp.eq.s32.totalorder %s12, 0
    %p32 = por %p30, %p31
    %p33 = scmp.ne.s32.totalorder %s22, %s25
    %p34 = scmp.eq.s32.totalorder %s17, 1
    %p35 = por %p33, %p34
    %p36 = scmp.ne.s32.totalorder %s25, %s26
    %p37 = scmp.eq.s32.totalorder %s17, 0
    %p38 = por %p36, %p37
    %p39 = scmp.ne.s32.totalorder %s25, %s26
    %p40 = scmp.eq.s32.totalorder %s18, 1
    %p41 = por %p39, %p40
    %p43 = scmp.ne.s32.totalorder %s26, %s42
    %p44 = scmp.eq.s32.totalorder %s18, 0
    %p45 = por %p43, %p44
    %s46 = ssub.s32 %s12, %s19
    %p47 = scmp.eq.s32.totalorder %s46, 0
    %s49 = sadd.s32 %s48, 1
    %s50 = scalar_select %p47, %s48, %s49
    %p53 = pneg %p47
    %p54 = scmp.eq.s32.totalorder %s12, 1
    %p55 = por %p53, %p54
    %p56 = scmp.ne.s32.totalorder %s48, %s51
    %p57 = scmp.eq.s32.totalorder %s12, 0
    %p58 = por %p56, %p57
    %p59 = scmp.ne.s32.totalorder %s48, %s51
    %p60 = scmp.eq.s32.totalorder %s17, 1
    %p61 = por %p59, %p60
    %p62 = scmp.ne.s32.totalorder %s51, %s52
    %p63 = scmp.eq.s32.totalorder %s17, 0
    %p64 = por %p62, %p63
    %p65 = scmp.ne.s32.totalorder %s51, %s52
    %p66 = scmp.eq.s32.totalorder %s18, 1
    %p67 = por %p65, %p66
    %p69 = scmp.ne.s32.totalorder %s52, %s68
    %p70 = scmp.eq.s32.totalorder %s18, 0
    %p71 = por %p69, %p70
    %s73 = sadd.s32 %s72, 1
    %p76 = scmp.eq.s32.totalorder %s12, 1
    %p77 = scmp.ne.s32.totalorder %s72, %s74
    %p78 = scmp.eq.s32.totalorder %s12, 0
    %p79 = por %p77, %p78
    %p80 = scmp.ne.s32.totalorder %s72, %s74
    %p81 = scmp.eq.s32.totalorder %s17, 1
    %p82 = por %p80, %p81
    %p83 = scmp.ne.s32.totalorder %s74, %s75
    %p84 = scmp.eq.s32.totalorder %s17, 0
    %p85 = por %p83, %p84
    %p86 = scmp.ne.s32.totalorder %s74, %s75
    %p87 = scmp.eq.s32.totalorder %s18, 1
    %p88 = por %p86, %p87
    %p90 = scmp.ne.s32.totalorder %s75, %s89
    %p91 = scmp.eq.s32.totalorder %s18, 0
    %p92 = por %p90, %p91
    %s94 = sadd.s32 %s93, 1
    %p97 = scmp.eq.s32.totalorder %s12, 1
    %p98 = scmp.ne.s32.totalorder %s93, %s95
    %p99 = scmp.eq.s32.totalorder %s12, 0
    %p100 = por %p98, %p99
    %p101 = scmp.ne.s32.totalorder %s93, %s95
    %p102 = scmp.eq.s32.totalorder %s17, 1
    %p103 = por %p101, %p102
    %p104 = scmp.ne.s32.totalorder %s95, %s96
    %p105 = scmp.eq.s32.totalorder %s17, 0
    %p106 = por %p104, %p105
    %p107 = scmp.ne.s32.totalorder %s95, %s96
    %p108 = scmp.eq.s32.totalorder %s18, 1
    %p109 = por %p107, %p108
    %p111 = scmp.ne.s32.totalorder %s96, %s110
    %p112 = scmp.eq.s32.totalorder %s18, 0
    %p113 = por %p111, %p112
    %s115 = sadd.s32 %s114, 1
    %p118 = scmp.eq.s32.totalorder %s12, 1
    %p119 = scmp.ne.s32.totalorder %s114, %s116
    %p120 = scmp.eq.s32.totalorder %s12, 0
    %p121 = por %p119, %p120
    %p122 = scmp.ne.s32.totalorder %s114, %s116
    %p123 = scmp.eq.s32.totalorder %s17, 1
    %p124 = por %p122, %p123
    %p125 = scmp.ne.s32.totalorder %s116, %s117
    %p126 = scmp.eq.s32.totalorder %s17, 0
    %p127 = por %p125, %p126
    %p128 = scmp.ne.s32.totalorder %s116, %s117
    %p129 = scmp.eq.s32.totalorder %s18, 1
    %p130 = por %p128, %p129
    %p132 = scmp.ne.s32.totalorder %s117, %s131
    %p133 = scmp.eq.s32.totalorder %s18, 0
    %p134 = por %p132, %p133
    %s136 = sadd.s32 %s135, 1
    %p139 = scmp.eq.s32.totalorder %s12, 1
    %p140 = scmp.ne.s32.totalorder %s135, %s137
    %p141 = scmp.eq.s32.totalorder %s12, 0
    %p142 = por %p140, %p141
    %p143 = scmp.ne.s32.totalorder %s135, %s137
    %p144 = scmp.eq.s32.totalorder %s17, 1
    %p145 = por %p143, %p144
    %p146 = scmp.ne.s32.totalorder %s137, %s138
    %p147 = scmp.eq.s32.totalorder %s17, 0
    %p148 = por %p146, %p147
    %p149 = scmp.ne.s32.totalorder %s137, %s138
    %p150 = scmp.eq.s32.totalorder %s18, 1
    %p151 = por %p149, %p150
    %p153 = scmp.ne.s32.totalorder %s138, %s152
    %p154 = scmp.eq.s32.totalorder %s18, 0
    %p155 = por %p153, %p154
    %s156 = ssub.s32 %s12, %s19
    %p157 = scmp.eq.s32.totalorder %s156, 0
    %s159 = sadd.s32 %s158, 1
    %s160 = scalar_select %p157, %s158, %s159
    %p163 = pneg %p157
    %p164 = scmp.eq.s32.totalorder %s12, 1
    %p165 = por %p163, %p164
    %p166 = scmp.ne.s32.totalorder %s158, %s161
    %p167 = scmp.eq.s32.totalorder %s12, 0
    %p168 = por %p166, %p167
    %p169 = scmp.ne.s32.totalorder %s158, %s161
    %p170 = scmp.eq.s32.totalorder %s17, 1
    %p171 = por %p169, %p170
    %p172 = scmp.ne.s32.totalorder %s161, %s162
    %p173 = scmp.eq.s32.totalorder %s17, 0
    %p174 = por %p172, %p173
    %p175 = scmp.ne.s32.totalorder %s161, %s162
    %p176 = scmp.eq.s32.totalorder %s18, 1
    %p177 = por %p175, %p176
    %p179 = scmp.ne.s32.totalorder %s162, %s178
    %p180 = scmp.eq.s32.totalorder %s18, 0
    %p181 = por %p179, %p180
    %p182 = scmp.le.s32.totalorder 1, %s12
    %p183 = scmp.lt.s32.totalorder %s12, 3
    %p184 = pnand %p182, %p183
    %p185 = pneg %p184
    // Predicated region
    $region9: #{basic_block_forward.7} parent=5 // pred_check
      _
    $region10: #{basic_block_forward.7} parent=5 // pred_check_branch
      %187 = sbr.rel (%p184) target = $region12
    $region11: #{basic_block_forward.7} parent=5 // pred_region
      %s188 = ssub.s32 %s12, 1
      // Predicated region
      $region13: #{basic_block_forward.7} parent=11 // pred_check
        %p189 = pneg %p85
      $region14: #{basic_block_forward.7} parent=11 // pred_check_branch
        %191 = sbr.rel (%p189) target = $region16
      $region15: #{basic_block_forward.7} parent=11 // pred_region
        _
      $region16: #{basic_block_forward.7} parent=11 // pred_fallthru
        _
      // Predicated region
      $region17: #{basic_block_forward.7} parent=11 // pred_check
        %p192 = pneg %p106
      $region18: #{basic_block_forward.7} parent=11 // pred_check_branch
        %194 = sbr.rel (%p192) target = $region20
      $region19: #{basic_block_forward.7} parent=11 // pred_region
        _
      $region20: #{basic_block_forward.7} parent=11 // pred_fallthru
        _
      // Predicated region
      $region21: #{basic_block_forward.7} parent=11 // pred_check
        %p195 = pneg %p127
      $region22: #{basic_block_forward.7} parent=11 // pred_check_branch
        %197 = sbr.rel (%p195) target = $region24
      $region23: #{basic_block_forward.7} parent=11 // pred_region
        _
      $region24: #{basic_block_forward.7} parent=11 // pred_fallthru
        _
      // Predicated region
      $region25: #{basic_block_forward.7} parent=11 // pred_check
        %p198 = pneg %p148
      $region26: #{basic_block_forward.7} parent=11 // pred_check_branch
        %200 = sbr.rel (%p198) target = $region28
      $region27: #{basic_block_forward.7} parent=11 // pred_region
        _
      $region28: #{basic_block_forward.7} parent=11 // pred_fallthru
        _
    $region12: #{basic_block_forward.7} parent=5 // pred_fallthru
      _
    %p201 = scmp.lt.s32.totalorder %s12, 2
    // Predicated region
    $region29: #{basic_block_forward.7} parent=5 // pred_check
      %p202 = pneg %p201
    $region30: #{basic_block_forward.7} parent=5 // pred_check_branch
      %204 = sbr.rel (%p202) target = $region32
    $region31: #{basic_block_forward.7} parent=5 // pred_region
      // Predicated region
      $region33: #{basic_block_forward.7} parent=31 // pred_check
        %p205 = pneg %p32
      $region34: #{basic_block_forward.7} parent=31 // pred_check_branch
        %207 = sbr.rel (%p205) target = $region36
      $region35: #{basic_block_forward.7} parent=31 // pred_region
        %p208 = scmp.lt.s32.totalorder %s12, 1
        %s209 = scalar_select %p208, %s12, 1
        %s210 = smul.addr %s209, 8
        %s211 = smul.addr %s210, 4
        %s212 = scalar_lea.vmem %s0, %s211
      $region36: #{basic_block_forward.7} parent=31 // pred_fallthru
        _
      // Predicated region
      $region37: #{basic_block_forward.7} parent=31 // pred_check
        %p213 = pneg %p58
      $region38: #{basic_block_forward.7} parent=31 // pred_check_branch
        %215 = sbr.rel (%p213) target = $region40
      $region39: #{basic_block_forward.7} parent=31 // pred_region
        %p216 = scmp.lt.s32.totalorder %s12, 1
        %s217 = scalar_select %p216, %s12, 1
        %s218 = smul.addr %s217, 8
        %s219 = smul.addr %s218, 4
        %s220 = scalar_lea.vmem %s1, %s219
      $region40: #{basic_block_forward.7} parent=31 // pred_fallthru
        _
    $region32: #{basic_block_forward.7} parent=5 // pred_fallthru
      _
    %p221 = scmp.le.s32.totalorder 1, %s12
    %p222 = scmp.lt.s32.totalorder %s12, 3
    %p223 = pnand %p221, %p222
    %p224 = pneg %p223
    // Predicated region
    $region41: #{basic_block_forward.7} parent=5 // pred_check
      _
    $region42: #{basic_block_forward.7} parent=5 // pred_check_branch
      %226 = sbr.rel (%p223) target = $region44
    $region43: #{basic_block_forward.7} parent=5 // pred_region
      %s227 = ssub.s32 %s12, 1
      %p228 = scmp.lt.s32.totalorder %s17, 1
      %s229 = scalar_select %p228, %s17, 1
      %s230 = smul.addr %s229, 8
      %s231 = smul.addr %s230, 4
      %s232 = scalar_lea.vmem %s0, %s231
      %p233 = pneg %p38
      %p234 = pneg %p35
      %p235 = scmp.lt.s32.totalorder %s17, 1
      %s236 = scalar_select %p235, %s17, 1
      %s237 = smul.addr %s236, 8
      %s238 = smul.addr %s237, 4
      %s239 = scalar_lea.vmem %s1, %s238
      %p240 = pneg %p64
      %p241 = pneg %p61
      %p242 = pneg %p85
      %p243 = pneg %p82
      %p244 = pneg %p106
      %p245 = pneg %p103
      %p246 = pneg %p127
      %p247 = pneg %p124
      %p248 = pneg %p148
      %p249 = pneg %p145
      %p250 = pneg %p174
      %p251 = pneg %p171
      %p252 = scmp.lt.s32.totalorder %s17, 1
      %s253 = scalar_select %p252, %s17, 1
      %s254 = smul.addr %s253, 8
      %s255 = smul.addr %s254, 8
      %s256 = scalar_lea.vmem %s6, %s255
      %p257 = scmp.lt.s32.totalorder %s17, 1
      %s258 = scalar_select %p257, %s17, 1
      %s259 = smul.addr %s258, 8
      %s260 = smul.addr %s259, 4
      %s261 = scalar_lea.vmem %s0, %s260
      %p262 = scmp.lt.s32.totalorder %s17, 1
      %s263 = scalar_select %p262, %s17, 1
      %s264 = smul.addr %s263, 8
      %s265 = smul.addr %s264, 4
      %s266 = scalar_lea.vmem %s1, %s265
      %p267 = scmp.lt.s32.totalorder %s17, 1
      %s268 = scalar_select %p267, %s17, 1
      %s269 = smul.addr %s268, 8
      %s270 = smul.addr %s269, 8
      %s271 = scalar_lea.vmem %s6, %s270
      %v272 = vld [vmem:[%s261] sm:$0xf]
      %v273 = vld [vmem:[%s261 + $0x4] sm:$0xf]
      %v274 = vld [vmem:[%s261 + $0x8] sm:$0xf]
      %v275 = vld [vmem:[%s261 + $0xc] sm:$0xf]
      %v276 = vld [vmem:[%s261 + $0x10] sm:$0xf]
      %v277 = vld [vmem:[%s261 + $0x14] sm:$0xf]
      %v278 = vld [vmem:[%s261 + $0x18] sm:$0xf]
      %v279 = vld [vmem:[%s261 + $0x1c] sm:$0xf]
      %v280 = vunpack.c.l.bf16 %v272
      %v281 = vunpack.c.l.bf16 %v273
      %v282 = vunpack.c.l.bf16 %v274
      %v283 = vunpack.c.l.bf16 %v275
      %v284 = vunpack.c.l.bf16 %v276
      %v285 = vunpack.c.l.bf16 %v277
      %v286 = vunpack.c.l.bf16 %v278
      %v287 = vunpack.c.l.bf16 %v279
      %v288 = vld [vmem:[%s2] sm:$0x1]
      %v290 = vlaneseq
      %v291 = vshrl.u32 %v290, 7
      %v292 = vsub.s32 0, %v291
      %v293 = vrot.slane %v288, %v292
      %v295 = vmul.f32 %v280, %v293
      %v296 = vmul.f32 %v281, %v293
      %v297 = vmul.f32 %v282, %v293
      %v298 = vmul.f32 %v283, %v293
      %v299 = vmul.f32 %v284, %v293
      %v300 = vmul.f32 %v285, %v293
      %v301 = vmul.f32 %v286, %v293
      %v302 = vmul.f32 %v287, %v293
      %v303 = vld [vmem:[%s3] sm:$0x1]
      %v305 = vlaneseq
      %v306 = vshrl.u32 %v305, 7
      %v307 = vsub.s32 0, %v306
      %v308 = vrot.slane %v303, %v307
      %v310 = vadd.f32 %v295, %v308
      %v311 = vadd.f32 %v296, %v308
      %v312 = vadd.f32 %v297, %v308
      %v313 = vadd.f32 %v298, %v308
      %v314 = vadd.f32 %v299, %v308
      %v315 = vadd.f32 %v300, %v308
      %v316 = vadd.f32 %v301, %v308
      %v317 = vadd.f32 %v302, %v308
      %v318 = vld [vmem:[%s266] sm:$0xf]
      %v319 = vld [vmem:[%s266 + $0x4] sm:$0xf]
      %v320 = vld [vmem:[%s266 + $0x8] sm:$0xf]
      %v321 = vld [vmem:[%s266 + $0xc] sm:$0xf]
      %v322 = vld [vmem:[%s266 + $0x10] sm:$0xf]
      %v323 = vld [vmem:[%s266 + $0x14] sm:$0xf]
      %v324 = vld [vmem:[%s266 + $0x18] sm:$0xf]
      %v325 = vld [vmem:[%s266 + $0x1c] sm:$0xf]
      %v326 = vunpack.c.l.bf16 %v318
      %v327 = vunpack.c.l.bf16 %v319
      %v328 = vunpack.c.l.bf16 %v320
      %v329 = vunpack.c.l.bf16 %v321
      %v330 = vunpack.c.l.bf16 %v322
      %v331 = vunpack.c.l.bf16 %v323
      %v332 = vunpack.c.l.bf16 %v324
      %v333 = vunpack.c.l.bf16 %v325
      %v334 = vld [vmem:[%s4] sm:$0x1]
      %v336 = vlaneseq
      %v337 = vshrl.u32 %v336, 7
      %v338 = vsub.s32 0, %v337
      %v339 = vrot.slane %v334, %v338
      %v341 = vmul.f32 %v326, %v339
      %v342 = vmul.f32 %v327, %v339
      %v343 = vmul.f32 %v328, %v339
      %v344 = vmul.f32 %v329, %v339
      %v345 = vmul.f32 %v330, %v339
      %v346 = vmul.f32 %v331, %v339
      %v347 = vmul.f32 %v332, %v339
      %v348 = vmul.f32 %v333, %v339
      %v349 = vld [vmem:[%s5] sm:$0x1]
      %v351 = vlaneseq
      %v352 = vshrl.u32 %v351, 7
      %v353 = vsub.s32 0, %v352
      %v354 = vrot.slane %v349, %v353
      %v356 = vadd.f32 %v341, %v354
      %v357 = vadd.f32 %v342, %v354
      %v358 = vadd.f32 %v343, %v354
      %v359 = vadd.f32 %v344, %v354
      %v360 = vadd.f32 %v345, %v354
      %v361 = vadd.f32 %v346, %v354
      %v362 = vadd.f32 %v347, %v354
      %v363 = vadd.f32 %v348, %v354
      %v364 = vadd.f32 %v310, %v356
      %v365 = vadd.f32 %v311, %v357
      %v366 = vadd.f32 %v312, %v358
      %v367 = vadd.f32 %v313, %v359
      %v368 = vadd.f32 %v314, %v360
      %v369 = vadd.f32 %v315, %v361
      %v370 = vadd.f32 %v316, %v362
      %v371 = vadd.f32 %v317, %v363
      %v372 = vmax.f32 %v364, 0.0
      %v373 = vmax.f32 %v365, 0.0
      %v374 = vmax.f32 %v366, 0.0
      %v375 = vmax.f32 %v367, 0.0
      %v376 = vmax.f32 %v368, 0.0
      %v377 = vmax.f32 %v369, 0.0
      %v378 = vmax.f32 %v370, 0.0
      %v379 = vmax.f32 %v371, 0.0
      %380 = vst [vmem:[%s271] sm:$0xff] %v372
      %381 = vst [vmem:[%s271 + $0x8] sm:$0xff] %v373
      %382 = vst [vmem:[%s271 + $0x10] sm:$0xff] %v374
      %383 = vst [vmem:[%s271 + $0x18] sm:$0xff] %v375
      %384 = vst [vmem:[%s271 + $0x20] sm:$0xff] %v376
      %385 = vst [vmem:[%s271 + $0x28] sm:$0xff] %v377
      %386 = vst [vmem:[%s271 + $0x30] sm:$0xff] %v378
      %387 = vst [vmem:[%s271 + $0x38] sm:$0xff] %v379
      %p388 = scmp.lt.s32.totalorder %s17, 1
      %s389 = scalar_select %p388, %s17, 1
      %s390 = smul.addr %s389, 8
      %s391 = smul.addr %s390, 8
      %s392 = scalar_lea.vmem %s6, %s391
      // Predicated region
      $region45: #{basic_block_forward.7} parent=43 // pred_check
        %p393 = pneg %p171
      $region46: #{basic_block_forward.7} parent=43 // pred_check_branch
        %395 = sbr.rel (%p393) target = $region48
      $region47: #{basic_block_forward.7} parent=43 // pred_region
        _
      $region48: #{basic_block_forward.7} parent=43 // pred_fallthru
        _
    $region44: #{basic_block_forward.7} parent=5 // pred_fallthru
      _
    %p396 = scmp.le.s32.totalorder 2, %s12
    // Predicated region
    $region49: #{basic_block_forward.7} parent=5 // pred_check
      %p397 = pneg %p396
    $region50: #{basic_block_forward.7} parent=5 // pred_check_branch
      %399 = sbr.rel (%p397) target = $region52
    $region51: #{basic_block_forward.7} parent=5 // pred_region
      %s400 = ssub.s32 %s12, 2
      // Predicated region
      $region53: #{basic_block_forward.7} parent=51 // pred_check
        %p401 = pneg %p177
      $region54: #{basic_block_forward.7} parent=51 // pred_check_branch
        %403 = sbr.rel (%p401) target = $region56
      $region55: #{basic_block_forward.7} parent=51 // pred_region
        %p404 = scmp.lt.s32.totalorder %s18, 1
        %s405 = scalar_select %p404, %s18, 1
        %s406 = smul.addr %s405, 8
        %s407 = smul.addr %s406, 8
        %s408 = scalar_lea.vmem %s6, %s407
      $region56: #{basic_block_forward.7} parent=51 // pred_fallthru
        _
    $region52: #{basic_block_forward.7} parent=5 // pred_fallthru
      _
  $region6: #{basic_block_forward.7} parent=0 // loop_footer
    %s16 = sadd.s32 1, %s12
  $region7: #{basic_block_forward.7} parent=0 // loop_footer_branch
    %11 = sbr.rel target = $region3
  $region8: #{basic_block_forward.7} parent=0 // loop_exit
    _

// kernel: basic_block_forward.5
$region0: #{basic_block_forward.5}
  #allocation0 [shape = 'u32[]', space=smem, size = 0x4, offset = 0x4, fixed_abs, tag = 'smem constant byte address 0x4 - core index']
  #allocation1 [shape = 'u32[144,128]{1,0:T(1,128)}', space=vmem, size = 0x12000, scoped, tag = 'internal scratch']
  #allocation2 [shape = 'bf16[96,128]{1,0:T(8,128)(2,1)}', space=vmem, size = 0x6000, scoped, tag = 'scratch operand']
  %s0 = inlined_call_operand.vmem [shape: bf16[2,96,128], index: 0, kind: input, shape index: {}]
  %s1 = inlined_call_operand.vmem [shape: bf16[1152,128], index: 1, kind: input, shape index: {}]
  %s2 = inlined_call_operand.vmem [shape: f32[1,128], index: 2, kind: input, shape index: {}]
  %s3 = inlined_call_operand.vmem [shape: f32[1,128], index: 3, kind: input, shape index: {}]
  %s4 = inlined_call_operand.vmem [shape: bf16[2,64,128], index: 4, kind: output, shape index: {0}]
  %s5 = inlined_call_operand.vmem [shape: f32[2,2,128], index: 5, kind: output, shape index: {1}]
  %6 = xla_tuple %s4, %s5
  %s7 = sld [smem:[#allocation0]]
  $region57: #{basic_block_forward.5} parent=0
    _
  %s9 = ssub.s32 1, %s7
  %s10 = scalar_select 0, %s9, %s7
  loop: start=0, step=1, limit=4
  $region2: #{basic_block_forward.5} parent=0 // loop_pre_header
    _
  $region3: #{basic_block_forward.5} parent=0 // loop_header
    %s12 = sphi 0, %s16
    %p13 = scmp.ge.s32.totalorder %s12, 4
    %s22 = sphi 0, %s24
    %s25 = sphi 0, %s22
    %s26 = sphi 0, %s25
    %s42 = sphi 0, %s26
    %s46 = sphi 0, %s46
    %s48 = sphi 0, %s46
    %s49 = sphi 0, %s48
    %s63 = sphi 0, %s49
    %s67 = sphi 0, %s67
    %s69 = sphi 0, %s67
    %s70 = sphi 0, %s69
    %s84 = sphi 0, %s70
    %s88 = sphi 0, %s88
    %s90 = sphi 0, %s88
    %s91 = sphi 0, %s90
    %s105 = sphi 0, %s91
    %s111 = sphi 0, %s113
    %s114 = sphi 0, %s111
    %s115 = sphi 0, %s114
    %s131 = sphi 0, %s115
    %s137 = sphi 0, %s139
    %s140 = sphi 0, %s137
    %s141 = sphi 0, %s140
    %s157 = sphi 0, %s141
  $region4: #{basic_block_forward.5} parent=0 // loop_header_branch
    %15 = sbr.rel (%p13) target = $region8
  $region5: #{basic_block_forward.5} parent=0 // loop_body
    %s17 = ssub.s32 %s12, 1
    %s18 = ssub.s32 %s12, 2
    %s19 = sadd.s32 %s12, 1
    %s20 = ssub.s32 %s12, %s19
    %p21 = scmp.eq.s32.totalorder %s20, 0
    %s23 = sadd.s32 %s22, 1
    %s24 = scalar_select %p21, %s22, %s23
    %p27 = pneg %p21
    %p28 = scmp.eq.s32.totalorder %s12, 1
    %p29 = por %p27, %p28
    %p30 = scmp.ne.s32.totalorder %s22, %s25
    %p31 = scmp.eq.s32.totalorder %s12, 0
    %p32 = por %p30, %p31
    %p33 = scmp.ne.s32.totalorder %s22, %s25
    %p34 = scmp.eq.s32.totalorder %s17, 1
    %p35 = por %p33, %p34
    %p36 = scmp.ne.s32.totalorder %s25, %s26
    %p37 = scmp.eq.s32.totalorder %s17, 0
    %p38 = por %p36, %p37
    %p39 = scmp.ne.s32.totalorder %s25, %s26
    %p40 = scmp.eq.s32.totalorder %s18, 1
    %p41 = por %p39, %p40
    %p43 = scmp.ne.s32.totalorder %s26, %s42
    %p44 = scmp.eq.s32.totalorder %s18, 0
    %p45 = por %p43, %p44
    %s47 = sadd.s32 %s46, 1
    %p50 = scmp.eq.s32.totalorder %s12, 1
    %p51 = scmp.ne.s32.totalorder %s46, %s48
    %p52 = scmp.eq.s32.totalorder %s12, 0
    %p53 = por %p51, %p52
    %p54 = scmp.ne.s32.totalorder %s46, %s48
    %p55 = scmp.eq.s32.totalorder %s17, 1
    %p56 = por %p54, %p55
    %p57 = scmp.ne.s32.totalorder %s48, %s49
    %p58 = scmp.eq.s32.totalorder %s17, 0
    %p59 = por %p57, %p58
    %p60 = scmp.ne.s32.totalorder %s48, %s49
    %p61 = scmp.eq.s32.totalorder %s18, 1
    %p62 = por %p60, %p61
    %p64 = scmp.ne.s32.totalorder %s49, %s63
    %p65 = scmp.eq.s32.totalorder %s18, 0
    %p66 = por %p64, %p65
    %s68 = sadd.s32 %s67, 1
    %p71 = scmp.eq.s32.totalorder %s12, 1
    %p72 = scmp.ne.s32.totalorder %s67, %s69
    %p73 = scmp.eq.s32.totalorder %s12, 0
    %p74 = por %p72, %p73
    %p75 = scmp.ne.s32.totalorder %s67, %s69
    %p76 = scmp.eq.s32.totalorder %s17, 1
    %p77 = por %p75, %p76
    %p78 = scmp.ne.s32.totalorder %s69, %s70
    %p79 = scmp.eq.s32.totalorder %s17, 0
    %p80 = por %p78, %p79
    %p81 = scmp.ne.s32.totalorder %s69, %s70
    %p82 = scmp.eq.s32.totalorder %s18, 1
    %p83 = por %p81, %p82
    %p85 = scmp.ne.s32.totalorder %s70, %s84
    %p86 = scmp.eq.s32.totalorder %s18, 0
    %p87 = por %p85, %p86
    %s89 = sadd.s32 %s88, 1
    %p92 = scmp.eq.s32.totalorder %s12, 1
    %p93 = scmp.ne.s32.totalorder %s88, %s90
    %p94 = scmp.eq.s32.totalorder %s12, 0
    %p95 = por %p93, %p94
    %p96 = scmp.ne.s32.totalorder %s88, %s90
    %p97 = scmp.eq.s32.totalorder %s17, 1
    %p98 = por %p96, %p97
    %p99 = scmp.ne.s32.totalorder %s90, %s91
    %p100 = scmp.eq.s32.totalorder %s17, 0
    %p101 = por %p99, %p100
    %p102 = scmp.ne.s32.totalorder %s90, %s91
    %p103 = scmp.eq.s32.totalorder %s18, 1
    %p104 = por %p102, %p103
    %p106 = scmp.ne.s32.totalorder %s91, %s105
    %p107 = scmp.eq.s32.totalorder %s18, 0
    %p108 = por %p106, %p107
    %s109 = ssub.s32 %s12, %s19
    %p110 = scmp.eq.s32.totalorder %s109, 0
    %s112 = sadd.s32 %s111, 1
    %s113 = scalar_select %p110, %s111, %s112
    %p116 = pneg %p110
    %p117 = scmp.eq.s32.totalorder %s12, 1
    %p118 = por %p116, %p117
    %p119 = scmp.ne.s32.totalorder %s111, %s114
    %p120 = scmp.eq.s32.totalorder %s12, 0
    %p121 = por %p119, %p120
    %p122 = scmp.ne.s32.totalorder %s111, %s114
    %p123 = scmp.eq.s32.totalorder %s17, 1
    %p124 = por %p122, %p123
    %p125 = scmp.ne.s32.totalorder %s114, %s115
    %p126 = scmp.eq.s32.totalorder %s17, 0
    %p127 = por %p125, %p126
    %p128 = scmp.ne.s32.totalorder %s114, %s115
    %p129 = scmp.eq.s32.totalorder %s18, 1
    %p130 = por %p128, %p129
    %p132 = scmp.ne.s32.totalorder %s115, %s131
    %p133 = scmp.eq.s32.totalorder %s18, 0
    %p134 = por %p132, %p133
    %s135 = ssub.s32 %s12, %s19
    %p136 = scmp.eq.s32.totalorder %s135, 0
    %s138 = sadd.s32 %s137, 1
    %s139 = scalar_select %p136, %s137, %s138
    %p142 = pneg %p136
    %p143 = scmp.eq.s32.totalorder %s12, 1
    %p144 = por %p142, %p143
    %p145 = scmp.ne.s32.totalorder %s137, %s140
    %p146 = scmp.eq.s32.totalorder %s12, 0
    %p147 = por %p145, %p146
    %p148 = scmp.ne.s32.totalorder %s137, %s140
    %p149 = scmp.eq.s32.totalorder %s17, 1
    %p150 = por %p148, %p149
    %p151 = scmp.ne.s32.totalorder %s140, %s141
    %p152 = scmp.eq.s32.totalorder %s17, 0
    %p153 = por %p151, %p152
    %p154 = scmp.ne.s32.totalorder %s140, %s141
    %p155 = scmp.eq.s32.totalorder %s18, 1
    %p156 = por %p154, %p155
    %p158 = scmp.ne.s32.totalorder %s141, %s157
    %p159 = scmp.eq.s32.totalorder %s18, 0
    %p160 = por %p158, %p159
    %p161 = scmp.le.s32.totalorder 1, %s12
    %p162 = scmp.lt.s32.totalorder %s12, 3
    %p163 = pnand %p161, %p162
    %p164 = pneg %p163
    // Predicated region
    $region9: #{basic_block_forward.5} parent=5 // pred_check
      _
    $region10: #{basic_block_forward.5} parent=5 // pred_check_branch
      %166 = sbr.rel (%p163) target = $region12
    $region11: #{basic_block_forward.5} parent=5 // pred_region
      %s167 = ssub.s32 %s12, 1
      // Predicated region
      $region13: #{basic_block_forward.5} parent=11 // pred_check
        %p168 = pneg %p59
      $region14: #{basic_block_forward.5} parent=11 // pred_check_branch
        %170 = sbr.rel (%p168) target = $region16
      $region15: #{basic_block_forward.5} parent=11 // pred_region
        _
      $region16: #{basic_block_forward.5} parent=11 // pred_fallthru
        _
      // Predicated region
      $region17: #{basic_block_forward.5} parent=11 // pred_check
        %p171 = pneg %p80
      $region18: #{basic_block_forward.5} parent=11 // pred_check_branch
        %173 = sbr.rel (%p171) target = $region20
      $region19: #{basic_block_forward.5} parent=11 // pred_region
        _
      $region20: #{basic_block_forward.5} parent=11 // pred_fallthru
        _
      // Predicated region
      $region21: #{basic_block_forward.5} parent=11 // pred_check
        %p174 = pneg %p101
      $region22: #{basic_block_forward.5} parent=11 // pred_check_branch
        %176 = sbr.rel (%p174) target = $region24
      $region23: #{basic_block_forward.5} parent=11 // pred_region
        _
      $region24: #{basic_block_forward.5} parent=11 // pred_fallthru
        _
    $region12: #{basic_block_forward.5} parent=5 // pred_fallthru
      _
    %p177 = scmp.lt.s32.totalorder %s12, 2
    // Predicated region
    $region25: #{basic_block_forward.5} parent=5 // pred_check
      %p178 = pneg %p177
    $region26: #{basic_block_forward.5} parent=5 // pred_check_branch
      %180 = sbr.rel (%p178) target = $region28
    $region27: #{basic_block_forward.5} parent=5 // pred_region
      // Predicated region
      $region29: #{basic_block_forward.5} parent=27 // pred_check
        %p181 = pneg %p32
      $region30: #{basic_block_forward.5} parent=27 // pred_check_branch
        %183 = sbr.rel (%p181) target = $region32
      $region31: #{basic_block_forward.5} parent=27 // pred_region
        %p184 = scmp.lt.s32.totalorder %s12, 1
        %s185 = scalar_select %p184, %s12, 1
        %s186 = smul.addr %s185, 12
        %s187 = smul.addr %s186, 4
        %s188 = scalar_lea.vmem %s0, %s187
      $region32: #{basic_block_forward.5} parent=27 // pred_fallthru
        _
    $region28: #{basic_block_forward.5} parent=5 // pred_fallthru
      _
    %p189 = scmp.le.s32.totalorder 1, %s12
    %p190 = scmp.lt.s32.totalorder %s12, 3
    %p191 = pnand %p189, %p190
    %p192 = pneg %p191
    // Predicated region
    $region33: #{basic_block_forward.5} parent=5 // pred_check
      _
    $region34: #{basic_block_forward.5} parent=5 // pred_check_branch
      %194 = sbr.rel (%p191) target = $region36
    $region35: #{basic_block_forward.5} parent=5 // pred_region
      %s195 = ssub.s32 %s12, 1
      %p196 = scmp.lt.s32.totalorder %s17, 1
      %s197 = scalar_select %p196, %s17, 1
      %s198 = smul.addr %s197, 12
      %s199 = smul.addr %s198, 4
      %s200 = scalar_lea.vmem %s0, %s199
      %p201 = pneg %p38
      %p202 = pneg %p35
      %p203 = pneg %p59
      %p204 = pneg %p56
      %p205 = pneg %p80
      %p206 = pneg %p77
      %p207 = pneg %p101
      %p208 = pneg %p98
      %p209 = pneg %p127
      %p210 = pneg %p124
      %p211 = scmp.lt.s32.totalorder %s17, 1
      %s212 = scalar_select %p211, %s17, 1
      %s213 = smul.addr %s212, 8
      %s214 = smul.addr %s213, 4
      %s215 = scalar_lea.vmem %s4, %s214
      %p216 = pneg %p153
      %p217 = pneg %p150
      %p218 = scmp.lt.s32.totalorder %s17, 1
      %s219 = scalar_select %p218, %s17, 1
      %s220 = smul.addr %s219, 2
      %s221 = scalar_lea.vmem %s5, %s220
      %p222 = scmp.lt.s32.totalorder %s17, 1
      %s223 = scalar_select %p222, %s17, 1
      %s224 = smul.addr %s223, 12
      %s225 = smul.addr %s224, 4
      %s226 = scalar_lea.vmem %s0, %s225
      %p227 = scmp.lt.s32.totalorder %s17, 1
      %s228 = scalar_select %p227, %s17, 1
      %s229 = smul.addr %s228, 8
      %s230 = smul.addr %s229, 4
      %s231 = scalar_lea.vmem %s4, %s230
      %p232 = scmp.lt.s32.totalorder %s17, 1
      %s233 = scalar_select %p232, %s17, 1
      %s234 = smul.addr %s233, 2
      %s235 = scalar_lea.vmem %s5, %s234
      %v239 = vld [vmem:[%s226] sm:$0xf]
      %v240 = vld [vmem:[%s226 + $0x4] sm:$0xf]
      %v241 = vld [vmem:[%s226 + $0x8] sm:$0xf]
      %v242 = vld [vmem:[%s226 + $0xc] sm:$0xf]
      %v243 = vld [vmem:[%s226 + $0x10] sm:$0xf]
      %v244 = vld [vmem:[%s226 + $0x14] sm:$0xf]
      %v245 = vld [vmem:[%s226 + $0x18] sm:$0xf]
      %v246 = vld [vmem:[%s226 + $0x1c] sm:$0xf]
      %v247 = vld [vmem:[%s226 + $0x20] sm:$0xf]
      %v248 = vld [vmem:[%s226 + $0x24] sm:$0xf]
      %v249 = vld [vmem:[%s226 + $0x28] sm:$0xf]
      %v250 = vld [vmem:[%s226 + $0x2c] sm:$0xf]
      %v251 = vunpack.c.l.bf16 %v239
      %v252 = vunpack.c.l.bf16 %v240
      %v253 = vunpack.c.l.bf16 %v241
      %v254 = vunpack.c.l.bf16 %v242
      %v255 = vunpack.c.l.bf16 %v243
      %v256 = vunpack.c.l.bf16 %v244
      %v257 = vunpack.c.l.bf16 %v245
      %v258 = vunpack.c.l.bf16 %v246
      %v259 = vunpack.c.l.bf16 %v247
      %v260 = vunpack.c.l.bf16 %v248
      %v261 = vunpack.c.l.bf16 %v249
      %v262 = vunpack.c.l.bf16 %v250
      %v263 = vld [vmem:[%s2] sm:$0x1]
      %v265 = vlaneseq
      %v266 = vshrl.u32 %v265, 7
      %v267 = vsub.s32 0, %v266
      %v268 = vrot.slane %v263, %v267
      %v270 = vmul.f32 %v251, %v268
      %v271 = vmul.f32 %v252, %v268
      %v272 = vmul.f32 %v253, %v268
      %v273 = vmul.f32 %v254, %v268
      %v274 = vmul.f32 %v255, %v268
      %v275 = vmul.f32 %v256, %v268
      %v276 = vmul.f32 %v257, %v268
      %v277 = vmul.f32 %v258, %v268
      %v278 = vmul.f32 %v259, %v268
      %v279 = vmul.f32 %v260, %v268
      %v280 = vmul.f32 %v261, %v268
      %v281 = vmul.f32 %v262, %v268
      %v282 = vld [vmem:[%s3] sm:$0x1]
      %v284 = vlaneseq
      %v285 = vshrl.u32 %v284, 7
      %v286 = vsub.s32 0, %v285
      %v287 = vrot.slane %v282, %v286
      %v289 = vadd.f32 %v270, %v287
      %v290 = vadd.f32 %v271, %v287
      %v291 = vadd.f32 %v272, %v287
      %v292 = vadd.f32 %v273, %v287
      %v293 = vadd.f32 %v274, %v287
      %v294 = vadd.f32 %v275, %v287
      %v295 = vadd.f32 %v276, %v287
      %v296 = vadd.f32 %v277, %v287
      %v297 = vadd.f32 %v278, %v287
      %v298 = vadd.f32 %v279, %v287
      %v299 = vadd.f32 %v280, %v287
      %v300 = vadd.f32 %v281, %v287
      %v301 = vmax.f32 %v289, 0.0
      %v302 = vmax.f32 %v290, 0.0
      %v303 = vmax.f32 %v291, 0.0
      %v304 = vmax.f32 %v292, 0.0
      %v305 = vmax.f32 %v293, 0.0
      %v306 = vmax.f32 %v294, 0.0
      %v307 = vmax.f32 %v295, 0.0
      %v308 = vmax.f32 %v296, 0.0
      %v309 = vmax.f32 %v297, 0.0
      %v310 = vmax.f32 %v298, 0.0
      %v311 = vmax.f32 %v299, 0.0
      %v312 = vmax.f32 %v300, 0.0
      %v313 = vpack.c.bf16 %v302, %v301
      %v314 = vpack.c.bf16 %v304, %v303
      %v315 = vpack.c.bf16 %v306, %v305
      %v316 = vpack.c.bf16 %v308, %v307
      %v317 = vpack.c.bf16 %v310, %v309
      %v318 = vpack.c.bf16 %v312, %v311
      %v325 = vunpack.c.l.b16 %v313
      %v326 = vunpack.c.h.b16 %v313
      %v327 = vunpack.c.l.b16 %v314
      %v328 = vunpack.c.h.b16 %v314
      %v329 = vunpack.c.l.b16 %v315
      %v330 = vunpack.c.h.b16 %v315
      %v331 = vunpack.c.l.b16 %v316
      %v332 = vunpack.c.h.b16 %v316
      %v333 = vunpack.c.l.b16 %v317
      %v334 = vunpack.c.h.b16 %v317
      %v335 = vunpack.c.l.b16 %v318
      %v336 = vunpack.c.h.b16 %v318
      %v337 = vpack.c.b16 %v325, %v325
      %v338 = vpack.c.b16 %v326, %v326
      %v339 = vpack.c.b16 %v327, %v327
      %v340 = vpack.c.b16 %v328, %v328
      %v341 = vpack.c.b16 %v329, %v329
      %v342 = vpack.c.b16 %v330, %v330
      %v343 = vpack.c.b16 %v331, %v331
      %v344 = vpack.c.b16 %v332, %v332
      %v345 = vpack.c.b16 %v333, %v333
      %v346 = vpack.c.b16 %v334, %v334
      %v347 = vpack.c.b16 %v335, %v335
      %v348 = vpack.c.b16 %v336, %v336
      %361 = vst [vmem:[#allocation2] sm:$0xf] %v337
      %362 = vst [vmem:[#allocation2 + $0x4] sm:$0xf] %v338
      %363 = vst [vmem:[#allocation2 + $0x8] sm:$0xf] %v339
      %364 = vst [vmem:[#allocation2 + $0xc] sm:$0xf] %v340
      %365 = vst [vmem:[#allocation2 + $0x10] sm:$0xf] %v341
      %366 = vst [vmem:[#allocation2 + $0x14] sm:$0xf] %v342
      %367 = vst [vmem:[#allocation2 + $0x18] sm:$0xf] %v343
      %368 = vst [vmem:[#allocation2 + $0x1c] sm:$0xf] %v344
      %369 = vst [vmem:[#allocation2 + $0x20] sm:$0xf] %v345
      %370 = vst [vmem:[#allocation2 + $0x24] sm:$0xf] %v346
      %371 = vst [vmem:[#allocation2 + $0x28] sm:$0xf] %v347
      %372 = vst [vmem:[#allocation2 + $0x2c] sm:$0xf] %v348
      %v373 = vlaneseq
      %v374 = vshrl.u32 %v373, 7
      %v375 = vadd.s32 %v374, 8
      %v376 = vadd.s32 %v374, 16
      %v377 = vadd.s32 %v374, 24
      %v378 = vadd.s32 %v374, 32
      %v379 = vadd.s32 %v374, 40
      %v380 = vadd.s32 %v374, 48
      %v381 = vadd.s32 %v374, 56
      %vm382 = vcmp.lt.s32.totalorder %v374, 0
      %v383 = vsub.s32 0, %v374
      %v384 = vsel %vm382, %v383, %v374
      %v385 = vshrl.u32 %v384, 3
      %v386 = vand.u32 %v384, 7
      %v387 = vsub.s32 0, %v386
      %v388 = vsel %vm382, %v387, %v386
      %vm389 = vcmp.lt.s32.totalorder %v375, 0
      %v390 = vsub.s32 0, %v375
      %v391 = vsel %vm389, %v390, %v375
      %v392 = vshrl.u32 %v391, 3
      %v393 = vand.u32 %v391, 7
      %v394 = vsub.s32 0, %v393
      %v395 = vsel %vm389, %v394, %v393
      %vm396 = vcmp.lt.s32.totalorder %v376, 0
      %v397 = vsub.s32 0, %v376
      %v398 = vsel %vm396, %v397, %v376
      %v399 = vshrl.u32 %v398, 3
      %v400 = vand.u32 %v398, 7
      %v401 = vsub.s32 0, %v400
      %v402 = vsel %vm396, %v401, %v400
      %vm403 = vcmp.lt.s32.totalorder %v377, 0
      %v404 = vsub.s32 0, %v377
      %v405 = vsel %vm403, %v404, %v377
      %v406 = vshrl.u32 %v405, 3
      %v407 = vand.u32 %v405, 7
      %v408 = vsub.s32 0, %v407
      %v409 = vsel %vm403, %v408, %v407
      %vm410 = vcmp.lt.s32.totalorder %v378, 0
      %v411 = vsub.s32 0, %v378
      %v412 = vsel %vm410, %v411, %v378
      %v413 = vshrl.u32 %v412, 3
      %v414 = vand.u32 %v412, 7
      %v415 = vsub.s32 0, %v414
      %v416 = vsel %vm410, %v415, %v414
      %vm417 = vcmp.lt.s32.totalorder %v379, 0
      %v418 = vsub.s32 0, %v379
      %v419 = vsel %vm417, %v418, %v379
      %v420 = vshrl.u32 %v419, 3
      %v421 = vand.u32 %v419, 7
      %v422 = vsub.s32 0, %v421
      %v423 = vsel %vm417, %v422, %v421
      %vm424 = vcmp.lt.s32.totalorder %v380, 0
      %v425 = vsub.s32 0, %v380
      %v426 = vsel %vm424, %v425, %v380
      %v427 = vshrl.u32 %v426, 3
      %v428 = vand.u32 %v426, 7
      %v429 = vsub.s32 0, %v428
      %v430 = vsel %vm424, %v429, %v428
      %vm431 = vcmp.lt.s32.totalorder %v381, 0
      %v432 = vsub.s32 0, %v381
      %v433 = vsel %vm431, %v432, %v381
      %v434 = vshrl.u32 %v433, 3
      %v435 = vand.u32 %v433, 7
      %v436 = vsub.s32 0, %v435
      %v437 = vsel %vm431, %v436, %v435
      %vm438 = vcmp.ne.s32.totalorder %v388, 0
      %vm439 = vcmp.ne.s32.totalorder %v395, 0
      %vm440 = vcmp.ne.s32.totalorder %v402, 0
      %vm441 = vcmp.ne.s32.totalorder %v409, 0
      %vm442 = vcmp.ne.s32.totalorder %v416, 0
      %vm443 = vcmp.ne.s32.totalorder %v423, 0
      %vm444 = vcmp.ne.s32.totalorder %v430, 0
      %vm445 = vcmp.ne.s32.totalorder %v437, 0
      %vm446 = vcmp.lt.s32.totalorder %v388, 0
      %vm447 = vcmp.lt.s32.totalorder %v395, 0
      %vm448 = vcmp.lt.s32.totalorder %v402, 0
      %vm449 = vcmp.lt.s32.totalorder %v409, 0
      %vm450 = vcmp.lt.s32.totalorder %v416, 0
      %vm451 = vcmp.lt.s32.totalorder %v423, 0
      %vm452 = vcmp.lt.s32.totalorder %v430, 0
      %vm453 = vcmp.lt.s32.totalorder %v437, 0
      %vm454 = vmand %vm446, %vm438
      %vm455 = vmand %vm447, %vm439
      %vm456 = vmand %vm448, %vm440
      %vm457 = vmand %vm449, %vm441
      %vm458 = vmand %vm450, %vm442
      %vm459 = vmand %vm451, %vm443
      %vm460 = vmand %vm452, %vm444
      %vm461 = vmand %vm453, %vm445
      %v462 = vadd.s32 %v388, 8
      %v463 = vadd.s32 %v395, 8
      %v464 = vadd.s32 %v402, 8
      %v465 = vadd.s32 %v409, 8
      %v466 = vadd.s32 %v416, 8
      %v467 = vadd.s32 %v423, 8
      %v468 = vadd.s32 %v430, 8
      %v469 = vadd.s32 %v437, 8
      %v470 = vsel %vm454, %v462, %v388
      %v471 = vsel %vm455, %v463, %v395
      %v472 = vsel %vm456, %v464, %v402
      %v473 = vsel %vm457, %v465, %v409
      %v474 = vsel %vm458, %v466, %v416
      %v475 = vsel %vm459, %v467, %v423
      %v476 = vsel %vm460, %v468, %v430
      %v477 = vsel %vm461, %v469, %v437
      %vm478 = vcmp.ge.s32.totalorder %v374, 8
      %vm479 = vcmp.ge.s32.totalorder %v375, 8
      %vm480 = vcmp.ge.s32.totalorder %v376, 8
      %vm481 = vcmp.ge.s32.totalorder %v377, 8
      %vm482 = vcmp.ge.s32.totalorder %v378, 8
      %vm483 = vcmp.ge.s32.totalorder %v379, 8
      %vm484 = vcmp.ge.s32.totalorder %v380, 8
      %vm485 = vcmp.ge.s32.totalorder %v381, 8
      %vm486 = vcmp.lt.s32.totalorder %v374, 56
      %vm487 = vcmp.lt.s32.totalorder %v375, 56
      %vm488 = vcmp.lt.s32.totalorder %v376, 56
      %vm489 = vcmp.lt.s32.totalorder %v377, 56
      %vm490 = vcmp.lt.s32.totalorder %v378, 56
      %vm491 = vcmp.lt.s32.totalorder %v379, 56
      %vm492 = vcmp.lt.s32.totalorder %v380, 56
      %vm493 = vcmp.lt.s32.totalorder %v381, 56
      %vm494 = vcmp.ne.s32.totalorder %v470, 0
      %vm495 = vcmp.ne.s32.totalorder %v471, 0
      %vm496 = vcmp.ne.s32.totalorder %v472, 0
      %vm497 = vcmp.ne.s32.totalorder %v473, 0
      %vm498 = vcmp.ne.s32.totalorder %v474, 0
      %vm499 = vcmp.ne.s32.totalorder %v475, 0
      %vm500 = vcmp.ne.s32.totalorder %v476, 0
      %vm501 = vcmp.ne.s32.totalorder %v477, 0
      %vm502 = vcmp.ne.s32.totalorder %v470, 7
      %vm503 = vcmp.ne.s32.totalorder %v471, 7
      %vm504 = vcmp.ne.s32.totalorder %v472, 7
      %vm505 = vcmp.ne.s32.totalorder %v473, 7
      %vm506 = vcmp.ne.s32.totalorder %v474, 7
      %vm507 = vcmp.ne.s32.totalorder %v475, 7
      %vm508 = vcmp.ne.s32.totalorder %v476, 7
      %vm509 = vcmp.ne.s32.totalorder %v477, 7
      %v510 = vld [vmem:[#allocation2] sm:$0x8]
      %v511 = vld [vmem:[#allocation2 + $0x4] sm:$0xf]
      %v512 = vld [vmem:[#allocation2 + $0x8] sm:$0xf]
      %v513 = vld [vmem:[#allocation2 + $0xc] sm:$0xf]
      %v514 = vld [vmem:[#allocation2 + $0x10] sm:$0xf]
      %v515 = vld [vmem:[#allocation2 + $0x14] sm:$0xf]
      %v516 = vld [vmem:[#allocation2 + $0x18] sm:$0xf]
      %v517 = vld [vmem:[#allocation2 + $0x1c] sm:$0xf]
      %v518 = vld [vmem:[#allocation2 + $0x20] sm:$0xf]
      %vm519 = vmand %vm478, %vm494
      %vm520 = vmand %vm479, %vm495
      %vm521 = vmand %vm480, %vm496
      %vm522 = vmand %vm481, %vm497
      %vm523 = vmand %vm482, %vm498
      %vm524 = vmand %vm483, %vm499
      %vm525 = vmand %vm484, %vm500
      %vm526 = vmand %vm485, %vm501
      %v527 = vsel %vm519, 1, 0
      %v528 = vsel %vm520, 1, 0
      %v529 = vsel %vm521, 1, 0
      %v530 = vsel %vm522, 1, 0
      %v531 = vsel %vm523, 1, 0
      %v532 = vsel %vm524, 1, 0
      %v533 = vsel %vm525, 1, 0
      %v534 = vsel %vm526, 1, 0
      %vm535 = vcmp.eq.s32.totalorder %v527, 1
      %vm536 = vcmp.eq.s32.totalorder %v528, 1
      %vm537 = vcmp.eq.s32.totalorder %v529, 1
      %vm538 = vcmp.eq.s32.totalorder %v530, 1
      %vm539 = vcmp.eq.s32.totalorder %v531, 1
      %vm540 = vcmp.eq.s32.totalorder %v532, 1
      %vm541 = vcmp.eq.s32.totalorder %v533, 1
      %vm542 = vcmp.eq.s32.totalorder %v534, 1
      %vm543 = vmpackc.low %vm535, %vm535
      %vm544 = vmpackc.low %vm536, %vm536
      %vm545 = vmpackc.low %vm537, %vm537
      %vm546 = vmpackc.low %vm538, %vm538
      %vm547 = vmpackc.low %vm539, %vm539
      %vm548 = vmpackc.low %vm540, %vm540
      %vm549 = vmpackc.low %vm541, %vm541
      %vm550 = vmpackc.low %vm542, %vm542
      %v551 = vsel %vm543, 65537, 0
      %v552 = vsel %vm544, 65537, 0
      %v553 = vsel %vm545, 65537, 0
      %v554 = vsel %vm546, 65537, 0
      %v555 = vsel %vm547, 65537, 0
      %v556 = vsel %vm548, 65537, 0
      %v557 = vsel %vm549, 65537, 0
      %v558 = vsel %vm550, 65537, 0
      %vm559 = vsmask.f32 3328
      %vm560 = vsmask.f32 7440
      %vm561 = vmor %vm559, %vm560
      %v563 = vshll.u32 %v551, 16
      %v565 = vrot.slane %v563, 5
      %v566 = vshrl.u32 %v551, 16
      %v568 = vrot.slane %v566, 4
      %v569 = vor.u32 %v568, %v565
      %v570 = vrot.slane %v569, 4
      %v572 = vshll.u32 %v552, 16
      %v574 = vrot.slane %v572, 5
      %v575 = vsel %vm561, %v570, %v574
      %v576 = vshrl.u32 %v552, 16
      %v578 = vrot.slane %v576, 4
      %v579 = vor.u32 %v578, %v574
      %v580 = vrot.slane %v579, 4
      %v582 = vshll.u32 %v553, 16
      %v584 = vrot.slane %v582, 5
      %v585 = vsel %vm561, %v580, %v584
      %v586 = vshrl.u32 %v553, 16
      %v588 = vrot.slane %v586, 4
      %v589 = vor.u32 %v588, %v584
      %v590 = vrot.slane %v589, 4
      %v592 = vshll.u32 %v554, 16
      %v594 = vrot.slane %v592, 5
      %v595 = vsel %vm561, %v590, %v594
      %v596 = vshrl.u32 %v554, 16
      %v598 = vrot.slane %v596, 4
      %v599 = vor.u32 %v598, %v594
      %v600 = vrot.slane %v599, 4
      %v602 = vshll.u32 %v555, 16
      %v604 = vrot.slane %v602, 5
      %v605 = vsel %vm561, %v600, %v604
      %v606 = vshrl.u32 %v555, 16
      %v608 = vrot.slane %v606, 4
      %v609 = vor.u32 %v608, %v604
      %v610 = vrot.slane %v609, 4
      %v612 = vshll.u32 %v556, 16
      %v614 = vrot.slane %v612, 5
      %v615 = vsel %vm561, %v610, %v614
      %v616 = vshrl.u32 %v556, 16
      %v618 = vrot.slane %v616, 4
      %v619 = vor.u32 %v618, %v614
      %v620 = vrot.slane %v619, 4
      %v622 = vshll.u32 %v557, 16
      %v624 = vrot.slane %v622, 5
      %v625 = vsel %vm561, %v620, %v624
      %v626 = vshrl.u32 %v557, 16
      %v628 = vrot.slane %v626, 4
      %v629 = vor.u32 %v628, %v624
      %v630 = vrot.slane %v629, 4
      %v632 = vshll.u32 %v558, 16
      %v634 = vrot.slane %v632, 5
      %v635 = vsel %vm561, %v630, %v634
      %v636 = vshrl.u32 %v558, 16
      %v638 = vrot.slane %v636, 4
      %v639 = vor.u32 %v638, %v634
      %v640 = vrot.slane %v639, 4
      %vm641 = vcmp.ne.s16.totalorder %v565, 0
      %vm642 = vcmp.ne.s16.totalorder %v575, 0
      %vm643 = vcmp.ne.s16.totalorder %v585, 0
      %vm644 = vcmp.ne.s16.totalorder %v595, 0
      %vm645 = vcmp.ne.s16.totalorder %v605, 0
      %vm646 = vcmp.ne.s16.totalorder %v615, 0
      %vm647 = vcmp.ne.s16.totalorder %v625, 0
      %vm648 = vcmp.ne.s16.totalorder %v635, 0
      %vm649 = vcmp.ne.s16.totalorder %v640, 0
      %v650 = vsel %vm641, %v510, 0
      %v651 = vsel %vm642, %v511, 0
      %v652 = vsel %vm643, %v512, 0
      %v653 = vsel %vm644, %v513, 0
      %v654 = vsel %vm645, %v514, 0
      %v655 = vsel %vm646, %v515, 0
      %v656 = vsel %vm647, %v516, 0
      %v657 = vsel %vm648, %v517, 0
      %v658 = vsel %vm649, %v518, 0
      %v659 = vld [vmem:[%s1] sm:$0xf]
      %v660 = vld [vmem:[%s1 + $0x4] sm:$0xf]
      %v661 = vld [vmem:[%s1 + $0x8] sm:$0xf]
      %v662 = vld [vmem:[%s1 + $0xc] sm:$0xf]
      %v663 = vld [vmem:[%s1 + $0x10] sm:$0xf]
      %v664 = vld [vmem:[%s1 + $0x14] sm:$0xf]
      %v665 = vld [vmem:[%s1 + $0x18] sm:$0xf]
      %v666 = vld [vmem:[%s1 + $0x1c] sm:$0xf]
      %v667 = vld [vmem:[%s1 + $0x20] sm:$0xf]
      %v668 = vld [vmem:[%s1 + $0x24] sm:$0xf]
      %v669 = vld [vmem:[%s1 + $0x28] sm:$0xf]
      %v670 = vld [vmem:[%s1 + $0x2c] sm:$0xf]
      %v671 = vld [vmem:[%s1 + $0x30] sm:$0xf]
      %v672 = vld [vmem:[%s1 + $0x34] sm:$0xf]
      %v673 = vld [vmem:[%s1 + $0x38] sm:$0xf]
      %v674 = vld [vmem:[%s1 + $0x3c] sm:$0xf]
      %v675 = vsel %vm478, 1, 0
      %v676 = vsel %vm479, 1, 0
      %v677 = vsel %vm480, 1, 0
      %v678 = vsel %vm481, 1, 0
      %v679 = vsel %vm482, 1, 0
      %v680 = vsel %vm483, 1, 0
      %v681 = vsel %vm484, 1, 0
      %v682 = vsel %vm485, 1, 0
      %vm683 = vcmp.eq.s32.totalorder %v675, 1
      %vm684 = vcmp.eq.s32.totalorder %v676, 1
      %vm685 = vcmp.eq.s32.totalorder %v677, 1
      %vm686 = vcmp.eq.s32.totalorder %v678, 1
      %vm687 = vcmp.eq.s32.totalorder %v679, 1
      %vm688 = vcmp.eq.s32.totalorder %v680, 1
      %vm689 = vcmp.eq.s32.totalorder %v681, 1
      %vm690 = vcmp.eq.s32.totalorder %v682, 1
      %vm691 = vmpackc.low %vm683, %vm683
      %vm692 = vmpackc.low %vm684, %vm684
      %vm693 = vmpackc.low %vm685, %vm685
      %vm694 = vmpackc.low %vm686, %vm686
      %vm695 = vmpackc.low %vm687, %vm687
      %vm696 = vmpackc.low %vm688, %vm688
      %vm697 = vmpackc.low %vm689, %vm689
      %vm698 = vmpackc.low %vm690, %vm690
      %v699 = vsel %vm691, %v511, 0
      %v700 = vsel %vm692, %v512, 0
      %v701 = vsel %vm693, %v513, 0
      %v702 = vsel %vm694, %v514, 0
      %v703 = vsel %vm695, %v515, 0
      %v704 = vsel %vm696, %v516, 0
      %v705 = vsel %vm697, %v517, 0
      %v706 = vsel %vm698, %v518, 0
      %v707 = vld [vmem:[%s1 + $0x40] sm:$0xf]
      %v708 = vld [vmem:[%s1 + $0x44] sm:$0xf]
      %v709 = vld [vmem:[%s1 + $0x48] sm:$0xf]
      %v710 = vld [vmem:[%s1 + $0x4c] sm:$0xf]
      %v711 = vld [vmem:[%s1 + $0x50] sm:$0xf]
      %v712 = vld [vmem:[%s1 + $0x54] sm:$0xf]
      %v713 = vld [vmem:[%s1 + $0x58] sm:$0xf]
      %v714 = vld [vmem:[%s1 + $0x5c] sm:$0xf]
      %v715 = vld [vmem:[%s1 + $0x60] sm:$0xf]
      %v716 = vld [vmem:[%s1 + $0x64] sm:$0xf]
      %v717 = vld [vmem:[%s1 + $0x68] sm:$0xf]
      %v718 = vld [vmem:[%s1 + $0x6c] sm:$0xf]
      %v719 = vld [vmem:[%s1 + $0x70] sm:$0xf]
      %v720 = vld [vmem:[%s1 + $0x74] sm:$0xf]
      %v721 = vld [vmem:[%s1 + $0x78] sm:$0xf]
      %v722 = vld [vmem:[%s1 + $0x7c] sm:$0xf]
      %v731 = vunpack.c.l.b16 %v699
      %v732 = vunpack.c.l.b16 %v700
      %v733 = vunpack.c.l.b16 %v701
      %v734 = vunpack.c.l.b16 %v702
      %v735 = vunpack.c.l.b16 %v703
      %v736 = vunpack.c.l.b16 %v704
      %v737 = vunpack.c.l.b16 %v705
      %v738 = vunpack.c.l.b16 %v706
      %v739 = vpack.c.b16 %v732, %v731
      %v740 = vpack.c.b16 %v734, %v733
      %v741 = vpack.c.b16 %v736, %v735
      %v742 = vpack.c.b16 %v738, %v737
      %v763 = vunpack.c.l.b16 %v707
      %v764 = vunpack.c.l.b16 %v708
      %v765 = vunpack.c.l.b16 %v709
      %v766 = vunpack.c.l.b16 %v710
      %v767 = vunpack.c.l.b16 %v711
      %v768 = vunpack.c.l.b16 %v712
      %v769 = vunpack.c.l.b16 %v713
      %v770 = vunpack.c.l.b16 %v714
      %v771 = vunpack.c.l.b16 %v715
      %v772 = vunpack.c.l.b16 %v716
      %v773 = vunpack.c.l.b16 %v717
      %v774 = vunpack.c.l.b16 %v718
      %v775 = vunpack.c.l.b16 %v719
      %v776 = vunpack.c.l.b16 %v720
      %v777 = vunpack.c.l.b16 %v721
      %v778 = vunpack.c.l.b16 %v722
      %v779 = vpack.c.b16 %v764, %v763
      %v780 = vpack.c.b16 %v766, %v765
      %v781 = vpack.c.b16 %v768, %v767
      %v782 = vpack.c.b16 %v770, %v769
      %v783 = vpack.c.b16 %v772, %v771
      %v784 = vpack.c.b16 %v774, %v773
      %v785 = vpack.c.b16 %v776, %v775
      %v786 = vpack.c.b16 %v778, %v777
      %795 = vmatprep.subr.bf16.mxu0 0
      %796 = vmatpush1.bf16.msra.mxu0 %v786
      %797 = vmatprep.subr.bf16.mxu0 0
      %798 = vmatpush1.bf16.msra.mxu0 %v785
      %799 = vmatprep.subr.bf16.mxu0 0
      %800 = vmatpush1.bf16.msra.mxu0 %v784
      %801 = vmatprep.subr.bf16.mxu0 0
      %802 = vmatpush1.bf16.msra.mxu0 %v783
      %803 = vmatprep.subr.bf16.mxu0 0
      %804 = vmatpush1.bf16.msra.mxu0 %v782
      %805 = vmatprep.subr.bf16.mxu0 0
      %806 = vmatpush1.bf16.msra.mxu0 %v781
      %807 = vmatprep.subr.bf16.mxu0 0
      %808 = vmatpush1.bf16.msra.mxu0 %v780
      %809 = vmatprep.subr.bf16.mxu0 0
      %810 = vmatpush1.bf16.msra.mxu0 %v779
      %811 = vmatprep.subr.bf16.mxu0 0
      %812 = vmatpush2.bf16.msra.mxu0 0
      %813 = vmatprep.subr.bf16.mxu0 0
      %814 = vmatpush2.bf16.msra.mxu0 0
      %815 = vmatprep.subr.bf16.mxu0 0
      %816 = vmatpush2.bf16.msra.mxu0 0
      %817 = vmatprep.subr.bf16.mxu0 0
      %818 = vmatpush2.bf16.msra.mxu0 0
      %819 = vmatprep.subr.bf16.mxu0 0
      %820 = vmatpush2.bf16.msra.mxu0 0
      %821 = vmatprep.subr.bf16.mxu0 0
      %822 = vmatpush2.bf16.msra.mxu0 0
      %823 = vmatprep.subr.bf16.mxu0 0
      %824 = vmatpush2.bf16.msra.mxu0 0
      %825 = vmatprep.subr.bf16.mxu0 0
      %826 = vmatpush2.bf16.msra.mxu0 0
      %827 = vmatprep.mubr.bf16.mxu0 0
      %828 = vmatmul.mubr.bf16.gmra.mxu0 %v739
      %v829 = vpop.f32.mrf.mxu0
      %v830 = vadd.f32 0.0, %v829
      %v831 = vpop.f32.mrf.mxu0
      %v832 = vpop.f32.mrf.mxu0
      %v833 = vadd.f32 0.0, %v832
      %v834 = vpop.f32.mrf.mxu0
      %835 = vmatprep.mubr.bf16.mxu0 0
      %836 = vmatmul.mubr.bf16.gmra.mxu0 %v740
      %v837 = vpop.f32.mrf.mxu0
      %v838 = vadd.f32 0.0, %v837
      %v839 = vpop.f32.mrf.mxu0
      %v840 = vpop.f32.mrf.mxu0
      %v841 = vadd.f32 0.0, %v840
      %v842 = vpop.f32.mrf.mxu0
      %843 = vmatprep.mubr.bf16.mxu0 0
      %844 = vmatmul.mubr.bf16.gmra.mxu0 %v741
      %v845 = vpop.f32.mrf.mxu0
      %v846 = vadd.f32 0.0, %v845
      %v847 = vpop.f32.mrf.mxu0
      %v848 = vpop.f32.mrf.mxu0
      %v849 = vadd.f32 0.0, %v848
      %v850 = vpop.f32.mrf.mxu0
      %851 = vmatprep.mubr.bf16.mxu0 0
      %852 = vmatmul.mubr.bf16.gmra.mxu0 %v742
      %v853 = vpop.f32.mrf.mxu0
      %v854 = vadd.f32 0.0, %v853
      %v855 = vpop.f32.mrf.mxu0
      %v856 = vpop.f32.mrf.mxu0
      %v857 = vadd.f32 0.0, %v856
      %v858 = vpop.f32.mrf.mxu0
      %859 = vdwg.mxu0
      %v869 = vunpack.c.l.b16 %v650
      %v870 = vunpack.c.l.b16 %v651
      %v871 = vunpack.c.l.b16 %v652
      %v872 = vunpack.c.l.b16 %v653
      %v873 = vunpack.c.l.b16 %v654
      %v874 = vunpack.c.l.b16 %v655
      %v875 = vunpack.c.l.b16 %v656
      %v876 = vunpack.c.l.b16 %v657
      %v877 = vunpack.c.l.b16 %v658
      %v878 = vpack.c.b16 %v870, %v869
      %v879 = vpack.c.b16 %v872, %v871
      %v880 = vpack.c.b16 %v874, %v873
      %v881 = vpack.c.b16 %v876, %v875
      %v882 = vpack.c.b16 %v877, %v877
      %vm883 = vsmask.f32 4352
      %v885 = vshrl.u32 %v878, 16
      %v887 = vrot.slane %v885, 3
      %v888 = vshll.u32 %v878, 16
      %v890 = vrot.slane %v888, 4
      %v891 = vor.u32 %v887, %v890
      %v893 = vshrl.u32 %v879, 16
      %v895 = vrot.slane %v893, 3
      %v896 = vshll.u32 %v879, 16
      %v898 = vrot.slane %v896, 4
      %v899 = vor.u32 %v895, %v898
      %v900 = vsel %vm883, %v891, %v899
      %v902 = vshrl.u32 %v880, 16
      %v904 = vrot.slane %v902, 3
      %v905 = vshll.u32 %v880, 16
      %v907 = vrot.slane %v905, 4
      %v908 = vor.u32 %v904, %v907
      %v909 = vsel %vm883, %v899, %v908
      %v911 = vshrl.u32 %v881, 16
      %v913 = vrot.slane %v911, 3
      %v914 = vshll.u32 %v881, 16
      %v916 = vrot.slane %v914, 4
      %v917 = vor.u32 %v913, %v916
      %v918 = vsel %vm883, %v908, %v917
      %v920 = vshrl.u32 %v882, 16
      %v922 = vrot.slane %v920, 3
      %v923 = vshll.u32 %v882, 16
      %v925 = vrot.slane %v923, 4
      %v926 = vor.u32 %v922, %v925
      %v927 = vsel %vm883, %v917, %v926
      %v948 = vunpack.c.l.b16 %v659
      %v949 = vunpack.c.l.b16 %v660
      %v950 = vunpack.c.l.b16 %v661
      %v951 = vunpack.c.l.b16 %v662
      %v952 = vunpack.c.l.b16 %v663
      %v953 = vunpack.c.l.b16 %v664
      %v954 = vunpack.c.l.b16 %v665
      %v955 = vunpack.c.l.b16 %v666
      %v956 = vunpack.c.l.b16 %v667
      %v957 = vunpack.c.l.b16 %v668
      %v958 = vunpack.c.l.b16 %v669
      %v959 = vunpack.c.l.b16 %v670
      %v960 = vunpack.c.l.b16 %v671
      %v961 = vunpack.c.l.b16 %v672
      %v962 = vunpack.c.l.b16 %v673
      %v963 = vunpack.c.l.b16 %v674
      %v964 = vpack.c.b16 %v949, %v948
      %v965 = vpack.c.b16 %v951, %v950
      %v966 = vpack.c.b16 %v953, %v952
      %v967 = vpack.c.b16 %v955, %v954
      %v968 = vpack.c.b16 %v957, %v956
      %v969 = vpack.c.b16 %v959, %v958
      %v970 = vpack.c.b16 %v961, %v960
      %v971 = vpack.c.b16 %v963, %v962
      %980 = vmatprep.subr.bf16.mxu0 0
      %981 = vmatpush1.bf16.msra.mxu0 %v971
      %982 = vmatprep.subr.bf16.mxu0 0
      %983 = vmatpush1.bf16.msra.mxu0 %v970
      %984 = vmatprep.subr.bf16.mxu0 0
      %985 = vmatpush1.bf16.msra.mxu0 %v969
      %986 = vmatprep.subr.bf16.mxu0 0
      %987 = vmatpush1.bf16.msra.mxu0 %v968
      %988 = vmatprep.subr.bf16.mxu0 0
      %989 = vmatpush1.bf16.msra.mxu0 %v967
      %990 = vmatprep.subr.bf16.mxu0 0
      %991 = vmatpush1.bf16.msra.mxu0 %v966
      %992 = vmatprep.subr.bf16.mxu0 0
      %993 = vmatpush1.bf16.msra.mxu0 %v965
      %994 = vmatprep.subr.bf16.mxu0 0
      %995 = vmatpush1.bf16.msra.mxu0 %v964
      %996 = vmatprep.subr.bf16.mxu0 0
      %997 = vmatpush2.bf16.msra.mxu0 0
      %998 = vmatprep.subr.bf16.mxu0 0
      %999 = vmatpush2.bf16.msra.mxu0 0
      %1000 = vmatprep.subr.bf16.mxu0 0
      %1001 = vmatpush2.bf16.msra.mxu0 0
      %1002 = vmatprep.subr.bf16.mxu0 0
      %1003 = vmatpush2.bf16.msra.mxu0 0
      %1004 = vmatprep.subr.bf16.mxu0 0
      %1005 = vmatpush2.bf16.msra.mxu0 0
      %1006 = vmatprep.subr.bf16.mxu0 0
      %1007 = vmatpush2.bf16.msra.mxu0 0
      %1008 = vmatprep.subr.bf16.mxu0 0
      %1009 = vmatpush2.bf16.msra.mxu0 0
      %1010 = vmatprep.subr.bf16.mxu0 0
      %1011 = vmatpush2.bf16.msra.mxu0 0
      %1012 = vmatprep.mubr.bf16.mxu0 0
      %1013 = vmatmul.mubr.bf16.gmra.mxu0 %v900
      %v1014 = vpop.f32.mrf.mxu0
      %v1015 = vadd.f32 %v830, %v1014
      %v1016 = vpop.f32.mrf.mxu0
      %v1017 = vpop.f32.mrf.mxu0
      %v1018 = vadd.f32 %v833, %v1017
      %v1019 = vpop.f32.mrf.mxu0
      %1020 = vmatprep.mubr.bf16.mxu0 0
      %1021 = vmatmul.mubr.bf16.gmra.mxu0 %v909
      %v1022 = vpop.f32.mrf.mxu0
      %v1023 = vadd.f32 %v838, %v1022
      %v1024 = vpop.f32.mrf.mxu0
      %v1025 = vpop.f32.mrf.mxu0
      %v1026 = vadd.f32 %v841, %v1025
      %v1027 = vpop.f32.mrf.mxu0
      %1028 = vmatprep.mubr.bf16.mxu0 0
      %1029 = vmatmul.mubr.bf16.gmra.mxu0 %v918
      %v1030 = vpop.f32.mrf.mxu0
      %v1031 = vadd.f32 %v846, %v1030
      %v1032 = vpop.f32.mrf.mxu0
      %v1033 = vpop.f32.mrf.mxu0
      %v1034 = vadd.f32 %v849, %v1033
      %v1035 = vpop.f32.mrf.mxu0
      %1036 = vmatprep.mubr.bf16.mxu0 0
      %1037 = vmatmul.mubr.bf16.gmra.mxu0 %v927
      %v1038 = vpop.f32.mrf.mxu0
      %v1039 = vadd.f32 %v854, %v1038
      %v1040 = vpop.f32.mrf.mxu0
      %v1041 = vpop.f32.mrf.mxu0
      %v1042 = vadd.f32 %v857, %v1041
      %v1043 = vpop.f32.mrf.mxu0
      %1044 = vdwg.mxu0
      %v1045 = vld [vmem:[#allocation2 + $0x4] sm:$0xf]
      %v1046 = vld [vmem:[#allocation2 + $0x8] sm:$0xf]
      %v1047 = vld [vmem:[#allocation2 + $0xc] sm:$0xf]
      %v1048 = vld [vmem:[#allocation2 + $0x10] sm:$0xf]
      %v1049 = vld [vmem:[#allocation2 + $0x14] sm:$0xf]
      %v1050 = vld [vmem:[#allocation2 + $0x18] sm:$0xf]
      %v1051 = vld [vmem:[#allocation2 + $0x1c] sm:$0xf]
      %v1052 = vld [vmem:[#allocation2 + $0x20] sm:$0xf]
      %v1053 = vld [vmem:[#allocation2 + $0x24] sm:$0x1]
      %vm1054 = vmand %vm478, %vm502
      %vm1055 = vmand %vm479, %vm503
      %vm1056 = vmand %vm480, %vm504
      %vm1057 = vmand %vm481, %vm505
      %vm1058 = vmand %vm482, %vm506
      %vm1059 = vmand %vm483, %vm507
      %vm1060 = vmand %vm484, %vm508
      %vm1061 = vmand %vm485, %vm509
      %v1062 = vsel %vm1054, 1, 0
      %v1063 = vsel %vm1055, 1, 0
      %v1064 = vsel %vm1056, 1, 0
      %v1065 = vsel %vm1057, 1, 0
      %v1066 = vsel %vm1058, 1, 0
      %v1067 = vsel %vm1059, 1, 0
      %v1068 = vsel %vm1060, 1, 0
      %v1069 = vsel %vm1061, 1, 0
      %vm1070 = vcmp.eq.s32.totalorder %v1062, 1
      %vm1071 = vcmp.eq.s32.totalorder %v1063, 1
      %vm1072 = vcmp.eq.s32.totalorder %v1064, 1
      %vm1073 = vcmp.eq.s32.totalorder %v1065, 1
      %vm1074 = vcmp.eq.s32.totalorder %v1066, 1
      %vm1075 = vcmp.eq.s32.totalorder %v1067, 1
      %vm1076 = vcmp.eq.s32.totalorder %v1068, 1
      %vm1077 = vcmp.eq.s32.totalorder %v1069, 1
      %vm1078 = vmpackc.low %vm1070, %vm1070
      %vm1079 = vmpackc.low %vm1071, %vm1071
      %vm1080 = vmpackc.low %vm1072, %vm1072
      %vm1081 = vmpackc.low %vm1073, %vm1073
      %vm1082 = vmpackc.low %vm1074, %vm1074
      %vm1083 = vmpackc.low %vm1075, %vm1075
      %vm1084 = vmpackc.low %vm1076, %vm1076
      %vm1085 = vmpackc.low %vm1077, %vm1077
      %v1086 = vsel %vm1078, 65537, 0
      %v1087 = vsel %vm1079, 65537, 0
      %v1088 = vsel %vm1080, 65537, 0
      %v1089 = vsel %vm1081, 65537, 0
      %v1090 = vsel %vm1082, 65537, 0
      %v1091 = vsel %vm1083, 65537, 0
      %v1092 = vsel %vm1084, 65537, 0
      %v1093 = vsel %vm1085, 65537, 0
      %vm1094 = vsmask.f32 256
      %vm1095 = vsmask.f32 4368
      %vm1096 = vmor %vm1094, %vm1095
      %v1098 = vshrl.u32 %v1086, 16
      %v1100 = vrot.slane %v1098, 7
      %v1101 = vshll.u32 %v1086, 16
      %v1103 = vor.u32 %v1100, %v1101
      %v1104 = vrot.slane %v1100, 4
      %v1106 = vshrl.u32 %v1087, 16
      %v1108 = vrot.slane %v1106, 7
      %v1109 = vshll.u32 %v1087, 16
      %v1111 = vor.u32 %v1108, %v1109
      %v1112 = vsel %vm1096, %v1104, %v1111
      %v1113 = vrot.slane %v1108, 4
      %v1115 = vshrl.u32 %v1088, 16
      %v1117 = vrot.slane %v1115, 7
      %v1118 = vshll.u32 %v1088, 16
      %v1120 = vor.u32 %v1117, %v1118
      %v1121 = vsel %vm1096, %v1113, %v1120
      %v1122 = vrot.slane %v1117, 4
      %v1124 = vshrl.u32 %v1089, 16
      %v1126 = vrot.slane %v1124, 7
      %v1127 = vshll.u32 %v1089, 16
      %v1129 = vor.u32 %v1126, %v1127
      %v1130 = vsel %vm1096, %v1122, %v1129
      %v1131 = vrot.slane %v1126, 4
      %v1133 = vshrl.u32 %v1090, 16
      %v1135 = vrot.slane %v1133, 7
      %v1136 = vshll.u32 %v1090, 16
      %v1138 = vor.u32 %v1135, %v1136
      %v1139 = vsel %vm1096, %v1131, %v1138
      %v1140 = vrot.slane %v1135, 4
      %v1142 = vshrl.u32 %v1091, 16
      %v1144 = vrot.slane %v1142, 7
      %v1145 = vshll.u32 %v1091, 16
      %v1147 = vor.u32 %v1144, %v1145
      %v1148 = vsel %vm1096, %v1140, %v1147
      %v1149 = vrot.slane %v1144, 4
      %v1151 = vshrl.u32 %v1092, 16
      %v1153 = vrot.slane %v1151, 7
      %v1154 = vshll.u32 %v1092, 16
      %v1156 = vor.u32 %v1153, %v1154
      %v1157 = vsel %vm1096, %v1149, %v1156
      %v1158 = vrot.slane %v1153, 4
      %v1160 = vshrl.u32 %v1093, 16
      %v1162 = vrot.slane %v1160, 7
      %v1163 = vshll.u32 %v1093, 16
      %v1165 = vor.u32 %v1162, %v1163
      %v1166 = vsel %vm1096, %v1158, %v1165
      %v1167 = vrot.slane %v1162, 4
      %vm1168 = vcmp.ne.s16.totalorder %v1103, 0
      %vm1169 = vcmp.ne.s16.totalorder %v1112, 0
      %vm1170 = vcmp.ne.s16.totalorder %v1121, 0
      %vm1171 = vcmp.ne.s16.totalorder %v1130, 0
      %vm1172 = vcmp.ne.s16.totalorder %v1139, 0
      %vm1173 = vcmp.ne.s16.totalorder %v1148, 0
      %vm1174 = vcmp.ne.s16.totalorder %v1157, 0
      %vm1175 = vcmp.ne.s16.totalorder %v1166, 0
      %vm1176 = vcmp.ne.s16.totalorder %v1167, 0
      %v1177 = vsel %vm1168, %v1045, 0
      %v1178 = vsel %vm1169, %v1046, 0
      %v1179 = vsel %vm1170, %v1047, 0
      %v1180 = vsel %vm1171, %v1048, 0
      %v1181 = vsel %vm1172, %v1049, 0
      %v1182 = vsel %vm1173, %v1050, 0
      %v1183 = vsel %vm1174, %v1051, 0
      %v1184 = vsel %vm1175, %v1052, 0
      %v1185 = vsel %vm1176, %v1053, 0
      %v1186 = vld [vmem:[%s1 + $0x80] sm:$0xf]
      %v1187 = vld [vmem:[%s1 + $0x84] sm:$0xf]
      %v1188 = vld [vmem:[%s1 + $0x88] sm:$0xf]
      %v1189 = vld [vmem:[%s1 + $0x8c] sm:$0xf]
      %v1190 = vld [vmem:[%s1 + $0x90] sm:$0xf]
      %v1191 = vld [vmem:[%s1 + $0x94] sm:$0xf]
      %v1192 = vld [vmem:[%s1 + $0x98] sm:$0xf]
      %v1193 = vld [vmem:[%s1 + $0x9c] sm:$0xf]
      %v1194 = vld [vmem:[%s1 + $0xa0] sm:$0xf]
      %v1195 = vld [vmem:[%s1 + $0xa4] sm:$0xf]
      %v1196 = vld [vmem:[%s1 + $0xa8] sm:$0xf]
      %v1197 = vld [vmem:[%s1 + $0xac] sm:$0xf]
      %v1198 = vld [vmem:[%s1 + $0xb0] sm:$0xf]
      %v1199 = vld [vmem:[%s1 + $0xb4] sm:$0xf]
      %v1200 = vld [vmem:[%s1 + $0xb8] sm:$0xf]
      %v1201 = vld [vmem:[%s1 + $0xbc] sm:$0xf]
      %v1211 = vunpack.c.l.b16 %v1177
      %v1212 = vunpack.c.l.b16 %v1178
      %v1213 = vunpack.c.l.b16 %v1179
      %v1214 = vunpack.c.l.b16 %v1180
      %v1215 = vunpack.c.l.b16 %v1181
      %v1216 = vunpack.c.l.b16 %v1182
      %v1217 = vunpack.c.l.b16 %v1183
      %v1218 = vunpack.c.l.b16 %v1184
      %v1219 = vunpack.c.l.b16 %v1185
      %v1220 = vpack.c.b16 %v1212, %v1211
      %v1221 = vpack.c.b16 %v1214, %v1213
      %v1222 = vpack.c.b16 %v1216, %v1215
      %v1223 = vpack.c.b16 %v1218, %v1217
      %v1224 = vpack.c.b16 %v1219, %v1219
      %vm1225 = vsmask.f32 7424
      %v1227 = vshrl.u32 %v1220, 16
      %v1229 = vshll.u32 %v1220, 16
      %v1231 = vrot.slane %v1229, 1
      %v1232 = vor.u32 %v1227, %v1231
      %v1234 = vshll.u32 %v1221, 16
      %v1236 = vrot.slane %v1234, 1
      %v1237 = vsel %vm1225, %v1232, %v1236
      %v1238 = vshrl.u32 %v1221, 16
      %v1240 = vor.u32 %v1238, %v1236
      %v1242 = vshll.u32 %v1222, 16
      %v1244 = vrot.slane %v1242, 1
      %v1245 = vsel %vm1225, %v1240, %v1244
      %v1246 = vshrl.u32 %v1222, 16
      %v1248 = vor.u32 %v1246, %v1244
      %v1250 = vshll.u32 %v1223, 16
      %v1252 = vrot.slane %v1250, 1
      %v1253 = vsel %vm1225, %v1248, %v1252
      %v1254 = vshrl.u32 %v1223, 16
      %v1256 = vor.u32 %v1254, %v1252
      %v1258 = vshll.u32 %v1224, 16
      %v1260 = vrot.slane %v1258, 1
      %v1261 = vsel %vm1225, %v1256, %v1260
      %v1282 = vunpack.c.l.b16 %v1186
      %v1283 = vunpack.c.l.b16 %v1187
      %v1284 = vunpack.c.l.b16 %v1188
      %v1285 = vunpack.c.l.b16 %v1189
      %v1286 = vunpack.c.l.b16 %v1190
      %v1287 = vunpack.c.l.b16 %v1191
      %v1288 = vunpack.c.l.b16 %v1192
      %v1289 = vunpack.c.l.b16 %v1193
      %v1290 = vunpack.c.l.b16 %v1194
      %v1291 = vunpack.c.l.b16 %v1195
      %v1292 = vunpack.c.l.b16 %v1196
      %v1293 = vunpack.c.l.b16 %v1197
      %v1294 = vunpack.c.l.b16 %v1198
      %v1295 = vunpack.c.l.b16 %v1199
      %v1296 = vunpack.c.l.b16 %v1200
      %v1297 = vunpack.c.l.b16 %v1201
      %v1298 = vpack.c.b16 %v1283, %v1282
      %v1299 = vpack.c.b16 %v1285, %v1284
      %v1300 = vpack.c.b16 %v1287, %v1286
      %v1301 = vpack.c.b16 %v1289, %v1288
      %v1302 = vpack.c.b16 %v1291, %v1290
      %v1303 = vpack.c.b16 %v1293, %v1292
      %v1304 = vpack.c.b16 %v1295, %v1294
      %v1305 = vpack.c.b16 %v1297, %v1296
      %1314 = vmatprep.subr.bf16.mxu0 0
      %1315 = vmatpush1.bf16.msra.mxu0 %v1305
      %1316 = vmatprep.subr.bf16.mxu0 0
      %1317 = vmatpush1.bf16.msra.mxu0 %v1304
      %1318 = vmatprep.subr.bf16.mxu0 0
      %1319 = vmatpush1.bf16.msra.mxu0 %v1303
      %1320 = vmatprep.subr.bf16.mxu0 0
      %1321 = vmatpush1.bf16.msra.mxu0 %v1302
      %1322 = vmatprep.subr.bf16.mxu0 0
      %1323 = vmatpush1.bf16.msra.mxu0 %v1301
      %1324 = vmatprep.subr.bf16.mxu0 0
      %1325 = vmatpush1.bf16.msra.mxu0 %v1300
      %1326 = vmatprep.subr.bf16.mxu0 0
      %1327 = vmatpush1.bf16.msra.mxu0 %v1299
      %1328 = vmatprep.subr.bf16.mxu0 0
      %1329 = vmatpush1.bf16.msra.mxu0 %v1298
      %1330 = vmatprep.subr.bf16.mxu0 0
      %1331 = vmatpush2.bf16.msra.mxu0 0
      %1332 = vmatprep.subr.bf16.mxu0 0
      %1333 = vmatpush2.bf16.msra.mxu0 0
      %1334 = vmatprep.subr.bf16.mxu0 0
      %1335 = vmatpush2.bf16.msra.mxu0 0
      %1336 = vmatprep.subr.bf16.mxu0 0
      %1337 = vmatpush2.bf16.msra.mxu0 0
      %1338 = vmatprep.subr.bf16.mxu0 0
      %1339 = vmatpush2.bf16.msra.mxu0 0
      %1340 = vmatprep.subr.bf16.mxu0 0
      %1341 = vmatpush2.bf16.msra.mxu0 0
      %1342 = vmatprep.subr.bf16.mxu0 0
      %1343 = vmatpush2.bf16.msra.mxu0 0
      %1344 = vmatprep.subr.bf16.mxu0 0
      %1345 = vmatpush2.bf16.msra.mxu0 0
      %1346 = vmatprep.mubr.bf16.mxu0 0
      %1347 = vmatmul.mubr.bf16.gmra.mxu0 %v1237
      %v1348 = vpop.f32.mrf.mxu0
      %v1349 = vadd.f32 0.0, %v1348
      %v1350 = vpop.f32.mrf.mxu0
      %v1351 = vpop.f32.mrf.mxu0
      %v1352 = vadd.f32 0.0, %v1351
      %v1353 = vpop.f32.mrf.mxu0
      %1354 = vmatprep.mubr.bf16.mxu0 0
      %1355 = vmatmul.mubr.bf16.gmra.mxu0 %v1245
      %v1356 = vpop.f32.mrf.mxu0
      %v1357 = vadd.f32 0.0, %v1356
      %v1358 = vpop.f32.mrf.mxu0
      %v1359 = vpop.f32.mrf.mxu0
      %v1360 = vadd.f32 0.0, %v1359
      %v1361 = vpop.f32.mrf.mxu0
      %1362 = vmatprep.mubr.bf16.mxu0 0
      %1363 = vmatmul.mubr.bf16.gmra.mxu0 %v1253
      %v1364 = vpop.f32.mrf.mxu0
      %v1365 = vadd.f32 0.0, %v1364
      %v1366 = vpop.f32.mrf.mxu0
      %v1367 = vpop.f32.mrf.mxu0
      %v1368 = vadd.f32 0.0, %v1367
      %v1369 = vpop.f32.mrf.mxu0
      %1370 = vmatprep.mubr.bf16.mxu0 0
      %1371 = vmatmul.mubr.bf16.gmra.mxu0 %v1261
      %v1372 = vpop.f32.mrf.mxu0
      %v1373 = vadd.f32 0.0, %v1372
      %v1374 = vpop.f32.mrf.mxu0
      %v1375 = vpop.f32.mrf.mxu0
      %v1376 = vadd.f32 0.0, %v1375
      %v1377 = vpop.f32.mrf.mxu0
      %1378 = vdwg.mxu0
      %v1379 = vadd.f32 %v1015, %v1349
      %v1380 = vadd.f32 %v1018, %v1352
      %v1381 = vadd.f32 %v1023, %v1357
      %v1382 = vadd.f32 %v1026, %v1360
      %v1383 = vadd.f32 %v1031, %v1365
      %v1384 = vadd.f32 %v1034, %v1368
      %v1385 = vadd.f32 %v1039, %v1373
      %v1386 = vadd.f32 %v1042, %v1376
      %v1387 = vld [vmem:[#allocation2 + $0x4] sm:$0x8]
      %v1388 = vld [vmem:[#allocation2 + $0x24] sm:$0xf]
      %v1389 = vsel %vm494, 1, 0
      %v1390 = vsel %vm495, 1, 0
      %v1391 = vsel %vm496, 1, 0
      %v1392 = vsel %vm497, 1, 0
      %v1393 = vsel %vm498, 1, 0
      %v1394 = vsel %vm499, 1, 0
      %v1395 = vsel %vm500, 1, 0
      %v1396 = vsel %vm501, 1, 0
      %vm1397 = vcmp.eq.s32.totalorder %v1389, 1
      %vm1398 = vcmp.eq.s32.totalorder %v1390, 1
      %vm1399 = vcmp.eq.s32.totalorder %v1391, 1
      %vm1400 = vcmp.eq.s32.totalorder %v1392, 1
      %vm1401 = vcmp.eq.s32.totalorder %v1393, 1
      %vm1402 = vcmp.eq.s32.totalorder %v1394, 1
      %vm1403 = vcmp.eq.s32.totalorder %v1395, 1
      %vm1404 = vcmp.eq.s32.totalorder %v1396, 1
      %vm1405 = vmpackc.low %vm1397, %vm1397
      %vm1406 = vmpackc.low %vm1398, %vm1398
      %vm1407 = vmpackc.low %vm1399, %vm1399
      %vm1408 = vmpackc.low %vm1400, %vm1400
      %vm1409 = vmpackc.low %vm1401, %vm1401
      %vm1410 = vmpackc.low %vm1402, %vm1402
      %vm1411 = vmpackc.low %vm1403, %vm1403
      %vm1412 = vmpackc.low %vm1404, %vm1404
      %v1413 = vsel %vm1405, 65537, 0
      %v1414 = vsel %vm1406, 65537, 0
      %v1415 = vsel %vm1407, 65537, 0
      %v1416 = vsel %vm1408, 65537, 0
      %v1417 = vsel %vm1409, 65537, 0
      %v1418 = vsel %vm1410, 65537, 0
      %v1419 = vsel %vm1411, 65537, 0
      %v1420 = vsel %vm1412, 65537, 0
      %v1422 = vshll.u32 %v1413, 16
      %v1424 = vrot.slane %v1422, 5
      %v1425 = vshrl.u32 %v1413, 16
      %v1427 = vrot.slane %v1425, 4
      %v1428 = vor.u32 %v1427, %v1424
      %v1429 = vrot.slane %v1428, 4
      %v1431 = vshll.u32 %v1414, 16
      %v1433 = vrot.slane %v1431, 5
      %v1434 = vsel %vm561, %v1429, %v1433
      %v1435 = vshrl.u32 %v1414, 16
      %v1437 = vrot.slane %v1435, 4
      %v1438 = vor.u32 %v1437, %v1433
      %v1439 = vrot.slane %v1438, 4
      %v1441 = vshll.u32 %v1415, 16
      %v1443 = vrot.slane %v1441, 5
      %v1444 = vsel %vm561, %v1439, %v1443
      %v1445 = vshrl.u32 %v1415, 16
      %v1447 = vrot.slane %v1445, 4
      %v1448 = vor.u32 %v1447, %v1443
      %v1449 = vrot.slane %v1448, 4
      %v1451 = vshll.u32 %v1416, 16
      %v1453 = vrot.slane %v1451, 5
      %v1454 = vsel %vm561, %v1449, %v1453
      %v1455 = vshrl.u32 %v1416, 16
      %v1457 = vrot.slane %v1455, 4
      %v1458 = vor.u32 %v1457, %v1453
      %v1459 = vrot.slane %v1458, 4
      %v1461 = vshll.u32 %v1417, 16
      %v1463 = vrot.slane %v1461, 5
      %v1464 = vsel %vm561, %v1459, %v1463
      %v1465 = vshrl.u32 %v1417, 16
      %v1467 = vrot.slane %v1465, 4
      %v1468 = vor.u32 %v1467, %v1463
      %v1469 = vrot.slane %v1468, 4
      %v1471 = vshll.u32 %v1418, 16
      %v1473 = vrot.slane %v1471, 5
      %v1474 = vsel %vm561, %v1469, %v1473
      %v1475 = vshrl.u32 %v1418, 16
      %v1477 = vrot.slane %v1475, 4
      %v1478 = vor.u32 %v1477, %v1473
      %v1479 = vrot.slane %v1478, 4
      %v1481 = vshll.u32 %v1419, 16
      %v1483 = vrot.slane %v1481, 5
      %v1484 = vsel %vm561, %v1479, %v1483
      %v1485 = vshrl.u32 %v1419, 16
      %v1487 = vrot.slane %v1485, 4
      %v1488 = vor.u32 %v1487, %v1483
      %v1489 = vrot.slane %v1488, 4
      %v1491 = vshll.u32 %v1420, 16
      %v1493 = vrot.slane %v1491, 5
      %v1494 = vsel %vm561, %v1489, %v1493
      %v1495 = vshrl.u32 %v1420, 16
      %v1497 = vrot.slane %v1495, 4
      %v1498 = vor.u32 %v1497, %v1493
      %v1499 = vrot.slane %v1498, 4
      %vm1500 = vcmp.ne.s16.totalorder %v1424, 0
      %vm1501 = vcmp.ne.s16.totalorder %v1434, 0
      %vm1502 = vcmp.ne.s16.totalorder %v1444, 0
      %vm1503 = vcmp.ne.s16.totalorder %v1454, 0
      %vm1504 = vcmp.ne.s16.totalorder %v1464, 0
      %vm1505 = vcmp.ne.s16.totalorder %v1474, 0
      %vm1506 = vcmp.ne.s16.totalorder %v1484, 0
      %vm1507 = vcmp.ne.s16.totalorder %v1494, 0
      %vm1508 = vcmp.ne.s16.totalorder %v1499, 0
      %v1509 = vsel %vm1500, %v1387, 0
      %v1510 = vsel %vm1501, %v1046, 0
      %v1511 = vsel %vm1502, %v1047, 0
      %v1512 = vsel %vm1503, %v1048, 0
      %v1513 = vsel %vm1504, %v1049, 0
      %v1514 = vsel %vm1505, %v1050, 0
      %v1515 = vsel %vm1506, %v1051, 0
      %v1516 = vsel %vm1507, %v1052, 0
      %v1517 = vsel %vm1508, %v1388, 0
      %v1518 = vld [vmem:[%s1 + $0xc0] sm:$0xf]
      %v1519 = vld [vmem:[%s1 + $0xc4] sm:$0xf]
      %v1520 = vld [vmem:[%s1 + $0xc8] sm:$0xf]
      %v1521 = vld [vmem:[%s1 + $0xcc] sm:$0xf]
      %v1522 = vld [vmem:[%s1 + $0xd0] sm:$0xf]
      %v1523 = vld [vmem:[%s1 + $0xd4] sm:$0xf]
      %v1524 = vld [vmem:[%s1 + $0xd8] sm:$0xf]
      %v1525 = vld [vmem:[%s1 + $0xdc] sm:$0xf]
      %v1526 = vld [vmem:[%s1 + $0xe0] sm:$0xf]
      %v1527 = vld [vmem:[%s1 + $0xe4] sm:$0xf]
      %v1528 = vld [vmem:[%s1 + $0xe8] sm:$0xf]
      %v1529 = vld [vmem:[%s1 + $0xec] sm:$0xf]
      %v1530 = vld [vmem:[%s1 + $0xf0] sm:$0xf]
      %v1531 = vld [vmem:[%s1 + $0xf4] sm:$0xf]
      %v1532 = vld [vmem:[%s1 + $0xf8] sm:$0xf]
      %v1533 = vld [vmem:[%s1 + $0xfc] sm:$0xf]
      %v1543 = vunpack.c.l.b16 %v1509
      %v1544 = vunpack.c.l.b16 %v1510
      %v1545 = vunpack.c.l.b16 %v1511
      %v1546 = vunpack.c.l.b16 %v1512
      %v1547 = vunpack.c.l.b16 %v1513
      %v1548 = vunpack.c.l.b16 %v1514
      %v1549 = vunpack.c.l.b16 %v1515
      %v1550 = vunpack.c.l.b16 %v1516
      %v1551 = vunpack.c.l.b16 %v1517
      %v1552 = vpack.c.b16 %v1544, %v1543
      %v1553 = vpack.c.b16 %v1546, %v1545
      %v1554 = vpack.c.b16 %v1548, %v1547
      %v1555 = vpack.c.b16 %v1550, %v1549
      %v1556 = vpack.c.b16 %v1551, %v1551
      %v1558 = vshrl.u32 %v1552, 16
      %v1560 = vrot.slane %v1558, 3
      %v1561 = vshll.u32 %v1552, 16
      %v1563 = vrot.slane %v1561, 4
      %v1564 = vor.u32 %v1560, %v1563
      %v1566 = vshrl.u32 %v1553, 16
      %v1568 = vrot.slane %v1566, 3
      %v1569 = vshll.u32 %v1553, 16
      %v1571 = vrot.slane %v1569, 4
      %v1572 = vor.u32 %v1568, %v1571
      %v1573 = vsel %vm883, %v1564, %v1572
      %v1575 = vshrl.u32 %v1554, 16
      %v1577 = vrot.slane %v1575, 3
      %v1578 = vshll.u32 %v1554, 16
      %v1580 = vrot.slane %v1578, 4
      %v1581 = vor.u32 %v1577, %v1580
      %v1582 = vsel %vm883, %v1572, %v1581
      %v1584 = vshrl.u32 %v1555, 16
      %v1586 = vrot.slane %v1584, 3
      %v1587 = vshll.u32 %v1555, 16
      %v1589 = vrot.slane %v1587, 4
      %v1590 = vor.u32 %v1586, %v1589
      %v1591 = vsel %vm883, %v1581, %v1590
      %v1593 = vshrl.u32 %v1556, 16
      %v1595 = vrot.slane %v1593, 3
      %v1596 = vshll.u32 %v1556, 16
      %v1598 = vrot.slane %v1596, 4
      %v1599 = vor.u32 %v1595, %v1598
      %v1600 = vsel %vm883, %v1590, %v1599
      %v1621 = vunpack.c.l.b16 %v1518
      %v1622 = vunpack.c.l.b16 %v1519
      %v1623 = vunpack.c.l.b16 %v1520
      %v1624 = vunpack.c.l.b16 %v1521
      %v1625 = vunpack.c.l.b16 %v1522
      %v1626 = vunpack.c.l.b16 %v1523
      %v1627 = vunpack.c.l.b16 %v1524
      %v1628 = vunpack.c.l.b16 %v1525
      %v1629 = vunpack.c.l.b16 %v1526
      %v1630 = vunpack.c.l.b16 %v1527
      %v1631 = vunpack.c.l.b16 %v1528
      %v1632 = vunpack.c.l.b16 %v1529
      %v1633 = vunpack.c.l.b16 %v1530
      %v1634 = vunpack.c.l.b16 %v1531
      %v1635 = vunpack.c.l.b16 %v1532
      %v1636 = vunpack.c.l.b16 %v1533
      %v1637 = vpack.c.b16 %v1622, %v1621
      %v1638 = vpack.c.b16 %v1624, %v1623
      %v1639 = vpack.c.b16 %v1626, %v1625
      %v1640 = vpack.c.b16 %v1628, %v1627
      %v1641 = vpack.c.b16 %v1630, %v1629
      %v1642 = vpack.c.b16 %v1632, %v1631
      %v1643 = vpack.c.b16 %v1634, %v1633
      %v1644 = vpack.c.b16 %v1636, %v1635
      %1653 = vmatprep.subr.bf16.mxu0 0
      %1654 = vmatpush1.bf16.msra.mxu0 %v1644
      %1655 = vmatprep.subr.bf16.mxu0 0
      %1656 = vmatpush1.bf16.msra.mxu0 %v1643
      %1657 = vmatprep.subr.bf16.mxu0 0
      %1658 = vmatpush1.bf16.msra.mxu0 %v1642
      %1659 = vmatprep.subr.bf16.mxu0 0
      %1660 = vmatpush1.bf16.msra.mxu0 %v1641
      %1661 = vmatprep.subr.bf16.mxu0 0
      %1662 = vmatpush1.bf16.msra.mxu0 %v1640
      %1663 = vmatprep.subr.bf16.mxu0 0
      %1664 = vmatpush1.bf16.msra.mxu0 %v1639
      %1665 = vmatprep.subr.bf16.mxu0 0
      %1666 = vmatpush1.bf16.msra.mxu0 %v1638
      %1667 = vmatprep.subr.bf16.mxu0 0
      %1668 = vmatpush1.bf16.msra.mxu0 %v1637
      %1669 = vmatprep.subr.bf16.mxu0 0
      %1670 = vmatpush2.bf16.msra.mxu0 0
      %1671 = vmatprep.subr.bf16.mxu0 0
      %1672 = vmatpush2.bf16.msra.mxu0 0
      %1673 = vmatprep.subr.bf16.mxu0 0
      %1674 = vmatpush2.bf16.msra.mxu0 0
      %1675 = vmatprep.subr.bf16.mxu0 0
      %1676 = vmatpush2.bf16.msra.mxu0 0
      %1677 = vmatprep.subr.bf16.mxu0 0
      %1678 = vmatpush2.bf16.msra.mxu0 0
      %1679 = vmatprep.subr.bf16.mxu0 0
      %1680 = vmatpush2.bf16.msra.mxu0 0
      %1681 = vmatprep.subr.bf16.mxu0 0
      %1682 = vmatpush2.bf16.msra.mxu0 0
      %1683 = vmatprep.subr.bf16.mxu0 0
      %1684 = vmatpush2.bf16.msra.mxu0 0
      %1685 = vmatprep.mubr.bf16.mxu0 0
      %1686 = vmatmul.mubr.bf16.gmra.mxu0 %v1573
      %v1687 = vpop.f32.mrf.mxu0
      %v1688 = vadd.f32 0.0, %v1687
      %v1689 = vpop.f32.mrf.mxu0
      %v1690 = vpop.f32.mrf.mxu0
      %v1691 = vadd.f32 0.0, %v1690
      %v1692 = vpop.f32.mrf.mxu0
      %1693 = vmatprep.mubr.bf16.mxu0 0
      %1694 = vmatmul.mubr.bf16.gmra.mxu0 %v1582
      %v1695 = vpop.f32.mrf.mxu0
      %v1696 = vadd.f32 0.0, %v1695
      %v1697 = vpop.f32.mrf.mxu0
      %v1698 = vpop.f32.mrf.mxu0
      %v1699 = vadd.f32 0.0, %v1698
      %v1700 = vpop.f32.mrf.mxu0
      %1701 = vmatprep.mubr.bf16.mxu0 0
      %1702 = vmatmul.mubr.bf16.gmra.mxu0 %v1591
      %v1703 = vpop.f32.mrf.mxu0
      %v1704 = vadd.f32 0.0, %v1703
      %v1705 = vpop.f32.mrf.mxu0
      %v1706 = vpop.f32.mrf.mxu0
      %v1707 = vadd.f32 0.0, %v1706
      %v1708 = vpop.f32.mrf.mxu0
      %1709 = vmatprep.mubr.bf16.mxu0 0
      %1710 = vmatmul.mubr.bf16.gmra.mxu0 %v1600
      %v1711 = vpop.f32.mrf.mxu0
      %v1712 = vadd.f32 0.0, %v1711
      %v1713 = vpop.f32.mrf.mxu0
      %v1714 = vpop.f32.mrf.mxu0
      %v1715 = vadd.f32 0.0, %v1714
      %v1716 = vpop.f32.mrf.mxu0
      %1717 = vdwg.mxu0
      %v1718 = vadd.f32 %v1379, %v1688
      %v1719 = vadd.f32 %v1380, %v1691
      %v1720 = vadd.f32 %v1381, %v1696
      %v1721 = vadd.f32 %v1382, %v1699
      %v1722 = vadd.f32 %v1383, %v1704
      %v1723 = vadd.f32 %v1384, %v1707
      %v1724 = vadd.f32 %v1385, %v1712
      %v1725 = vadd.f32 %v1386, %v1715
      %v1726 = vld [vmem:[%s1 + $0x100] sm:$0xf]
      %v1727 = vld [vmem:[%s1 + $0x104] sm:$0xf]
      %v1728 = vld [vmem:[%s1 + $0x108] sm:$0xf]
      %v1729 = vld [vmem:[%s1 + $0x10c] sm:$0xf]
      %v1730 = vld [vmem:[%s1 + $0x110] sm:$0xf]
      %v1731 = vld [vmem:[%s1 + $0x114] sm:$0xf]
      %v1732 = vld [vmem:[%s1 + $0x118] sm:$0xf]
      %v1733 = vld [vmem:[%s1 + $0x11c] sm:$0xf]
      %v1734 = vld [vmem:[%s1 + $0x120] sm:$0xf]
      %v1735 = vld [vmem:[%s1 + $0x124] sm:$0xf]
      %v1736 = vld [vmem:[%s1 + $0x128] sm:$0xf]
      %v1737 = vld [vmem:[%s1 + $0x12c] sm:$0xf]
      %v1738 = vld [vmem:[%s1 + $0x130] sm:$0xf]
      %v1739 = vld [vmem:[%s1 + $0x134] sm:$0xf]
      %v1740 = vld [vmem:[%s1 + $0x138] sm:$0xf]
      %v1741 = vld [vmem:[%s1 + $0x13c] sm:$0xf]
      %v1750 = vunpack.c.l.b16 %v1046
      %v1751 = vunpack.c.l.b16 %v1047
      %v1752 = vunpack.c.l.b16 %v1048
      %v1753 = vunpack.c.l.b16 %v1049
      %v1754 = vunpack.c.l.b16 %v1050
      %v1755 = vunpack.c.l.b16 %v1051
      %v1756 = vunpack.c.l.b16 %v1052
      %v1757 = vunpack.c.l.b16 %v1388
      %v1758 = vpack.c.b16 %v1751, %v1750
      %v1759 = vpack.c.b16 %v1753, %v1752
      %v1760 = vpack.c.b16 %v1755, %v1754
      %v1761 = vpack.c.b16 %v1757, %v1756
      %v1782 = vunpack.c.l.b16 %v1726
      %v1783 = vunpack.c.l.b16 %v1727
      %v1784 = vunpack.c.l.b16 %v1728
      %v1785 = vunpack.c.l.b16 %v1729
      %v1786 = vunpack.c.l.b16 %v1730
      %v1787 = vunpack.c.l.b16 %v1731
      %v1788 = vunpack.c.l.b16 %v1732
      %v1789 = vunpack.c.l.b16 %v1733
      %v1790 = vunpack.c.l.b16 %v1734
      %v1791 = vunpack.c.l.b16 %v1735
      %v1792 = vunpack.c.l.b16 %v1736
      %v1793 = vunpack.c.l.b16 %v1737
      %v1794 = vunpack.c.l.b16 %v1738
      %v1795 = vunpack.c.l.b16 %v1739
      %v1796 = vunpack.c.l.b16 %v1740
      %v1797 = vunpack.c.l.b16 %v1741
      %v1798 = vpack.c.b16 %v1783, %v1782
      %v1799 = vpack.c.b16 %v1785, %v1784
      %v1800 = vpack.c.b16 %v1787, %v1786
      %v1801 = vpack.c.b16 %v1789, %v1788
      %v1802 = vpack.c.b16 %v1791, %v1790
      %v1803 = vpack.c.b16 %v1793, %v1792
      %v1804 = vpack.c.b16 %v1795, %v1794
      %v1805 = vpack.c.b16 %v1797, %v1796
      %1814 = vmatprep.subr.bf16.mxu0 0
      %1815 = vmatpush1.bf16.msra.mxu0 %v1805
      %1816 = vmatprep.subr.bf16.mxu0 0
      %1817 = vmatpush1.bf16.msra.mxu0 %v1804
      %1818 = vmatprep.subr.bf16.mxu0 0
      %1819 = vmatpush1.bf16.msra.mxu0 %v1803
      %1820 = vmatprep.subr.bf16.mxu0 0
      %1821 = vmatpush1.bf16.msra.mxu0 %v1802
      %1822 = vmatprep.subr.bf16.mxu0 0
      %1823 = vmatpush1.bf16.msra.mxu0 %v1801
      %1824 = vmatprep.subr.bf16.mxu0 0
      %1825 = vmatpush1.bf16.msra.mxu0 %v1800
      %1826 = vmatprep.subr.bf16.mxu0 0
      %1827 = vmatpush1.bf16.msra.mxu0 %v1799
      %1828 = vmatprep.subr.bf16.mxu0 0
      %1829 = vmatpush1.bf16.msra.mxu0 %v1798
      %1830 = vmatprep.subr.bf16.mxu0 0
      %1831 = vmatpush2.bf16.msra.mxu0 0
      %1832 = vmatprep.subr.bf16.mxu0 0
      %1833 = vmatpush2.bf16.msra.mxu0 0
      %1834 = vmatprep.subr.bf16.mxu0 0
      %1835 = vmatpush2.bf16.msra.mxu0 0
      %1836 = vmatprep.subr.bf16.mxu0 0
      %1837 = vmatpush2.bf16.msra.mxu0 0
      %1838 = vmatprep.subr.bf16.mxu0 0
      %1839 = vmatpush2.bf16.msra.mxu0 0
      %1840 = vmatprep.subr.bf16.mxu0 0
      %1841 = vmatpush2.bf16.msra.mxu0 0
      %1842 = vmatprep.subr.bf16.mxu0 0
      %1843 = vmatpush2.bf16.msra.mxu0 0
      %1844 = vmatprep.subr.bf16.mxu0 0
      %1845 = vmatpush2.bf16.msra.mxu0 0
      %1846 = vmatprep.mubr.bf16.mxu0 0
      %1847 = vmatmul.mubr.bf16.gmra.mxu0 %v1758
      %v1848 = vpop.f32.mrf.mxu0
      %v1849 = vadd.f32 0.0, %v1848
      %v1850 = vpop.f32.mrf.mxu0
      %v1851 = vpop.f32.mrf.mxu0
      %v1852 = vadd.f32 0.0, %v1851
      %v1853 = vpop.f32.mrf.mxu0
      %1854 = vmatprep.mubr.bf16.mxu0 0
      %1855 = vmatmul.mubr.bf16.gmra.mxu0 %v1759
      %v1856 = vpop.f32.mrf.mxu0
      %v1857 = vadd.f32 0.0, %v1856
      %v1858 = vpop.f32.mrf.mxu0
      %v1859 = vpop.f32.mrf.mxu0
      %v1860 = vadd.f32 0.0, %v1859
      %v1861 = vpop.f32.mrf.mxu0
      %1862 = vmatprep.mubr.bf16.mxu0 0
      %1863 = vmatmul.mubr.bf16.gmra.mxu0 %v1760
      %v1864 = vpop.f32.mrf.mxu0
      %v1865 = vadd.f32 0.0, %v1864
      %v1866 = vpop.f32.mrf.mxu0
      %v1867 = vpop.f32.mrf.mxu0
      %v1868 = vadd.f32 0.0, %v1867
      %v1869 = vpop.f32.mrf.mxu0
      %1870 = vmatprep.mubr.bf16.mxu0 0
      %1871 = vmatmul.mubr.bf16.gmra.mxu0 %v1761
      %v1872 = vpop.f32.mrf.mxu0
      %v1873 = vadd.f32 0.0, %v1872
      %v1874 = vpop.f32.mrf.mxu0
      %v1875 = vpop.f32.mrf.mxu0
      %v1876 = vadd.f32 0.0, %v1875
      %v1877 = vpop.f32.mrf.mxu0
      %1878 = vdwg.mxu0
      %v1879 = vadd.f32 %v1718, %v1849
      %v1880 = vadd.f32 %v1719, %v1852
      %v1881 = vadd.f32 %v1720, %v1857
      %v1882 = vadd.f32 %v1721, %v1860
      %v1883 = vadd.f32 %v1722, %v1865
      %v1884 = vadd.f32 %v1723, %v1868
      %v1885 = vadd.f32 %v1724, %v1873
      %v1886 = vadd.f32 %v1725, %v1876
      %v1887 = vld [vmem:[#allocation2 + $0x8] sm:$0xf]
      %v1888 = vld [vmem:[#allocation2 + $0xc] sm:$0xf]
      %v1889 = vld [vmem:[#allocation2 + $0x10] sm:$0xf]
      %v1890 = vld [vmem:[#allocation2 + $0x14] sm:$0xf]
      %v1891 = vld [vmem:[#allocation2 + $0x18] sm:$0xf]
      %v1892 = vld [vmem:[#allocation2 + $0x1c] sm:$0xf]
      %v1893 = vld [vmem:[#allocation2 + $0x20] sm:$0xf]
      %v1894 = vld [vmem:[#allocation2 + $0x24] sm:$0xf]
      %v1895 = vld [vmem:[#allocation2 + $0x28] sm:$0x1]
      %v1896 = vsel %vm502, 1, 0
      %v1897 = vsel %vm503, 1, 0
      %v1898 = vsel %vm504, 1, 0
      %v1899 = vsel %vm505, 1, 0
      %v1900 = vsel %vm506, 1, 0
      %v1901 = vsel %vm507, 1, 0
      %v1902 = vsel %vm508, 1, 0
      %v1903 = vsel %vm509, 1, 0
      %vm1904 = vcmp.eq.s32.totalorder %v1896, 1
      %vm1905 = vcmp.eq.s32.totalorder %v1897, 1
      %vm1906 = vcmp.eq.s32.totalorder %v1898, 1
      %vm1907 = vcmp.eq.s32.totalorder %v1899, 1
      %vm1908 = vcmp.eq.s32.totalorder %v1900, 1
      %vm1909 = vcmp.eq.s32.totalorder %v1901, 1
      %vm1910 = vcmp.eq.s32.totalorder %v1902, 1
      %vm1911 = vcmp.eq.s32.totalorder %v1903, 1
      %vm1912 = vmpackc.low %vm1904, %vm1904
      %vm1913 = vmpackc.low %vm1905, %vm1905
      %vm1914 = vmpackc.low %vm1906, %vm1906
      %vm1915 = vmpackc.low %vm1907, %vm1907
      %vm1916 = vmpackc.low %vm1908, %vm1908
      %vm1917 = vmpackc.low %vm1909, %vm1909
      %vm1918 = vmpackc.low %vm1910, %vm1910
      %vm1919 = vmpackc.low %vm1911, %vm1911
      %v1920 = vsel %vm1912, 65537, 0
      %v1921 = vsel %vm1913, 65537, 0
      %v1922 = vsel %vm1914, 65537, 0
      %v1923 = vsel %vm1915, 65537, 0
      %v1924 = vsel %vm1916, 65537, 0
      %v1925 = vsel %vm1917, 65537, 0
      %v1926 = vsel %vm1918, 65537, 0
      %v1927 = vsel %vm1919, 65537, 0
      %v1929 = vshrl.u32 %v1920, 16
      %v1931 = vrot.slane %v1929, 7
      %v1932 = vshll.u32 %v1920, 16
      %v1934 = vor.u32 %v1931, %v1932
      %v1935 = vrot.slane %v1931, 4
      %v1937 = vshrl.u32 %v1921, 16
      %v1939 = vrot.slane %v1937, 7
      %v1940 = vshll.u32 %v1921, 16
      %v1942 = vor.u32 %v1939, %v1940
      %v1943 = vsel %vm1096, %v1935, %v1942
      %v1944 = vrot.slane %v1939, 4
      %v1946 = vshrl.u32 %v1922, 16
      %v1948 = vrot.slane %v1946, 7
      %v1949 = vshll.u32 %v1922, 16
      %v1951 = vor.u32 %v1948, %v1949
      %v1952 = vsel %vm1096, %v1944, %v1951
      %v1953 = vrot.slane %v1948, 4
      %v1955 = vshrl.u32 %v1923, 16
      %v1957 = vrot.slane %v1955, 7
      %v1958 = vshll.u32 %v1923, 16
      %v1960 = vor.u32 %v1957, %v1958
      %v1961 = vsel %vm1096, %v1953, %v1960
      %v1962 = vrot.slane %v1957, 4
      %v1964 = vshrl.u32 %v1924, 16
      %v1966 = vrot.slane %v1964, 7
      %v1967 = vshll.u32 %v1924, 16
      %v1969 = vor.u32 %v1966, %v1967
      %v1970 = vsel %vm1096, %v1962, %v1969
      %v1971 = vrot.slane %v1966, 4
      %v1973 = vshrl.u32 %v1925, 16
      %v1975 = vrot.slane %v1973, 7
      %v1976 = vshll.u32 %v1925, 16
      %v1978 = vor.u32 %v1975, %v1976
      %v1979 = vsel %vm1096, %v1971, %v1978
      %v1980 = vrot.slane %v1975, 4
      %v1982 = vshrl.u32 %v1926, 16
      %v1984 = vrot.slane %v1982, 7
      %v1985 = vshll.u32 %v1926, 16
      %v1987 = vor.u32 %v1984, %v1985
      %v1988 = vsel %vm1096, %v1980, %v1987
      %v1989 = vrot.slane %v1984, 4
      %v1991 = vshrl.u32 %v1927, 16
      %v1993 = vrot.slane %v1991, 7
      %v1994 = vshll.u32 %v1927, 16
      %v1996 = vor.u32 %v1993, %v1994
      %v1997 = vsel %vm1096, %v1989, %v1996
      %v1998 = vrot.slane %v1993, 4
      %vm1999 = vcmp.ne.s16.totalorder %v1934, 0
      %vm2000 = vcmp.ne.s16.totalorder %v1943, 0
      %vm2001 = vcmp.ne.s16.totalorder %v1952, 0
      %vm2002 = vcmp.ne.s16.totalorder %v1961, 0
      %vm2003 = vcmp.ne.s16.totalorder %v1970, 0
      %vm2004 = vcmp.ne.s16.totalorder %v1979, 0
      %vm2005 = vcmp.ne.s16.totalorder %v1988, 0
      %vm2006 = vcmp.ne.s16.totalorder %v1997, 0
      %vm2007 = vcmp.ne.s16.totalorder %v1998, 0
      %v2008 = vsel %vm1999, %v1887, 0
      %v2009 = vsel %vm2000, %v1888, 0
      %v2010 = vsel %vm2001, %v1889, 0
      %v2011 = vsel %vm2002, %v1890, 0
      %v2012 = vsel %vm2003, %v1891, 0
      %v2013 = vsel %vm2004, %v1892, 0
      %v2014 = vsel %vm2005, %v1893, 0
      %v2015 = vsel %vm2006, %v1894, 0
      %v2016 = vsel %vm2007, %v1895, 0
      %v2017 = vld [vmem:[%s1 + $0x140] sm:$0xf]
      %v2018 = vld [vmem:[%s1 + $0x144] sm:$0xf]
      %v2019 = vld [vmem:[%s1 + $0x148] sm:$0xf]
      %v2020 = vld [vmem:[%s1 + $0x14c] sm:$0xf]
      %v2021 = vld [vmem:[%s1 + $0x150] sm:$0xf]
      %v2022 = vld [vmem:[%s1 + $0x154] sm:$0xf]
      %v2023 = vld [vmem:[%s1 + $0x158] sm:$0xf]
      %v2024 = vld [vmem:[%s1 + $0x15c] sm:$0xf]
      %v2025 = vld [vmem:[%s1 + $0x160] sm:$0xf]
      %v2026 = vld [vmem:[%s1 + $0x164] sm:$0xf]
      %v2027 = vld [vmem:[%s1 + $0x168] sm:$0xf]
      %v2028 = vld [vmem:[%s1 + $0x16c] sm:$0xf]
      %v2029 = vld [vmem:[%s1 + $0x170] sm:$0xf]
      %v2030 = vld [vmem:[%s1 + $0x174] sm:$0xf]
      %v2031 = vld [vmem:[%s1 + $0x178] sm:$0xf]
      %v2032 = vld [vmem:[%s1 + $0x17c] sm:$0xf]
      %v2042 = vunpack.c.l.b16 %v2008
      %v2043 = vunpack.c.l.b16 %v2009
      %v2044 = vunpack.c.l.b16 %v2010
      %v2045 = vunpack.c.l.b16 %v2011
      %v2046 = vunpack.c.l.b16 %v2012
      %v2047 = vunpack.c.l.b16 %v2013
      %v2048 = vunpack.c.l.b16 %v2014
      %v2049 = vunpack.c.l.b16 %v2015
      %v2050 = vunpack.c.l.b16 %v2016
      %v2051 = vpack.c.b16 %v2043, %v2042
      %v2052 = vpack.c.b16 %v2045, %v2044
      %v2053 = vpack.c.b16 %v2047, %v2046
      %v2054 = vpack.c.b16 %v2049, %v2048
      %v2055 = vpack.c.b16 %v2050, %v2050
      %v2057 = vshrl.u32 %v2051, 16
      %v2059 = vshll.u32 %v2051, 16
      %v2061 = vrot.slane %v2059, 1
      %v2062 = vor.u32 %v2057, %v2061
      %v2064 = vshll.u32 %v2052, 16
      %v2066 = vrot.slane %v2064, 1
      %v2067 = vsel %vm1225, %v2062, %v2066
      %v2068 = vshrl.u32 %v2052, 16
      %v2070 = vor.u32 %v2068, %v2066
      %v2072 = vshll.u32 %v2053, 16
      %v2074 = vrot.slane %v2072, 1
      %v2075 = vsel %vm1225, %v2070, %v2074
      %v2076 = vshrl.u32 %v2053, 16
      %v2078 = vor.u32 %v2076, %v2074
      %v2080 = vshll.u32 %v2054, 16
      %v2082 = vrot.slane %v2080, 1
      %v2083 = vsel %vm1225, %v2078, %v2082
      %v2084 = vshrl.u32 %v2054, 16
      %v2086 = vor.u32 %v2084, %v2082
      %v2088 = vshll.u32 %v2055, 16
      %v2090 = vrot.slane %v2088, 1
      %v2091 = vsel %vm1225, %v2086, %v2090
      %v2112 = vunpack.c.l.b16 %v2017
      %v2113 = vunpack.c.l.b16 %v2018
      %v2114 = vunpack.c.l.b16 %v2019
      %v2115 = vunpack.c.l.b16 %v2020
      %v2116 = vunpack.c.l.b16 %v2021
      %v2117 = vunpack.c.l.b16 %v2022
      %v2118 = vunpack.c.l.b16 %v2023
      %v2119 = vunpack.c.l.b16 %v2024
      %v2120 = vunpack.c.l.b16 %v2025
      %v2121 = vunpack.c.l.b16 %v2026
      %v2122 = vunpack.c.l.b16 %v2027
      %v2123 = vunpack.c.l.b16 %v2028
      %v2124 = vunpack.c.l.b16 %v2029
      %v2125 = vunpack.c.l.b16 %v2030
      %v2126 = vunpack.c.l.b16 %v2031
      %v2127 = vunpack.c.l.b16 %v2032
      %v2128 = vpack.c.b16 %v2113, %v2112
      %v2129 = vpack.c.b16 %v2115, %v2114
      %v2130 = vpack.c.b16 %v2117, %v2116
      %v2131 = vpack.c.b16 %v2119, %v2118
      %v2132 = vpack.c.b16 %v2121, %v2120
      %v2133 = vpack.c.b16 %v2123, %v2122
      %v2134 = vpack.c.b16 %v2125, %v2124
      %v2135 = vpack.c.b16 %v2127, %v2126
      %2144 = vmatprep.subr.bf16.mxu0 0
      %2145 = vmatpush1.bf16.msra.mxu0 %v2135
      %2146 = vmatprep.subr.bf16.mxu0 0
      %2147 = vmatpush1.bf16.msra.mxu0 %v2134
      %2148 = vmatprep.subr.bf16.mxu0 0
      %2149 = vmatpush1.bf16.msra.mxu0 %v2133
      %2150 = vmatprep.subr.bf16.mxu0 0
      %2151 = vmatpush1.bf16.msra.mxu0 %v2132
      %2152 = vmatprep.subr.bf16.mxu0 0
      %2153 = vmatpush1.bf16.msra.mxu0 %v2131
      %2154 = vmatprep.subr.bf16.mxu0 0
      %2155 = vmatpush1.bf16.msra.mxu0 %v2130
      %2156 = vmatprep.subr.bf16.mxu0 0
      %2157 = vmatpush1.bf16.msra.mxu0 %v2129
      %2158 = vmatprep.subr.bf16.mxu0 0
      %2159 = vmatpush1.bf16.msra.mxu0 %v2128
      %2160 = vmatprep.subr.bf16.mxu0 0
      %2161 = vmatpush2.bf16.msra.mxu0 0
      %2162 = vmatprep.subr.bf16.mxu0 0
      %2163 = vmatpush2.bf16.msra.mxu0 0
      %2164 = vmatprep.subr.bf16.mxu0 0
      %2165 = vmatpush2.bf16.msra.mxu0 0
      %2166 = vmatprep.subr.bf16.mxu0 0
      %2167 = vmatpush2.bf16.msra.mxu0 0
      %2168 = vmatprep.subr.bf16.mxu0 0
      %2169 = vmatpush2.bf16.msra.mxu0 0
      %2170 = vmatprep.subr.bf16.mxu0 0
      %2171 = vmatpush2.bf16.msra.mxu0 0
      %2172 = vmatprep.subr.bf16.mxu0 0
      %2173 = vmatpush2.bf16.msra.mxu0 0
      %2174 = vmatprep.subr.bf16.mxu0 0
      %2175 = vmatpush2.bf16.msra.mxu0 0
      %2176 = vmatprep.mubr.bf16.mxu0 0
      %2177 = vmatmul.mubr.bf16.gmra.mxu0 %v2067
      %v2178 = vpop.f32.mrf.mxu0
      %v2179 = vadd.f32 0.0, %v2178
      %v2180 = vpop.f32.mrf.mxu0
      %v2181 = vpop.f32.mrf.mxu0
      %v2182 = vadd.f32 0.0, %v2181
      %v2183 = vpop.f32.mrf.mxu0
      %2184 = vmatprep.mubr.bf16.mxu0 0
      %2185 = vmatmul.mubr.bf16.gmra.mxu0 %v2075
      %v2186 = vpop.f32.mrf.mxu0
      %v2187 = vadd.f32 0.0, %v2186
      %v2188 = vpop.f32.mrf.mxu0
      %v2189 = vpop.f32.mrf.mxu0
      %v2190 = vadd.f32 0.0, %v2189
      %v2191 = vpop.f32.mrf.mxu0
      %2192 = vmatprep.mubr.bf16.mxu0 0
      %2193 = vmatmul.mubr.bf16.gmra.mxu0 %v2083
      %v2194 = vpop.f32.mrf.mxu0
      %v2195 = vadd.f32 0.0, %v2194
      %v2196 = vpop.f32.mrf.mxu0
      %v2197 = vpop.f32.mrf.mxu0
      %v2198 = vadd.f32 0.0, %v2197
      %v2199 = vpop.f32.mrf.mxu0
      %2200 = vmatprep.mubr.bf16.mxu0 0
      %2201 = vmatmul.mubr.bf16.gmra.mxu0 %v2091
      %v2202 = vpop.f32.mrf.mxu0
      %v2203 = vadd.f32 0.0, %v2202
      %v2204 = vpop.f32.mrf.mxu0
      %v2205 = vpop.f32.mrf.mxu0
      %v2206 = vadd.f32 0.0, %v2205
      %v2207 = vpop.f32.mrf.mxu0
      %2208 = vdwg.mxu0
      %v2209 = vadd.f32 %v1879, %v2179
      %v2210 = vadd.f32 %v1880, %v2182
      %v2211 = vadd.f32 %v1881, %v2187
      %v2212 = vadd.f32 %v1882, %v2190
      %v2213 = vadd.f32 %v1883, %v2195
      %v2214 = vadd.f32 %v1884, %v2198
      %v2215 = vadd.f32 %v1885, %v2203
      %v2216 = vadd.f32 %v1886, %v2206
      %v2217 = vld [vmem:[#allocation2 + $0x8] sm:$0x8]
      %v2218 = vld [vmem:[#allocation2 + $0x28] sm:$0xf]
      %vm2219 = vmand %vm486, %vm494
      %vm2220 = vmand %vm487, %vm495
      %vm2221 = vmand %vm488, %vm496
      %vm2222 = vmand %vm489, %vm497
      %vm2223 = vmand %vm490, %vm498
      %vm2224 = vmand %vm491, %vm499
      %vm2225 = vmand %vm492, %vm500
      %vm2226 = vmand %vm493, %vm501
      %v2227 = vsel %vm2219, 1, 0
      %v2228 = vsel %vm2220, 1, 0
      %v2229 = vsel %vm2221, 1, 0
      %v2230 = vsel %vm2222, 1, 0
      %v2231 = vsel %vm2223, 1, 0
      %v2232 = vsel %vm2224, 1, 0
      %v2233 = vsel %vm2225, 1, 0
      %v2234 = vsel %vm2226, 1, 0
      %vm2235 = vcmp.eq.s32.totalorder %v2227, 1
      %vm2236 = vcmp.eq.s32.totalorder %v2228, 1
      %vm2237 = vcmp.eq.s32.totalorder %v2229, 1
      %vm2238 = vcmp.eq.s32.totalorder %v2230, 1
      %vm2239 = vcmp.eq.s32.totalorder %v2231, 1
      %vm2240 = vcmp.eq.s32.totalorder %v2232, 1
      %vm2241 = vcmp.eq.s32.totalorder %v2233, 1
      %vm2242 = vcmp.eq.s32.totalorder %v2234, 1
      %vm2243 = vmpackc.low %vm2235, %vm2235
      %vm2244 = vmpackc.low %vm2236, %vm2236
      %vm2245 = vmpackc.low %vm2237, %vm2237
      %vm2246 = vmpackc.low %vm2238, %vm2238
      %vm2247 = vmpackc.low %vm2239, %vm2239
      %vm2248 = vmpackc.low %vm2240, %vm2240
      %vm2249 = vmpackc.low %vm2241, %vm2241
      %vm2250 = vmpackc.low %vm2242, %vm2242
      %v2251 = vsel %vm2243, 65537, 0
      %v2252 = vsel %vm2244, 65537, 0
      %v2253 = vsel %vm2245, 65537, 0
      %v2254 = vsel %vm2246, 65537, 0
      %v2255 = vsel %vm2247, 65537, 0
      %v2256 = vsel %vm2248, 65537, 0
      %v2257 = vsel %vm2249, 65537, 0
      %v2258 = vsel %vm2250, 65537, 0
      %v2260 = vshll.u32 %v2251, 16
      %v2262 = vrot.slane %v2260, 5
      %v2263 = vshrl.u32 %v2251, 16
      %v2265 = vrot.slane %v2263, 4
      %v2266 = vor.u32 %v2265, %v2262
      %v2267 = vrot.slane %v2266, 4
      %v2269 = vshll.u32 %v2252, 16
      %v2271 = vrot.slane %v2269, 5
      %v2272 = vsel %vm561, %v2267, %v2271
      %v2273 = vshrl.u32 %v2252, 16
      %v2275 = vrot.slane %v2273, 4
      %v2276 = vor.u32 %v2275, %v2271
      %v2277 = vrot.slane %v2276, 4
      %v2279 = vshll.u32 %v2253, 16
      %v2281 = vrot.slane %v2279, 5
      %v2282 = vsel %vm561, %v2277, %v2281
      %v2283 = vshrl.u32 %v2253, 16
      %v2285 = vrot.slane %v2283, 4
      %v2286 = vor.u32 %v2285, %v2281
      %v2287 = vrot.slane %v2286, 4
      %v2289 = vshll.u32 %v2254, 16
      %v2291 = vrot.slane %v2289, 5
      %v2292 = vsel %vm561, %v2287, %v2291
      %v2293 = vshrl.u32 %v2254, 16
      %v2295 = vrot.slane %v2293, 4
      %v2296 = vor.u32 %v2295, %v2291
      %v2297 = vrot.slane %v2296, 4
      %v2299 = vshll.u32 %v2255, 16
      %v2301 = vrot.slane %v2299, 5
      %v2302 = vsel %vm561, %v2297, %v2301
      %v2303 = vshrl.u32 %v2255, 16
      %v2305 = vrot.slane %v2303, 4
      %v2306 = vor.u32 %v2305, %v2301
      %v2307 = vrot.slane %v2306, 4
      %v2309 = vshll.u32 %v2256, 16
      %v2311 = vrot.slane %v2309, 5
      %v2312 = vsel %vm561, %v2307, %v2311
      %v2313 = vshrl.u32 %v2256, 16
      %v2315 = vrot.slane %v2313, 4
      %v2316 = vor.u32 %v2315, %v2311
      %v2317 = vrot.slane %v2316, 4
      %v2319 = vshll.u32 %v2257, 16
      %v2321 = vrot.slane %v2319, 5
      %v2322 = vsel %vm561, %v2317, %v2321
      %v2323 = vshrl.u32 %v2257, 16
      %v2325 = vrot.slane %v2323, 4
      %v2326 = vor.u32 %v2325, %v2321
      %v2327 = vrot.slane %v2326, 4
      %v2329 = vshll.u32 %v2258, 16
      %v2331 = vrot.slane %v2329, 5
      %v2332 = vsel %vm561, %v2327, %v2331
      %v2333 = vshrl.u32 %v2258, 16
      %v2335 = vrot.slane %v2333, 4
      %v2336 = vor.u32 %v2335, %v2331
      %v2337 = vrot.slane %v2336, 4
      %vm2338 = vcmp.ne.s16.totalorder %v2262, 0
      %vm2339 = vcmp.ne.s16.totalorder %v2272, 0
      %vm2340 = vcmp.ne.s16.totalorder %v2282, 0
      %vm2341 = vcmp.ne.s16.totalorder %v2292, 0
      %vm2342 = vcmp.ne.s16.totalorder %v2302, 0
      %vm2343 = vcmp.ne.s16.totalorder %v2312, 0
      %vm2344 = vcmp.ne.s16.totalorder %v2322, 0
      %vm2345 = vcmp.ne.s16.totalorder %v2332, 0
      %vm2346 = vcmp.ne.s16.totalorder %v2337, 0
      %v2347 = vsel %vm2338, %v2217, 0
      %v2348 = vsel %vm2339, %v1888, 0
      %v2349 = vsel %vm2340, %v1889, 0
      %v2350 = vsel %vm2341, %v1890, 0
      %v2351 = vsel %vm2342, %v1891, 0
      %v2352 = vsel %vm2343, %v1892, 0
      %v2353 = vsel %vm2344, %v1893, 0
      %v2354 = vsel %vm2345, %v1894, 0
      %v2355 = vsel %vm2346, %v2218, 0
      %v2356 = vld [vmem:[%s1 + $0x180] sm:$0xf]
      %v2357 = vld [vmem:[%s1 + $0x184] sm:$0xf]
      %v2358 = vld [vmem:[%s1 + $0x188] sm:$0xf]
      %v2359 = vld [vmem:[%s1 + $0x18c] sm:$0xf]
      %v2360 = vld [vmem:[%s1 + $0x190] sm:$0xf]
      %v2361 = vld [vmem:[%s1 + $0x194] sm:$0xf]
      %v2362 = vld [vmem:[%s1 + $0x198] sm:$0xf]
      %v2363 = vld [vmem:[%s1 + $0x19c] sm:$0xf]
      %v2364 = vld [vmem:[%s1 + $0x1a0] sm:$0xf]
      %v2365 = vld [vmem:[%s1 + $0x1a4] sm:$0xf]
      %v2366 = vld [vmem:[%s1 + $0x1a8] sm:$0xf]
      %v2367 = vld [vmem:[%s1 + $0x1ac] sm:$0xf]
      %v2368 = vld [vmem:[%s1 + $0x1b0] sm:$0xf]
      %v2369 = vld [vmem:[%s1 + $0x1b4] sm:$0xf]
      %v2370 = vld [vmem:[%s1 + $0x1b8] sm:$0xf]
      %v2371 = vld [vmem:[%s1 + $0x1bc] sm:$0xf]
      %v2381 = vunpack.c.l.b16 %v2347
      %v2382 = vunpack.c.l.b16 %v2348
      %v2383 = vunpack.c.l.b16 %v2349
      %v2384 = vunpack.c.l.b16 %v2350
      %v2385 = vunpack.c.l.b16 %v2351
      %v2386 = vunpack.c.l.b16 %v2352
      %v2387 = vunpack.c.l.b16 %v2353
      %v2388 = vunpack.c.l.b16 %v2354
      %v2389 = vunpack.c.l.b16 %v2355
      %v2390 = vpack.c.b16 %v2382, %v2381
      %v2391 = vpack.c.b16 %v2384, %v2383
      %v2392 = vpack.c.b16 %v2386, %v2385
      %v2393 = vpack.c.b16 %v2388, %v2387
      %v2394 = vpack.c.b16 %v2389, %v2389
      %v2396 = vshrl.u32 %v2390, 16
      %v2398 = vrot.slane %v2396, 3
      %v2399 = vshll.u32 %v2390, 16
      %v2401 = vrot.slane %v2399, 4
      %v2402 = vor.u32 %v2398, %v2401
      %v2404 = vshrl.u32 %v2391, 16
      %v2406 = vrot.slane %v2404, 3
      %v2407 = vshll.u32 %v2391, 16
      %v2409 = vrot.slane %v2407, 4
      %v2410 = vor.u32 %v2406, %v2409
      %v2411 = vsel %vm883, %v2402, %v2410
      %v2413 = vshrl.u32 %v2392, 16
      %v2415 = vrot.slane %v2413, 3
      %v2416 = vshll.u32 %v2392, 16
      %v2418 = vrot.slane %v2416, 4
      %v2419 = vor.u32 %v2415, %v2418
      %v2420 = vsel %vm883, %v2410, %v2419
      %v2422 = vshrl.u32 %v2393, 16
      %v2424 = vrot.slane %v2422, 3
      %v2425 = vshll.u32 %v2393, 16
      %v2427 = vrot.slane %v2425, 4
      %v2428 = vor.u32 %v2424, %v2427
      %v2429 = vsel %vm883, %v2419, %v2428
      %v2431 = vshrl.u32 %v2394, 16
      %v2433 = vrot.slane %v2431, 3
      %v2434 = vshll.u32 %v2394, 16
      %v2436 = vrot.slane %v2434, 4
      %v2437 = vor.u32 %v2433, %v2436
      %v2438 = vsel %vm883, %v2428, %v2437
      %v2459 = vunpack.c.l.b16 %v2356
      %v2460 = vunpack.c.l.b16 %v2357
      %v2461 = vunpack.c.l.b16 %v2358
      %v2462 = vunpack.c.l.b16 %v2359
      %v2463 = vunpack.c.l.b16 %v2360
      %v2464 = vunpack.c.l.b16 %v2361
      %v2465 = vunpack.c.l.b16 %v2362
      %v2466 = vunpack.c.l.b16 %v2363
      %v2467 = vunpack.c.l.b16 %v2364
      %v2468 = vunpack.c.l.b16 %v2365
      %v2469 = vunpack.c.l.b16 %v2366
      %v2470 = vunpack.c.l.b16 %v2367
      %v2471 = vunpack.c.l.b16 %v2368
      %v2472 = vunpack.c.l.b16 %v2369
      %v2473 = vunpack.c.l.b16 %v2370
      %v2474 = vunpack.c.l.b16 %v2371
      %v2475 = vpack.c.b16 %v2460, %v2459
      %v2476 = vpack.c.b16 %v2462, %v2461
      %v2477 = vpack.c.b16 %v2464, %v2463
      %v2478 = vpack.c.b16 %v2466, %v2465
      %v2479 = vpack.c.b16 %v2468, %v2467
      %v2480 = vpack.c.b16 %v2470, %v2469
      %v2481 = vpack.c.b16 %v2472, %v2471
      %v2482 = vpack.c.b16 %v2474, %v2473
      %2491 = vmatprep.subr.bf16.mxu0 0
      %2492 = vmatpush1.bf16.msra.mxu0 %v2482
      %2493 = vmatprep.subr.bf16.mxu0 0
      %2494 = vmatpush1.bf16.msra.mxu0 %v2481
      %2495 = vmatprep.subr.bf16.mxu0 0
      %2496 = vmatpush1.bf16.msra.mxu0 %v2480
      %2497 = vmatprep.subr.bf16.mxu0 0
      %2498 = vmatpush1.bf16.msra.mxu0 %v2479
      %2499 = vmatprep.subr.bf16.mxu0 0
      %2500 = vmatpush1.bf16.msra.mxu0 %v2478
      %2501 = vmatprep.subr.bf16.mxu0 0
      %2502 = vmatpush1.bf16.msra.mxu0 %v2477
      %2503 = vmatprep.subr.bf16.mxu0 0
      %2504 = vmatpush1.bf16.msra.mxu0 %v2476
      %2505 = vmatprep.subr.bf16.mxu0 0
      %2506 = vmatpush1.bf16.msra.mxu0 %v2475
      %2507 = vmatprep.subr.bf16.mxu0 0
      %2508 = vmatpush2.bf16.msra.mxu0 0
      %2509 = vmatprep.subr.bf16.mxu0 0
      %2510 = vmatpush2.bf16.msra.mxu0 0
      %2511 = vmatprep.subr.bf16.mxu0 0
      %2512 = vmatpush2.bf16.msra.mxu0 0
      %2513 = vmatprep.subr.bf16.mxu0 0
      %2514 = vmatpush2.bf16.msra.mxu0 0
      %2515 = vmatprep.subr.bf16.mxu0 0
      %2516 = vmatpush2.bf16.msra.mxu0 0
      %2517 = vmatprep.subr.bf16.mxu0 0
      %2518 = vmatpush2.bf16.msra.mxu0 0
      %2519 = vmatprep.subr.bf16.mxu0 0
      %2520 = vmatpush2.bf16.msra.mxu0 0
      %2521 = vmatprep.subr.bf16.mxu0 0
      %2522 = vmatpush2.bf16.msra.mxu0 0
      %2523 = vmatprep.mubr.bf16.mxu0 0
      %2524 = vmatmul.mubr.bf16.gmra.mxu0 %v2411
      %v2525 = vpop.f32.mrf.mxu0
      %v2526 = vadd.f32 0.0, %v2525
      %v2527 = vpop.f32.mrf.mxu0
      %v2528 = vpop.f32.mrf.mxu0
      %v2529 = vadd.f32 0.0, %v2528
      %v2530 = vpop.f32.mrf.mxu0
      %2531 = vmatprep.mubr.bf16.mxu0 0
      %2532 = vmatmul.mubr.bf16.gmra.mxu0 %v2420
      %v2533 = vpop.f32.mrf.mxu0
      %v2534 = vadd.f32 0.0, %v2533
      %v2535 = vpop.f32.mrf.mxu0
      %v2536 = vpop.f32.mrf.mxu0
      %v2537 = vadd.f32 0.0, %v2536
      %v2538 = vpop.f32.mrf.mxu0
      %2539 = vmatprep.mubr.bf16.mxu0 0
      %2540 = vmatmul.mubr.bf16.gmra.mxu0 %v2429
      %v2541 = vpop.f32.mrf.mxu0
      %v2542 = vadd.f32 0.0, %v2541
      %v2543 = vpop.f32.mrf.mxu0
      %v2544 = vpop.f32.mrf.mxu0
      %v2545 = vadd.f32 0.0, %v2544
      %v2546 = vpop.f32.mrf.mxu0
      %2547 = vmatprep.mubr.bf16.mxu0 0
      %2548 = vmatmul.mubr.bf16.gmra.mxu0 %v2438
      %v2549 = vpop.f32.mrf.mxu0
      %v2550 = vadd.f32 0.0, %v2549
      %v2551 = vpop.f32.mrf.mxu0
      %v2552 = vpop.f32.mrf.mxu0
      %v2553 = vadd.f32 0.0, %v2552
      %v2554 = vpop.f32.mrf.mxu0
      %2555 = vdwg.mxu0
      %v2556 = vadd.f32 %v2209, %v2526
      %v2557 = vadd.f32 %v2210, %v2529
      %v2558 = vadd.f32 %v2211, %v2534
      %v2559 = vadd.f32 %v2212, %v2537
      %v2560 = vadd.f32 %v2213, %v2542
      %v2561 = vadd.f32 %v2214, %v2545
      %v2562 = vadd.f32 %v2215, %v2550
      %v2563 = vadd.f32 %v2216, %v2553
      %v2564 = vsel %vm486, 1, 0
      %v2565 = vsel %vm487, 1, 0
      %v2566 = vsel %vm488, 1, 0
      %v2567 = vsel %vm489, 1, 0
      %v2568 = vsel %vm490, 1, 0
      %v2569 = vsel %vm491, 1, 0
      %v2570 = vsel %vm492, 1, 0
      %v2571 = vsel %vm493, 1, 0
      %vm2572 = vcmp.eq.s32.totalorder %v2564, 1
      %vm2573 = vcmp.eq.s32.totalorder %v2565, 1
      %vm2574 = vcmp.eq.s32.totalorder %v2566, 1
      %vm2575 = vcmp.eq.s32.totalorder %v2567, 1
      %vm2576 = vcmp.eq.s32.totalorder %v2568, 1
      %vm2577 = vcmp.eq.s32.totalorder %v2569, 1
      %vm2578 = vcmp.eq.s32.totalorder %v2570, 1
      %vm2579 = vcmp.eq.s32.totalorder %v2571, 1
      %vm2580 = vmpackc.low %vm2572, %vm2572
      %vm2581 = vmpackc.low %vm2573, %vm2573
      %vm2582 = vmpackc.low %vm2574, %vm2574
      %vm2583 = vmpackc.low %vm2575, %vm2575
      %vm2584 = vmpackc.low %vm2576, %vm2576
      %vm2585 = vmpackc.low %vm2577, %vm2577
      %vm2586 = vmpackc.low %vm2578, %vm2578
      %vm2587 = vmpackc.low %vm2579, %vm2579
      %v2588 = vsel %vm2580, %v1888, 0
      %v2589 = vsel %vm2581, %v1889, 0
      %v2590 = vsel %vm2582, %v1890, 0
      %v2591 = vsel %vm2583, %v1891, 0
      %v2592 = vsel %vm2584, %v1892, 0
      %v2593 = vsel %vm2585, %v1893, 0
      %v2594 = vsel %vm2586, %v1894, 0
      %v2595 = vsel %vm2587, %v2218, 0
      %v2596 = vld [vmem:[%s1 + $0x1c0] sm:$0xf]
      %v2597 = vld [vmem:[%s1 + $0x1c4] sm:$0xf]
      %v2598 = vld [vmem:[%s1 + $0x1c8] sm:$0xf]
      %v2599 = vld [vmem:[%s1 + $0x1cc] sm:$0xf]
      %v2600 = vld [vmem:[%s1 + $0x1d0] sm:$0xf]
      %v2601 = vld [vmem:[%s1 + $0x1d4] sm:$0xf]
      %v2602 = vld [vmem:[%s1 + $0x1d8] sm:$0xf]
      %v2603 = vld [vmem:[%s1 + $0x1dc] sm:$0xf]
      %v2604 = vld [vmem:[%s1 + $0x1e0] sm:$0xf]
      %v2605 = vld [vmem:[%s1 + $0x1e4] sm:$0xf]
      %v2606 = vld [vmem:[%s1 + $0x1e8] sm:$0xf]
      %v2607 = vld [vmem:[%s1 + $0x1ec] sm:$0xf]
      %v2608 = vld [vmem:[%s1 + $0x1f0] sm:$0xf]
      %v2609 = vld [vmem:[%s1 + $0x1f4] sm:$0xf]
      %v2610 = vld [vmem:[%s1 + $0x1f8] sm:$0xf]
      %v2611 = vld [vmem:[%s1 + $0x1fc] sm:$0xf]
      %v2620 = vunpack.c.l.b16 %v2588
      %v2621 = vunpack.c.l.b16 %v2589
      %v2622 = vunpack.c.l.b16 %v2590
      %v2623 = vunpack.c.l.b16 %v2591
      %v2624 = vunpack.c.l.b16 %v2592
      %v2625 = vunpack.c.l.b16 %v2593
      %v2626 = vunpack.c.l.b16 %v2594
      %v2627 = vunpack.c.l.b16 %v2595
      %v2628 = vpack.c.b16 %v2621, %v2620
      %v2629 = vpack.c.b16 %v2623, %v2622
      %v2630 = vpack.c.b16 %v2625, %v2624
      %v2631 = vpack.c.b16 %v2627, %v2626
      %v2652 = vunpack.c.l.b16 %v2596
      %v2653 = vunpack.c.l.b16 %v2597
      %v2654 = vunpack.c.l.b16 %v2598
      %v2655 = vunpack.c.l.b16 %v2599
      %v2656 = vunpack.c.l.b16 %v2600
      %v2657 = vunpack.c.l.b16 %v2601
      %v2658 = vunpack.c.l.b16 %v2602
      %v2659 = vunpack.c.l.b16 %v2603
      %v2660 = vunpack.c.l.b16 %v2604
      %v2661 = vunpack.c.l.b16 %v2605
      %v2662 = vunpack.c.l.b16 %v2606
      %v2663 = vunpack.c.l.b16 %v2607
      %v2664 = vunpack.c.l.b16 %v2608
      %v2665 = vunpack.c.l.b16 %v2609
      %v2666 = vunpack.c.l.b16 %v2610
      %v2667 = vunpack.c.l.b16 %v2611
      %v2668 = vpack.c.b16 %v2653, %v2652
      %v2669 = vpack.c.b16 %v2655, %v2654
      %v2670 = vpack.c.b16 %v2657, %v2656
      %v2671 = vpack.c.b16 %v2659, %v2658
      %v2672 = vpack.c.b16 %v2661, %v2660
      %v2673 = vpack.c.b16 %v2663, %v2662
      %v2674 = vpack.c.b16 %v2665, %v2664
      %v2675 = vpack.c.b16 %v2667, %v2666
      %2684 = vmatprep.subr.bf16.mxu0 0
      %2685 = vmatpush1.bf16.msra.mxu0 %v2675
      %2686 = vmatprep.subr.bf16.mxu0 0
      %2687 = vmatpush1.bf16.msra.mxu0 %v2674
      %2688 = vmatprep.subr.bf16.mxu0 0
      %2689 = vmatpush1.bf16.msra.mxu0 %v2673
      %2690 = vmatprep.subr.bf16.mxu0 0
      %2691 = vmatpush1.bf16.msra.mxu0 %v2672
      %2692 = vmatprep.subr.bf16.mxu0 0
      %2693 = vmatpush1.bf16.msra.mxu0 %v2671
      %2694 = vmatprep.subr.bf16.mxu0 0
      %2695 = vmatpush1.bf16.msra.mxu0 %v2670
      %2696 = vmatprep.subr.bf16.mxu0 0
      %2697 = vmatpush1.bf16.msra.mxu0 %v2669
      %2698 = vmatprep.subr.bf16.mxu0 0
      %2699 = vmatpush1.bf16.msra.mxu0 %v2668
      %2700 = vmatprep.subr.bf16.mxu0 0
      %2701 = vmatpush2.bf16.msra.mxu0 0
      %2702 = vmatprep.subr.bf16.mxu0 0
      %2703 = vmatpush2.bf16.msra.mxu0 0
      %2704 = vmatprep.subr.bf16.mxu0 0
      %2705 = vmatpush2.bf16.msra.mxu0 0
      %2706 = vmatprep.subr.bf16.mxu0 0
      %2707 = vmatpush2.bf16.msra.mxu0 0
      %2708 = vmatprep.subr.bf16.mxu0 0
      %2709 = vmatpush2.bf16.msra.mxu0 0
      %2710 = vmatprep.subr.bf16.mxu0 0
      %2711 = vmatpush2.bf16.msra.mxu0 0
      %2712 = vmatprep.subr.bf16.mxu0 0
      %2713 = vmatpush2.bf16.msra.mxu0 0
      %2714 = vmatprep.subr.bf16.mxu0 0
      %2715 = vmatpush2.bf16.msra.mxu0 0
      %2716 = vmatprep.mubr.bf16.mxu0 0
      %2717 = vmatmul.mubr.bf16.gmra.mxu0 %v2628
      %v2718 = vpop.f32.mrf.mxu0
      %v2719 = vadd.f32 0.0, %v2718
      %v2720 = vpop.f32.mrf.mxu0
      %v2721 = vpop.f32.mrf.mxu0
      %v2722 = vadd.f32 0.0, %v2721
      %v2723 = vpop.f32.mrf.mxu0
      %2724 = vmatprep.mubr.bf16.mxu0 0
      %2725 = vmatmul.mubr.bf16.gmra.mxu0 %v2629
      %v2726 = vpop.f32.mrf.mxu0
      %v2727 = vadd.f32 0.0, %v2726
      %v2728 = vpop.f32.mrf.mxu0
      %v2729 = vpop.f32.mrf.mxu0
      %v2730 = vadd.f32 0.0, %v2729
      %v2731 = vpop.f32.mrf.mxu0
      %2732 = vmatprep.mubr.bf16.mxu0 0
      %2733 = vmatmul.mubr.bf16.gmra.mxu0 %v2630
      %v2734 = vpop.f32.mrf.mxu0
      %v2735 = vadd.f32 0.0, %v2734
      %v2736 = vpop.f32.mrf.mxu0
      %v2737 = vpop.f32.mrf.mxu0
      %v2738 = vadd.f32 0.0, %v2737
      %v2739 = vpop.f32.mrf.mxu0
      %2740 = vmatprep.mubr.bf16.mxu0 0
      %2741 = vmatmul.mubr.bf16.gmra.mxu0 %v2631
      %v2742 = vpop.f32.mrf.mxu0
      %v2743 = vadd.f32 0.0, %v2742
      %v2744 = vpop.f32.mrf.mxu0
      %v2745 = vpop.f32.mrf.mxu0
      %v2746 = vadd.f32 0.0, %v2745
      %v2747 = vpop.f32.mrf.mxu0
      %2748 = vdwg.mxu0
      %v2749 = vadd.f32 %v2556, %v2719
      %v2750 = vadd.f32 %v2557, %v2722
      %v2751 = vadd.f32 %v2558, %v2727
      %v2752 = vadd.f32 %v2559, %v2730
      %v2753 = vadd.f32 %v2560, %v2735
      %v2754 = vadd.f32 %v2561, %v2738
      %v2755 = vadd.f32 %v2562, %v2743
      %v2756 = vadd.f32 %v2563, %v2746
      %v2757 = vld [vmem:[#allocation2 + $0xc] sm:$0xf]
      %v2758 = vld [vmem:[#allocation2 + $0x10] sm:$0xf]
      %v2759 = vld [vmem:[#allocation2 + $0x14] sm:$0xf]
      %v2760 = vld [vmem:[#allocation2 + $0x18] sm:$0xf]
      %v2761 = vld [vmem:[#allocation2 + $0x1c] sm:$0xf]
      %v2762 = vld [vmem:[#allocation2 + $0x20] sm:$0xf]
      %v2763 = vld [vmem:[#allocation2 + $0x24] sm:$0xf]
      %v2764 = vld [vmem:[#allocation2 + $0x28] sm:$0xf]
      %v2765 = vld [vmem:[#allocation2 + $0x2c] sm:$0x1]
      %vm2766 = vmand %vm486, %vm502
      %vm2767 = vmand %vm487, %vm503
      %vm2768 = vmand %vm488, %vm504
      %vm2769 = vmand %vm489, %vm505
      %vm2770 = vmand %vm490, %vm506
      %vm2771 = vmand %vm491, %vm507
      %vm2772 = vmand %vm492, %vm508
      %vm2773 = vmand %vm493, %vm509
      %v2774 = vsel %vm2766, 1, 0
      %v2775 = vsel %vm2767, 1, 0
      %v2776 = vsel %vm2768, 1, 0
      %v2777 = vsel %vm2769, 1, 0
      %v2778 = vsel %vm2770, 1, 0
      %v2779 = vsel %vm2771, 1, 0
      %v2780 = vsel %vm2772, 1, 0
      %v2781 = vsel %vm2773, 1, 0
      %vm2782 = vcmp.eq.s32.totalorder %v2774, 1
      %vm2783 = vcmp.eq.s32.totalorder %v2775, 1
      %vm2784 = vcmp.eq.s32.totalorder %v2776, 1
      %vm2785 = vcmp.eq.s32.totalorder %v2777, 1
      %vm2786 = vcmp.eq.s32.totalorder %v2778, 1
      %vm2787 = vcmp.eq.s32.totalorder %v2779, 1
      %vm2788 = vcmp.eq.s32.totalorder %v2780, 1
      %vm2789 = vcmp.eq.s32.totalorder %v2781, 1
      %vm2790 = vmpackc.low %vm2782, %vm2782
      %vm2791 = vmpackc.low %vm2783, %vm2783
      %vm2792 = vmpackc.low %vm2784, %vm2784
      %vm2793 = vmpackc.low %vm2785, %vm2785
      %vm2794 = vmpackc.low %vm2786, %vm2786
      %vm2795 = vmpackc.low %vm2787, %vm2787
      %vm2796 = vmpackc.low %vm2788, %vm2788
      %vm2797 = vmpackc.low %vm2789, %vm2789
      %v2798 = vsel %vm2790, 65537, 0
      %v2799 = vsel %vm2791, 65537, 0
      %v2800 = vsel %vm2792, 65537, 0
      %v2801 = vsel %vm2793, 65537, 0
      %v2802 = vsel %vm2794, 65537, 0
      %v2803 = vsel %vm2795, 65537, 0
      %v2804 = vsel %vm2796, 65537, 0
      %v2805 = vsel %vm2797, 65537, 0
      %v2807 = vshrl.u32 %v2798, 16
      %v2809 = vrot.slane %v2807, 7
      %v2810 = vshll.u32 %v2798, 16
      %v2812 = vor.u32 %v2809, %v2810
      %v2813 = vrot.slane %v2809, 4
      %v2815 = vshrl.u32 %v2799, 16
      %v2817 = vrot.slane %v2815, 7
      %v2818 = vshll.u32 %v2799, 16
      %v2820 = vor.u32 %v2817, %v2818
      %v2821 = vsel %vm1096, %v2813, %v2820
      %v2822 = vrot.slane %v2817, 4
      %v2824 = vshrl.u32 %v2800, 16
      %v2826 = vrot.slane %v2824, 7
      %v2827 = vshll.u32 %v2800, 16
      %v2829 = vor.u32 %v2826, %v2827
      %v2830 = vsel %vm1096, %v2822, %v2829
      %v2831 = vrot.slane %v2826, 4
      %v2833 = vshrl.u32 %v2801, 16
      %v2835 = vrot.slane %v2833, 7
      %v2836 = vshll.u32 %v2801, 16
      %v2838 = vor.u32 %v2835, %v2836
      %v2839 = vsel %vm1096, %v2831, %v2838
      %v2840 = vrot.slane %v2835, 4
      %v2842 = vshrl.u32 %v2802, 16
      %v2844 = vrot.slane %v2842, 7
      %v2845 = vshll.u32 %v2802, 16
      %v2847 = vor.u32 %v2844, %v2845
      %v2848 = vsel %vm1096, %v2840, %v2847
      %v2849 = vrot.slane %v2844, 4
      %v2851 = vshrl.u32 %v2803, 16
      %v2853 = vrot.slane %v2851, 7
      %v2854 = vshll.u32 %v2803, 16
      %v2856 = vor.u32 %v2853, %v2854
      %v2857 = vsel %vm1096, %v2849, %v2856
      %v2858 = vrot.slane %v2853, 4
      %v2860 = vshrl.u32 %v2804, 16
      %v2862 = vrot.slane %v2860, 7
      %v2863 = vshll.u32 %v2804, 16
      %v2865 = vor.u32 %v2862, %v2863
      %v2866 = vsel %vm1096, %v2858, %v2865
      %v2867 = vrot.slane %v2862, 4
      %v2869 = vshrl.u32 %v2805, 16
      %v2871 = vrot.slane %v2869, 7
      %v2872 = vshll.u32 %v2805, 16
      %v2874 = vor.u32 %v2871, %v2872
      %v2875 = vsel %vm1096, %v2867, %v2874
      %v2876 = vrot.slane %v2871, 4
      %vm2877 = vcmp.ne.s16.totalorder %v2812, 0
      %vm2878 = vcmp.ne.s16.totalorder %v2821, 0
      %vm2879 = vcmp.ne.s16.totalorder %v2830, 0
      %vm2880 = vcmp.ne.s16.totalorder %v2839, 0
      %vm2881 = vcmp.ne.s16.totalorder %v2848, 0
      %vm2882 = vcmp.ne.s16.totalorder %v2857, 0
      %vm2883 = vcmp.ne.s16.totalorder %v2866, 0
      %vm2884 = vcmp.ne.s16.totalorder %v2875, 0
      %vm2885 = vcmp.ne.s16.totalorder %v2876, 0
      %v2886 = vsel %vm2877, %v2757, 0
      %v2887 = vsel %vm2878, %v2758, 0
      %v2888 = vsel %vm2879, %v2759, 0
      %v2889 = vsel %vm2880, %v2760, 0
      %v2890 = vsel %vm2881, %v2761, 0
      %v2891 = vsel %vm2882, %v2762, 0
      %v2892 = vsel %vm2883, %v2763, 0
      %v2893 = vsel %vm2884, %v2764, 0
      %v2894 = vsel %vm2885, %v2765, 0
      %v2895 = vld [vmem:[%s1 + $0x200] sm:$0xf]
      %v2896 = vld [vmem:[%s1 + $0x204] sm:$0xf]
      %v2897 = vld [vmem:[%s1 + $0x208] sm:$0xf]
      %v2898 = vld [vmem:[%s1 + $0x20c] sm:$0xf]
      %v2899 = vld [vmem:[%s1 + $0x210] sm:$0xf]
      %v2900 = vld [vmem:[%s1 + $0x214] sm:$0xf]
      %v2901 = vld [vmem:[%s1 + $0x218] sm:$0xf]
      %v2902 = vld [vmem:[%s1 + $0x21c] sm:$0xf]
      %v2903 = vld [vmem:[%s1 + $0x220] sm:$0xf]
      %v2904 = vld [vmem:[%s1 + $0x224] sm:$0xf]
      %v2905 = vld [vmem:[%s1 + $0x228] sm:$0xf]
      %v2906 = vld [vmem:[%s1 + $0x22c] sm:$0xf]
      %v2907 = vld [vmem:[%s1 + $0x230] sm:$0xf]
      %v2908 = vld [vmem:[%s1 + $0x234] sm:$0xf]
      %v2909 = vld [vmem:[%s1 + $0x238] sm:$0xf]
      %v2910 = vld [vmem:[%s1 + $0x23c] sm:$0xf]
      %v2920 = vunpack.c.l.b16 %v2886
      %v2921 = vunpack.c.l.b16 %v2887
      %v2922 = vunpack.c.l.b16 %v2888
      %v2923 = vunpack.c.l.b16 %v2889
      %v2924 = vunpack.c.l.b16 %v2890
      %v2925 = vunpack.c.l.b16 %v2891
      %v2926 = vunpack.c.l.b16 %v2892
      %v2927 = vunpack.c.l.b16 %v2893
      %v2928 = vunpack.c.l.b16 %v2894
      %v2929 = vpack.c.b16 %v2921, %v2920
      %v2930 = vpack.c.b16 %v2923, %v2922
      %v2931 = vpack.c.b16 %v2925, %v2924
      %v2932 = vpack.c.b16 %v2927, %v2926
      %v2933 = vpack.c.b16 %v2928, %v2928
      %v2935 = vshrl.u32 %v2929, 16
      %v2937 = vshll.u32 %v2929, 16
      %v2939 = vrot.slane %v2937, 1
      %v2940 = vor.u32 %v2935, %v2939
      %v2942 = vshll.u32 %v2930, 16
      %v2944 = vrot.slane %v2942, 1
      %v2945 = vsel %vm1225, %v2940, %v2944
      %v2946 = vshrl.u32 %v2930, 16
      %v2948 = vor.u32 %v2946, %v2944
      %v2950 = vshll.u32 %v2931, 16
      %v2952 = vrot.slane %v2950, 1
      %v2953 = vsel %vm1225, %v2948, %v2952
      %v2954 = vshrl.u32 %v2931, 16
      %v2956 = vor.u32 %v2954, %v2952
      %v2958 = vshll.u32 %v2932, 16
      %v2960 = vrot.slane %v2958, 1
      %v2961 = vsel %vm1225, %v2956, %v2960
      %v2962 = vshrl.u32 %v2932, 16
      %v2964 = vor.u32 %v2962, %v2960
      %v2966 = vshll.u32 %v2933, 16
      %v2968 = vrot.slane %v2966, 1
      %v2969 = vsel %vm1225, %v2964, %v2968
      %v2990 = vunpack.c.l.b16 %v2895
      %v2991 = vunpack.c.l.b16 %v2896
      %v2992 = vunpack.c.l.b16 %v2897
      %v2993 = vunpack.c.l.b16 %v2898
      %v2994 = vunpack.c.l.b16 %v2899
      %v2995 = vunpack.c.l.b16 %v2900
      %v2996 = vunpack.c.l.b16 %v2901
      %v2997 = vunpack.c.l.b16 %v2902
      %v2998 = vunpack.c.l.b16 %v2903
      %v2999 = vunpack.c.l.b16 %v2904
      %v3000 = vunpack.c.l.b16 %v2905
      %v3001 = vunpack.c.l.b16 %v2906
      %v3002 = vunpack.c.l.b16 %v2907
      %v3003 = vunpack.c.l.b16 %v2908
      %v3004 = vunpack.c.l.b16 %v2909
      %v3005 = vunpack.c.l.b16 %v2910
      %v3006 = vpack.c.b16 %v2991, %v2990
      %v3007 = vpack.c.b16 %v2993, %v2992
      %v3008 = vpack.c.b16 %v2995, %v2994
      %v3009 = vpack.c.b16 %v2997, %v2996
      %v3010 = vpack.c.b16 %v2999, %v2998
      %v3011 = vpack.c.b16 %v3001, %v3000
      %v3012 = vpack.c.b16 %v3003, %v3002
      %v3013 = vpack.c.b16 %v3005, %v3004
      %3022 = vmatprep.subr.bf16.mxu0 0
      %3023 = vmatpush1.bf16.msra.mxu0 %v3013
      %3024 = vmatprep.subr.bf16.mxu0 0
      %3025 = vmatpush1.bf16.msra.mxu0 %v3012
      %3026 = vmatprep.subr.bf16.mxu0 0
      %3027 = vmatpush1.bf16.msra.mxu0 %v3011
      %3028 = vmatprep.subr.bf16.mxu0 0
      %3029 = vmatpush1.bf16.msra.mxu0 %v3010
      %3030 = vmatprep.subr.bf16.mxu0 0
      %3031 = vmatpush1.bf16.msra.mxu0 %v3009
      %3032 = vmatprep.subr.bf16.mxu0 0
      %3033 = vmatpush1.bf16.msra.mxu0 %v3008
      %3034 = vmatprep.subr.bf16.mxu0 0
      %3035 = vmatpush1.bf16.msra.mxu0 %v3007
      %3036 = vmatprep.subr.bf16.mxu0 0
      %3037 = vmatpush1.bf16.msra.mxu0 %v3006
      %3038 = vmatprep.subr.bf16.mxu0 0
      %3039 = vmatpush2.bf16.msra.mxu0 0
      %3040 = vmatprep.subr.bf16.mxu0 0
      %3041 = vmatpush2.bf16.msra.mxu0 0
      %3042 = vmatprep.subr.bf16.mxu0 0
      %3043 = vmatpush2.bf16.msra.mxu0 0
      %3044 = vmatprep.subr.bf16.mxu0 0
      %3045 = vmatpush2.bf16.msra.mxu0 0
      %3046 = vmatprep.subr.bf16.mxu0 0
      %3047 = vmatpush2.bf16.msra.mxu0 0
      %3048 = vmatprep.subr.bf16.mxu0 0
      %3049 = vmatpush2.bf16.msra.mxu0 0
      %3050 = vmatprep.subr.bf16.mxu0 0
      %3051 = vmatpush2.bf16.msra.mxu0 0
      %3052 = vmatprep.subr.bf16.mxu0 0
      %3053 = vmatpush2.bf16.msra.mxu0 0
      %3054 = vmatprep.mubr.bf16.mxu0 0
      %3055 = vmatmul.mubr.bf16.gmra.mxu0 %v2945
      %v3056 = vpop.f32.mrf.mxu0
      %v3057 = vadd.f32 0.0, %v3056
      %v3058 = vpop.f32.mrf.mxu0
      %v3059 = vpop.f32.mrf.mxu0
      %v3060 = vadd.f32 0.0, %v3059
      %v3061 = vpop.f32.mrf.mxu0
      %3062 = vmatprep.mubr.bf16.mxu0 0
      %3063 = vmatmul.mubr.bf16.gmra.mxu0 %v2953
      %v3064 = vpop.f32.mrf.mxu0
      %v3065 = vadd.f32 0.0, %v3064
      %v3066 = vpop.f32.mrf.mxu0
      %v3067 = vpop.f32.mrf.mxu0
      %v3068 = vadd.f32 0.0, %v3067
      %v3069 = vpop.f32.mrf.mxu0
      %3070 = vmatprep.mubr.bf16.mxu0 0
      %3071 = vmatmul.mubr.bf16.gmra.mxu0 %v2961
      %v3072 = vpop.f32.mrf.mxu0
      %v3073 = vadd.f32 0.0, %v3072
      %v3074 = vpop.f32.mrf.mxu0
      %v3075 = vpop.f32.mrf.mxu0
      %v3076 = vadd.f32 0.0, %v3075
      %v3077 = vpop.f32.mrf.mxu0
      %3078 = vmatprep.mubr.bf16.mxu0 0
      %3079 = vmatmul.mubr.bf16.gmra.mxu0 %v2969
      %v3080 = vpop.f32.mrf.mxu0
      %v3081 = vadd.f32 0.0, %v3080
      %v3082 = vpop.f32.mrf.mxu0
      %v3083 = vpop.f32.mrf.mxu0
      %v3084 = vadd.f32 0.0, %v3083
      %v3085 = vpop.f32.mrf.mxu0
      %3086 = vdwg.mxu0
      %v3087 = vadd.f32 %v2749, %v3057
      %v3088 = vadd.f32 %v2750, %v3060
      %v3089 = vadd.f32 %v2751, %v3065
      %v3090 = vadd.f32 %v2752, %v3068
      %v3091 = vadd.f32 %v2753, %v3073
      %v3092 = vadd.f32 %v2754, %v3076
      %v3093 = vadd.f32 %v2755, %v3081
      %v3094 = vadd.f32 %v2756, %v3084
      %v3095 = vpack.c.bf16 %v3088, %v3087
      %v3096 = vpack.c.bf16 %v3090, %v3089
      %v3097 = vpack.c.bf16 %v3092, %v3091
      %v3098 = vpack.c.bf16 %v3094, %v3093
      %v3103 = vunpack.c.l.b16 %v3095
      %v3104 = vunpack.c.h.b16 %v3095
      %v3105 = vunpack.c.l.b16 %v3096
      %v3106 = vunpack.c.h.b16 %v3096
      %v3107 = vunpack.c.l.b16 %v3097
      %v3108 = vunpack.c.h.b16 %v3097
      %v3109 = vunpack.c.l.b16 %v3098
      %v3110 = vunpack.c.h.b16 %v3098
      %v3111 = vpack.c.b16 %v3103, %v3103
      %v3112 = vpack.c.b16 %v3104, %v3104
      %v3113 = vpack.c.b16 %v3105, %v3105
      %v3114 = vpack.c.b16 %v3106, %v3106
      %v3115 = vpack.c.b16 %v3107, %v3107
      %v3116 = vpack.c.b16 %v3108, %v3108
      %v3117 = vpack.c.b16 %v3109, %v3109
      %v3118 = vpack.c.b16 %v3110, %v3110
      %3127 = vst [vmem:[%s231] sm:$0xf] %v3111
      %3128 = vst [vmem:[%s231 + $0x4] sm:$0xf] %v3112
      %3129 = vst [vmem:[%s231 + $0x8] sm:$0xf] %v3113
      %3130 = vst [vmem:[%s231 + $0xc] sm:$0xf] %v3114
      %3131 = vst [vmem:[%s231 + $0x10] sm:$0xf] %v3115
      %3132 = vst [vmem:[%s231 + $0x14] sm:$0xf] %v3116
      %3133 = vst [vmem:[%s231 + $0x18] sm:$0xf] %v3117
      %3134 = vst [vmem:[%s231 + $0x1c] sm:$0xf] %v3118
      %v3135 = vadd.f32 %v3087, %v3088
      %v3136 = vadd.f32 %v3135, %v3089
      %v3137 = vadd.f32 %v3136, %v3090
      %v3138 = vadd.f32 %v3137, %v3091
      %v3139 = vadd.f32 %v3138, %v3092
      %v3140 = vadd.f32 %v3139, %v3093
      %v3141 = vadd.f32 %v3140, %v3094
      %v3142 = vrot.slane %v3141, 4
      %v3143 = vadd.f32 %v3141, %v3142
      %v3144 = vrot.slane %v3143, 2
      %v3145 = vadd.f32 %v3143, %v3144
      %v3146 = vrot.slane %v3145, 1
      %v3147 = vadd.f32 %v3145, %v3146
      %v3148 = vmul.f32 %v3147, 0.015625
      %v3149 = vsub.f32 %v3087, %v3148
      %v3150 = vsub.f32 %v3088, %v3148
      %v3151 = vsub.f32 %v3089, %v3148
      %v3152 = vsub.f32 %v3090, %v3148
      %v3153 = vsub.f32 %v3091, %v3148
      %v3154 = vsub.f32 %v3092, %v3148
      %v3155 = vsub.f32 %v3093, %v3148
      %v3156 = vsub.f32 %v3094, %v3148
      %3157 = vst [vmem:[%s235] sm:$0x1] %v3147
      %v3158 = vmul.f32 %v3149, %v3149
      %v3159 = vmul.f32 %v3150, %v3150
      %v3160 = vmul.f32 %v3151, %v3151
      %v3161 = vmul.f32 %v3152, %v3152
      %v3162 = vmul.f32 %v3153, %v3153
      %v3163 = vmul.f32 %v3154, %v3154
      %v3164 = vmul.f32 %v3155, %v3155
      %v3165 = vmul.f32 %v3156, %v3156
      %v3166 = vadd.f32 %v3158, %v3159
      %v3167 = vadd.f32 %v3166, %v3160
      %v3168 = vadd.f32 %v3167, %v3161
      %v3169 = vadd.f32 %v3168, %v3162
      %v3170 = vadd.f32 %v3169, %v3163
      %v3171 = vadd.f32 %v3170, %v3164
      %v3172 = vadd.f32 %v3171, %v3165
      %v3173 = vrot.slane %v3172, 4
      %v3174 = vadd.f32 %v3172, %v3173
      %v3175 = vrot.slane %v3174, 2
      %v3176 = vadd.f32 %v3174, %v3175
      %v3177 = vrot.slane %v3176, 1
      %v3178 = vadd.f32 %v3176, %v3177
      %3179 = vst [vmem:[%s235 + $0x1] sm:$0x1] %v3178
      %p3180 = scmp.lt.s32.totalorder %s17, 1
      %s3181 = scalar_select %p3180, %s17, 1
      %s3182 = smul.addr %s3181, 8
      %s3183 = smul.addr %s3182, 4
      %s3184 = scalar_lea.vmem %s4, %s3183
      %p3185 = scmp.lt.s32.totalorder %s17, 1
      %s3186 = scalar_select %p3185, %s17, 1
      %s3187 = smul.addr %s3186, 2
      %s3188 = scalar_lea.vmem %s5, %s3187
      // Predicated region
      $region37: #{basic_block_forward.5} parent=35 // pred_check
        %p3189 = pneg %p124
      $region38: #{basic_block_forward.5} parent=35 // pred_check_branch
        %3191 = sbr.rel (%p3189) target = $region40
      $region39: #{basic_block_forward.5} parent=35 // pred_region
        _
      $region40: #{basic_block_forward.5} parent=35 // pred_fallthru
        _
      // Predicated region
      $region41: #{basic_block_forward.5} parent=35 // pred_check
        %p3192 = pneg %p150
      $region42: #{basic_block_forward.5} parent=35 // pred_check_branch
        %3194 = sbr.rel (%p3192) target = $region44
      $region43: #{basic_block_forward.5} parent=35 // pred_region
        _
      $region44: #{basic_block_forward.5} parent=35 // pred_fallthru
        _
    $region36: #{basic_block_forward.5} parent=5 // pred_fallthru
      _
    %p3195 = scmp.le.s32.totalorder 2, %s12
    // Predicated region
    $region45: #{basic_block_forward.5} parent=5 // pred_check
      %p3196 = pneg %p3195
    $region46: #{basic_block_forward.5} parent=5 // pred_check_branch
      %3198 = sbr.rel (%p3196) target = $region48
    $region47: #{basic_block_forward.5} parent=5 // pred_region
      %s3199 = ssub.s32 %s12, 2
      // Predicated region
      $region49: #{basic_block_forward.5} parent=47 // pred_check
        %p3200 = pneg %p130
      $region50: #{basic_block_forward.5} parent=47 // pred_check_branch
        %3202 = sbr.rel (%p3200) target = $region52
      $region51: #{basic_block_forward.5} parent=47 // pred_region
        %p3203 = scmp.lt.s32.totalorder %s18, 1
        %s3204 = scalar_select %p3203, %s18, 1
        %s3205 = smul.addr %s3204, 8
        %s3206 = smul.addr %s3205, 4
        %s3207 = scalar_lea.vmem %s4, %s3206
      $region52: #{basic_block_forward.5} parent=47 // pred_fallthru
        _
      // Predicated region
      $region53: #{basic_block_forward.5} parent=47 // pred_check
        %p3208 = pneg %p156
      $region54: #{basic_block_forward.5} parent=47 // pred_check_branch
        %3210 = sbr.rel (%p3208) target = $region56
      $region55: #{basic_block_forward.5} parent=47 // pred_region
        %p3211 = scmp.lt.s32.totalorder %s18, 1
        %s3212 = scalar_select %p3211, %s18, 1
        %s3213 = smul.addr %s3212, 2
        %s3214 = scalar_lea.vmem %s5, %s3213
      $region56: #{basic_block_forward.5} parent=47 // pred_fallthru
        _
    $region48: #{basic_block_forward.5} parent=5 // pred_fallthru
      _
  $region6: #{basic_block_forward.5} parent=0 // loop_footer
    %s16 = sadd.s32 1, %s12
  $region7: #{basic_block_forward.5} parent=0 // loop_footer_branch
    %11 = sbr.rel target = $region3
  $region8: #{basic_block_forward.5} parent=0 // loop_exit
    _

</llo_original>
